<compile_context>
chip_gen: v7x
topology: tpu7x:2x2x1
jax: 0.10.0
libtpu: 0.0.40
codegen_flags: <defaults>
</compile_context>

<pallas_src>
import numpy as np

import jax
import jax.numpy as jnp
from jax.experimental import pallas as pl
from jax.experimental.pallas import tpu as pltpu

EPS = 1e-5
K2 = 9 * 32  # merged conv2 contraction size (9 taps x 32 conv1 channels)


def _round_up(x, m):
    return ((x + m - 1) // m) * m


def _choose_tile(m):
    """Lane (spatial) tile: multiple of 128, >=2 grid steps when possible, cap 1024."""
    if m <= 128:
        return m, m                       # single full (possibly masked) block
    m128 = _round_up(m, 128)
    half = (m128 // 2) // 128 * 128
    tm = max(128, min(1024, half))
    return tm, _round_up(m, tm)


# --------------------------- fused ResidualBlock ---------------------------- #

def _res_block_kernel(x9_ref, w1_ref, w2_ref, b2_ref, w3_ref, b34_ref, o_ref):
    # x9_ref : (K1p, tm) bf16  channel-major im2col (9 taps x Ca rows, zero padded)
    # w1_ref : (Rp, K1p) bf16  rows 0..287: block-diag conv1^T (+BN1, bias on validity
    #                          col); rows 288..288+Co-1: downsample^T (+BN4) on tap 4
    # w2_ref : (32, 288) bf16  conv2^T (+BN2 scale), the 9 taps merged along K
    # b2_ref : (32, 1)   f32   BN2 bias
    # w3_ref : (Co, 32)  bf16  conv3^T (+BN3 scale)
    # b34_ref: (Co, 1)   f32   BN3 bias + BN4 bias
    # o_ref  : (Co, tm)  f32   block output (channel-major, spatial on lanes)
    co = o_ref.shape[0]
    x9 = x9_ref[...]
    h = jnp.dot(w1_ref[...], x9, preferred_element_type=jnp.float32)       # (Rp, tm)
    h1 = jnp.maximum(h[:K2, :], 0.0)                  # conv1 -> bn1 -> relu (9 taps)
    res = h[K2:K2 + co, :]                            # downsample(x) -> bn4 (center tap)
    acc = jnp.dot(w2_ref[...], h1.astype(jnp.bfloat16),
                  preferred_element_type=jnp.float32)                      # (32, tm)
    h2 = jnp.maximum(acc + b2_ref[...], 0.0)          # conv2 -> bn2 -> relu
    h3 = jnp.dot(w3_ref[...], h2.astype(jnp.bfloat16),
                 preferred_element_type=jnp.float32)                       # (Co, tm)
    o_ref[...] = jnp.maximum(h3 + res + b34_ref[...], 0.0)


def residual_block(x_cm, c, p):
    """One stride-2 ResidualBlock.  x_cm: (Cp, B, H, W) f32 channel-major (extra
    channels beyond c are zero).  Returns (Cp, B, Ho, Wo) f32 channel-major."""
    _, B, H, W = x_cm.shape
    Ho, Wo = (H + 1) // 2, (W + 1) // 2
    Ca = _round_up(c + 1, 8)                          # in channels + validity, padded
    Co = _round_up(c, 8)                              # out channels, padded
    Rp, K1p = p["w1"].shape

    # channel-major im2col of the 3x3 / stride-2 receptive field with a validity
    # channel, so conv2's zero padding of the *post-conv1* feature map is reproduced
    # exactly (valid tap -> relu(W1 x + b1), padded tap -> relu(0) = 0).
    parts = [x_cm[:c], jnp.ones((1, B, H, W), x_cm.dtype)]
    if Ca - c - 1 > 0:
        parts.append(jnp.zeros((Ca - c - 1, B, H, W), x_cm.dtype))
    xa = jnp.concatenate(parts, axis=0)                                   # (Ca,B,H,W)
    xp = jnp.pad(xa, ((0, 0), (0, 0), (1, 1), (1, 1)))
    taps = [xp[:, :, kh:kh + 2 * Ho:2, kw:kw + 2 * Wo:2]
            for kh in range(3) for kw in range(3)]                        # 9x(Ca,B,Ho,Wo)
    x9 = jnp.stack(taps, 0).reshape(9 * Ca, B * Ho * Wo)                  # (9Ca, M)

    M = B * Ho * Wo
    tm, Mp = _choose_tile(M)
    x9 = jnp.pad(x9, ((0, K1p - 9 * Ca), (0, Mp - M))).astype(jnp.bfloat16)

    out = pl.pallas_call(
        _res_block_kernel,
        out_shape=jax.ShapeDtypeStruct((Co, Mp), jnp.float32),
        grid=(Mp // tm,),
        in_specs=[
            pl.BlockSpec((K1p, tm), lambda i: (0, i)),
            pl.BlockSpec((Rp, K1p), lambda i: (0, 0)),
            pl.BlockSpec((32, K2), lambda i: (0, 0)),
            pl.BlockSpec((32, 1), lambda i: (0, 0)),
            pl.BlockSpec((Co, 32), lambda i: (0, 0)),
            pl.BlockSpec((Co, 1), lambda i: (0, 0)),
        ],
        out_specs=pl.BlockSpec((Co, tm), lambda i: (0, i)),
        compiler_params=pltpu.CompilerParams(dimension_semantics=("parallel",)),
    )(x9, p["w1"], p["w2"], p["b2"], p["w3"], p["b34"])

    return out[:, :M].reshape(Co, B, Ho, Wo)


# ----------------- separable bilinear upsample + skip add ------------------- #

def _bilinear_rows(n_out, n_in):
    """1-D bilinear weights, PyTorch F.interpolate(mode='bilinear', align_corners=False)."""
    i = np.arange(n_out, dtype=np.float64)
    src = np.maximum((i + 0.5) * (n_in / n_out) - 0.5, 0.0)
    lo = np.minimum(np.floor(src).astype(np.int64), n_in - 1)
    hi = np.minimum(lo + 1, n_in - 1)
    w = src - lo
    U = np.zeros((n_out, n_in), np.float32)
    U[np.arange(n_out), lo] += (1.0 - w).astype(np.float32)
    U[np.arange(n_out), hi] += w.astype(np.float32)
    return U


def _upsample_add_kernel(wr_ref, wc_ref, y_ref, s_ref, o_ref):
    # y_ref : (P*hi, wi) f32;  wc_ref: (wi, wo);  wr_ref: (P*ho, P*hi) block-diag rows
    # s_ref / o_ref : (P*ho, wo)          (P = channel*batch planes in this grid step)
    z = jnp.dot(y_ref[...], wc_ref[...], preferred_element_type=jnp.float32)
    u = jnp.dot(wr_ref[...], z, preferred_element_type=jnp.float32)
    o_ref[...] = u + s_ref[...]


def upsample_add(y_cm, skip_cm):
    """Bilinear-resize y_cm (Cp,B,hi,wi) to skip's spatial size and add skip."""
    Cp, B, hi, wi = y_cm.shape
    _, _, ho, wo = skip_cm.shape
    G = 2                                   # >=2 parallel grid steps (v7x dual TC)
    planes = (Cp // G) * B                  # channel*batch planes handled per step

    wr = _bilinear_rows(ho, hi)             # (ho, hi)
    wc = _bilinear_rows(wo, wi)             # (wo, wi)
    wrb = jnp.asarray(np.kron(np.eye(planes, dtype=np.float32), wr))   # (P*ho, P*hi)
    wct = jnp.asarray(wc.T)                                            # (wi, wo)

    y3 = y_cm.reshape(G, planes * hi, wi)
    s3 = skip_cm.reshape(G, planes * ho, wo)

    out = pl.pallas_call(
        _upsample_add_kernel,
        out_shape=jax.ShapeDtypeStruct((G, planes * ho, wo), jnp.float32),
        grid=(G,),
        in_specs=[
            pl.BlockSpec((planes * ho, planes * hi), lambda g: (0, 0)),
            pl.BlockSpec((wi, wo), lambda g: (0, 0)),
            pl.BlockSpec((None, planes * hi, wi), lambda g: (g, 0, 0)),
            pl.BlockSpec((None, planes * ho, wo), lambda g: (g, 0, 0)),
        ],
        out_specs=pl.BlockSpec((None, planes * ho, wo), lambda g: (g, 0, 0)),
        compiler_params=pltpu.CompilerParams(dimension_semantics=("parallel",)),
    )(wrb, wct, y3, s3)
    return out.reshape(Cp, B, ho, wo)


# ------------------------------ model forward ------------------------------- #

def hourglass_forward(x_nchw, params):
    B, C, H, W = x_nchw.shape
    Cp = _round_up(C, 8)
    x_cm = jnp.transpose(x_nchw.astype(jnp.float32), (1, 0, 2, 3))       # (C,B,H,W)
    x_cm = jnp.pad(x_cm, ((0, Cp - C), (0, 0), (0, 0), (0, 0)))
    y1 = residual_block(x_cm, C, params["rm1"])
    y2 = residual_block(y1, C, params["rm2"])
    y3 = residual_block(y2, C, params["rm3"])
    y4 = upsample_add(y3, y2)            # up(y3) + y2
    y5 = upsample_add(y4, y1)            # up(y4) + y1
    y6 = upsample_add(y5, x_cm)          # up(y5) + x
    return jnp.transpose(y6[:C], (1, 0, 2, 3))                           # NCHW


# ----------------------------- params & folding ----------------------------- #

def init_raw_params(key, channels):
    keys = iter(jax.random.split(key, 64))

    def conv_w(kh, kw, ci, co):
        fan_in = kh * kw * ci
        return jax.random.normal(next(keys), (kh, kw, ci, co),
                                 jnp.float32) * (2.0 / fan_in) ** 0.5

    def bn(c):
        return (1.0 + 0.1 * jax.random.normal(next(keys), (c,), jnp.float32),
                0.1 * jax.random.normal(next(keys), (c,), jnp.float32),
                0.1 * jax.random.normal(next(keys), (c,), jnp.float32),
                0.5 + jax.random.uniform(next(keys), (c,), jnp.float32))

    blocks = {}
    for name in ("rm1", "rm2", "rm3"):
        blocks[name] = dict(
            conv1=conv_w(1, 1, channels, 32), bn1=bn(32),
            conv2=conv_w(3, 3, 32, 32), bn2=bn(32),
            conv3=conv_w(1, 1, 32, channels), bn3=bn(channels),
            convd=conv_w(1, 1, channels, channels), bn4=bn(channels))
    return blocks


def fuse_block_params(rp):
    """Fold inference BatchNorm into the convs and pack channel-major for the kernel."""
    def fold(w_hwio, bn):
        gamma, beta, mean, var = bn
        scale = gamma / jnp.sqrt(var + EPS)
        return w_hwio * scale, beta - mean * scale

    w1, b1 = fold(rp["conv1"], rp["bn1"])      # (1,1,C,32), (32,)
    w2, b2 = fold(rp["conv2"], rp["bn2"])      # (3,3,32,32), (32,)
    w3, b3 = fold(rp["conv3"], rp["bn3"])      # (1,1,32,C), (C,)
    wd, bd = fold(rp["convd"], rp["bn4"])      # (1,1,C,C), (C,)

    c = rp["conv1"].shape[2]
    ca, co = _round_up(c + 1, 8), _round_up(c, 8)
    k1p = _round_up(9 * ca, 16)
    rp_rows = _round_up(K2 + co, 16)

    # conv1^T (+BN1) per-tap block; b1 rides the validity column (masked by padding).
    blk = jnp.concatenate(
        [w1.reshape(c, 32).T, b1[:, None],
         jnp.zeros((32, ca - c - 1), jnp.float32)], axis=1)              # (32, ca)
    w1_bd = jnp.kron(jnp.eye(9, dtype=jnp.float32), blk)                 # (288, 9*ca)

    # downsample^T (+BN4 scale) applied to the center (always-valid) tap.
    wdm = jnp.pad(wd.reshape(c, c).T, ((0, co - c), (0, ca - c)))        # (co, ca)
    wd_row = jnp.zeros((co, 9 * ca), jnp.float32).at[:, 4 * ca:5 * ca].set(wdm)

    w1x = jnp.concatenate([w1_bd, wd_row], axis=0)                       # (288+co, 9ca)
    w1x = jnp.pad(w1x, ((0, rp_rows - (K2 + co)), (0, k1p - 9 * ca)))

    # conv2^T (+BN2 scale), the 9 taps merged along K.
    w2m = jnp.transpose(w2, (3, 0, 1, 2)).reshape(32, K2)                # (32, 288)
    w3m = jnp.pad(w3.reshape(32, c).T, ((0, co - c), (0, 0)))            # (co, 32)
    b34 = jnp.pad((b3 + bd)[:, None], ((0, co - c), (0, 0)))             # (co, 1)

    return dict(w1=w1x.astype(jnp.bfloat16),
                w2=w2m.astype(jnp.bfloat16),
                b2=b2[:, None].astype(jnp.float32),
                w3=w3m.astype(jnp.bfloat16),
                b34=b34.astype(jnp.float32))


# ------------------------ pure-JAX reference (check) ------------------------ #

def _bn_inf(x, bn):
    gamma, beta, mean, var = bn
    return (x - mean) / jnp.sqrt(var + EPS) * gamma + beta


def _conv_ref(x, w, stride, pad):
    return jax.lax.conv_general_dilated(
        x, w, window_strides=(stride, stride),
        padding=((pad, pad), (pad, pad)),
        dimension_numbers=("NHWC", "HWIO", "NHWC"))


def _res_block_ref(x, rp):
    out = jax.nn.relu(_bn_inf(_conv_ref(x, rp["conv1"], 1, 0), rp["bn1"]))
    out = jax.nn.relu(_bn_inf(_conv_ref(out, rp["conv2"], 2, 1), rp["bn2"]))
    out = _bn_inf(_conv_ref(out, rp["conv3"], 1, 0), rp["bn3"])
    res = _bn_inf(_conv_ref(x, rp["convd"], 2, 0), rp["bn4"])
    return jax.nn.relu(out + res)


def _up_ref(y, hw):
    B, _, _, C = y.shape
    return jax.image.resize(y, (B, hw[0], hw[1], C), method="bilinear")


def hourglass_reference(x_nchw, raw):
    x = jnp.transpose(x_nchw, (0, 2, 3, 1)).astype(jnp.float32)
    y1 = _res_block_ref(x, raw["rm1"])
    y2 = _res_block_ref(y1, raw["rm2"])
    y3 = _res_block_ref(y2, raw["rm3"])
    y4 = _up_ref(y3, y2.shape[1:3]) + y2
    y5 = _up_ref(y4, y1.shape[1:3]) + y1
    y6 = _up_ref(y5, x.shape[1:3]) + x
    return jnp.transpose(y6, (0, 3, 1, 2))


# --------------------------------- main -------------------------------------- #

if __name__ == "__main__":
    key = jax.random.PRNGKey(0)
    k_x, k_p = jax.random.split(key)

    # Hourglass(in_channels=4, out_channels=4, stride=2) on a 2x4x16x16 input.
    B, C, H, W = 2, 4, 16, 16
    x = jax.random.normal(k_x, (B, C, H, W), jnp.float32)

    raw = init_raw_params(k_p, C)
    params = {name: fuse_block_params(rp) for name, rp in raw.items()}

    fwd = jax.jit(hourglass_forward)
    out = fwd(x, params)
    jax.block_until_ready(out)

    assert out.shape == (B, C, H, W), out.shape
    assert bool(jnp.all(jnp.isfinite(out)))

    # cross-check against an independent XLA reference (bf16-operand tolerance)
    ref = hourglass_reference(x, raw)
    rel_err = float(jnp.max(jnp.abs(out - ref)) / (jnp.max(jnp.abs(ref)) + 1e-6))
    assert rel_err < 0.08, rel_err

    print("KERNEL_OK")
</pallas_src>

<mosaic_0001>
module attributes {stable_mosaic.version = 11 : i64} {
  func.func @_res_block_kernel(%arg0: i32, %arg1: memref<80x128xbf16, #tpu.memory_space<vmem>>, %arg2: memref<304x80xbf16, #tpu.memory_space<vmem>>, %arg3: memref<32x288xbf16, #tpu.memory_space<vmem>>, %arg4: memref<32x1xf32, #tpu.memory_space<vmem>>, %arg5: memref<8x32xbf16, #tpu.memory_space<vmem>>, %arg6: memref<8x1xf32, #tpu.memory_space<vmem>>, %arg7: memref<8x128xf32, #tpu.memory_space<vmem>>) attributes {dimension_semantics = [#tpu.dimension_semantics<parallel>], iteration_bounds = array<i64: 1>, scalar_prefetch = 0 : i64, scratch_operands = 0 : i64, tpu.core_type = #tpu.core_type<tc>, window_params = [{transform_indices = @transform_0, window_bounds = array<i64: 80, 128>}, {pipeline_mode = #tpu.pipeline_mode<synchronous>, transform_indices = @transform_1, window_bounds = array<i64: 304, 80>}, {pipeline_mode = #tpu.pipeline_mode<synchronous>, transform_indices = @transform_2, window_bounds = array<i64: 32, 288>}, {pipeline_mode = #tpu.pipeline_mode<synchronous>, transform_indices = @transform_3, window_bounds = array<i64: 32, 1>}, {pipeline_mode = #tpu.pipeline_mode<synchronous>, transform_indices = @transform_4, window_bounds = array<i64: 8, 32>}, {pipeline_mode = #tpu.pipeline_mode<synchronous>, transform_indices = @transform_5, window_bounds = array<i64: 8, 1>}, {transform_indices = @transform_6, window_bounds = array<i64: 8, 128>}]} {
    %c0 = arith.constant 0 : index
    %c0_0 = arith.constant 0 : index
    %0 = vector.load %arg1[%c0, %c0_0] : memref<80x128xbf16, #tpu.memory_space<vmem>>, vector<80x128xbf16>
    %c0_1 = arith.constant 0 : index
    %c0_2 = arith.constant 0 : index
    %1 = vector.load %arg2[%c0_1, %c0_2] : memref<304x80xbf16, #tpu.memory_space<vmem>>, vector<304x80xbf16>
    %cst = arith.constant dense<0.000000e+00> : vector<304x128xf32>
    %2 = tpu.matmul %1, %0, %cst {dimension_numbers = #tpu.dot_dimension_numbers<[1], [0], [0], [1], [0, 0, 1, 1], [], []>} : vector<304x80xbf16>, vector<80x128xbf16>, vector<304x128xf32> -> vector<304x128xf32>
    %3 = vector.extract_strided_slice %2 {offsets = [0, 0], sizes = [288, 128], strides = [1, 1]} : vector<304x128xf32> to vector<288x128xf32>
    %cst_3 = arith.constant 0.000000e+00 : f32
    %4 = vector.broadcast %cst_3 : f32 to vector<288x128xf32>
    %5 = arith.maximumf %3, %4 : vector<288x128xf32>
    %6 = vector.extract_strided_slice %2 {offsets = [288, 0], sizes = [8, 128], strides = [1, 1]} : vector<304x128xf32> to vector<8x128xf32>
    %c0_4 = arith.constant 0 : index
    %c0_5 = arith.constant 0 : index
    %7 = vector.load %arg3[%c0_4, %c0_5] : memref<32x288xbf16, #tpu.memory_space<vmem>>, vector<32x288xbf16>
    %8 = arith.truncf %5 : vector<288x128xf32> to vector<288x128xbf16>
    %cst_6 = arith.constant dense<0.000000e+00> : vector<32x128xf32>
    %9 = tpu.matmul %7, %8, %cst_6 {dimension_numbers = #tpu.dot_dimension_numbers<[1], [0], [0], [1], [0, 0, 1, 1], [], []>} : vector<32x288xbf16>, vector<288x128xbf16>, vector<32x128xf32> -> vector<32x128xf32>
    %c0_7 = arith.constant 0 : index
    %c0_8 = arith.constant 0 : index
    %10 = vector.load %arg4[%c0_7, %c0_8] : memref<32x1xf32, #tpu.memory_space<vmem>>, vector<32x1xf32>
    %11 = vector.broadcast %10 : vector<32x1xf32> to vector<32x128xf32>
    %12 = arith.addf %9, %11 : vector<32x128xf32>
    %cst_9 = arith.constant 0.000000e+00 : f32
    %13 = vector.broadcast %cst_9 : f32 to vector<32x128xf32>
    %14 = arith.maximumf %12, %13 : vector<32x128xf32>
    %c0_10 = arith.constant 0 : index
    %c0_11 = arith.constant 0 : index
    %15 = vector.load %arg5[%c0_10, %c0_11] : memref<8x32xbf16, #tpu.memory_space<vmem>>, vector<8x32xbf16>
    %16 = arith.truncf %14 : vector<32x128xf32> to vector<32x128xbf16>
    %cst_12 = arith.constant dense<0.000000e+00> : vector<8x128xf32>
    %17 = tpu.matmul %15, %16, %cst_12 {dimension_numbers = #tpu.dot_dimension_numbers<[1], [0], [0], [1], [0, 0, 1, 1], [], []>} : vector<8x32xbf16>, vector<32x128xbf16>, vector<8x128xf32> -> vector<8x128xf32>
    %18 = arith.addf %17, %6 : vector<8x128xf32>
    %c0_13 = arith.constant 0 : index
    %c0_14 = arith.constant 0 : index
    %19 = vector.load %arg6[%c0_13, %c0_14] : memref<8x1xf32, #tpu.memory_space<vmem>>, vector<8x1xf32>
    %20 = vector.broadcast %19 : vector<8x1xf32> to vector<8x128xf32>
    %21 = arith.addf %18, %20 : vector<8x128xf32>
    %cst_15 = arith.constant 0.000000e+00 : f32
    %22 = vector.broadcast %cst_15 : f32 to vector<8x128xf32>
    %23 = arith.maximumf %21, %22 : vector<8x128xf32>
    %c0_16 = arith.constant 0 : index
    %c0_17 = arith.constant 0 : index
    %24 = vector.load %arg7[%c0_16, %c0_17] : memref<8x128xf32, #tpu.memory_space<vmem>>, vector<8x128xf32>
    tpu.vector_store %arg7[%c0_16, %c0_17], %23 {strides = array<i32>} : memref<8x128xf32, #tpu.memory_space<vmem>>, vector<8x128xf32>,
    return
  }
  func.func @transform_0(%arg0: i32) -> (i32, i32) {
    %c0_i32 = arith.constant 0 : i32
    %c0_i32_0 = arith.constant 0 : i32
    return %c0_i32, %arg0 : i32, i32
  }
  func.func @transform_1(%arg0: i32) -> (i32, i32) {
    %c0_i32 = arith.constant 0 : i32
    %c0_i32_0 = arith.constant 0 : i32
    %c0_i32_1 = arith.constant 0 : i32
    return %c0_i32, %c0_i32_0 : i32, i32
  }
  func.func @transform_2(%arg0: i32) -> (i32, i32) {
    %c0_i32 = arith.constant 0 : i32
    %c0_i32_0 = arith.constant 0 : i32
    %c0_i32_1 = arith.constant 0 : i32
    return %c0_i32, %c0_i32_0 : i32, i32
  }
  func.func @transform_3(%arg0: i32) -> (i32, i32) {
    %c0_i32 = arith.constant 0 : i32
    %c0_i32_0 = arith.constant 0 : i32
    %c0_i32_1 = arith.constant 0 : i32
    return %c0_i32, %c0_i32_0 : i32, i32
  }
  func.func @transform_4(%arg0: i32) -> (i32, i32) {
    %c0_i32 = arith.constant 0 : i32
    %c0_i32_0 = arith.constant 0 : i32
    %c0_i32_1 = arith.constant 0 : i32
    return %c0_i32, %c0_i32_0 : i32, i32
  }
  func.func @transform_5(%arg0: i32) -> (i32, i32) {
    %c0_i32 = arith.constant 0 : i32
    %c0_i32_0 = arith.constant 0 : i32
    %c0_i32_1 = arith.constant 0 : i32
    return %c0_i32, %c0_i32_0 : i32, i32
  }
  func.func @transform_6(%arg0: i32) -> (i32, i32) {
    %c0_i32 = arith.constant 0 : i32
    %c0_i32_0 = arith.constant 0 : i32
    return %c0_i32, %arg0 : i32, i32
  }
}

module attributes {stable_mosaic.version = 11 : i64} {
  func.func @_res_block_kernel(%arg0: i32, %arg1: memref<80x32xbf16, #tpu.memory_space<vmem>>, %arg2: memref<304x80xbf16, #tpu.memory_space<vmem>>, %arg3: memref<32x288xbf16, #tpu.memory_space<vmem>>, %arg4: memref<32x1xf32, #tpu.memory_space<vmem>>, %arg5: memref<8x32xbf16, #tpu.memory_space<vmem>>, %arg6: memref<8x1xf32, #tpu.memory_space<vmem>>, %arg7: memref<8x32xf32, #tpu.memory_space<vmem>>) attributes {dimension_semantics = [#tpu.dimension_semantics<parallel>], iteration_bounds = array<i64: 1>, scalar_prefetch = 0 : i64, scratch_operands = 0 : i64, tpu.core_type = #tpu.core_type<tc>, window_params = [{transform_indices = @transform_0, window_bounds = array<i64: 80, 32>}, {pipeline_mode = #tpu.pipeline_mode<synchronous>, transform_indices = @transform_1, window_bounds = array<i64: 304, 80>}, {pipeline_mode = #tpu.pipeline_mode<synchronous>, transform_indices = @transform_2, window_bounds = array<i64: 32, 288>}, {pipeline_mode = #tpu.pipeline_mode<synchronous>, transform_indices = @transform_3, window_bounds = array<i64: 32, 1>}, {pipeline_mode = #tpu.pipeline_mode<synchronous>, transform_indices = @transform_4, window_bounds = array<i64: 8, 32>}, {pipeline_mode = #tpu.pipeline_mode<synchronous>, transform_indices = @transform_5, window_bounds = array<i64: 8, 1>}, {transform_indices = @transform_6, window_bounds = array<i64: 8, 32>}]} {
    %c0 = arith.constant 0 : index
    %c0_0 = arith.constant 0 : index
    %0 = vector.load %arg1[%c0, %c0_0] : memref<80x32xbf16, #tpu.memory_space<vmem>>, vector<80x32xbf16>
    %c0_1 = arith.constant 0 : index
    %c0_2 = arith.constant 0 : index
    %1 = vector.load %arg2[%c0_1, %c0_2] : memref<304x80xbf16, #tpu.memory_space<vmem>>, vector<304x80xbf16>
    %cst = arith.constant dense<0.000000e+00> : vector<304x32xf32>
    %2 = tpu.matmul %1, %0, %cst {dimension_numbers = #tpu.dot_dimension_numbers<[1], [0], [0], [1], [0, 0, 1, 1], [], []>} : vector<304x80xbf16>, vector<80x32xbf16>, vector<304x32xf32> -> vector<304x32xf32>
    %3 = vector.extract_strided_slice %2 {offsets = [0, 0], sizes = [288, 32], strides = [1, 1]} : vector<304x32xf32> to vector<288x32xf32>
    %cst_3 = arith.constant 0.000000e+00 : f32
    %4 = vector.broadcast %cst_3 : f32 to vector<288x32xf32>
    %5 = arith.maximumf %3, %4 : vector<288x32xf32>
    %6 = vector.extract_strided_slice %2 {offsets = [288, 0], sizes = [8, 32], strides = [1, 1]} : vector<304x32xf32> to vector<8x32xf32>
    %c0_4 = arith.constant 0 : index
    %c0_5 = arith.constant 0 : index
    %7 = vector.load %arg3[%c0_4, %c0_5] : memref<32x288xbf16, #tpu.memory_space<vmem>>, vector<32x288xbf16>
    %8 = arith.truncf %5 : vector<288x32xf32> to vector<288x32xbf16>
    %cst_6 = arith.constant dense<0.000000e+00> : vector<32x32xf32>
    %9 = tpu.matmul %7, %8, %cst_6 {dimension_numbers = #tpu.dot_dimension_numbers<[1], [0], [0], [1], [0, 0, 1, 1], [], []>} : vector<32x288xbf16>, vector<288x32xbf16>, vector<32x32xf32> -> vector<32x32xf32>
    %c0_7 = arith.constant 0 : index
    %c0_8 = arith.constant 0 : index
    %10 = vector.load %arg4[%c0_7, %c0_8] : memref<32x1xf32, #tpu.memory_space<vmem>>, vector<32x1xf32>
    %11 = vector.broadcast %10 : vector<32x1xf32> to vector<32x32xf32>
    %12 = arith.addf %9, %11 : vector<32x32xf32>
    %cst_9 = arith.constant 0.000000e+00 : f32
    %13 = vector.broadcast %cst_9 : f32 to vector<32x32xf32>
    %14 = arith.maximumf %12, %13 : vector<32x32xf32>
    %c0_10 = arith.constant 0 : index
    %c0_11 = arith.constant 0 : index
    %15 = vector.load %arg5[%c0_10, %c0_11] : memref<8x32xbf16, #tpu.memory_space<vmem>>, vector<8x32xbf16>
    %16 = arith.truncf %14 : vector<32x32xf32> to vector<32x32xbf16>
    %cst_12 = arith.constant dense<0.000000e+00> : vector<8x32xf32>
    %17 = tpu.matmul %15, %16, %cst_12 {dimension_numbers = #tpu.dot_dimension_numbers<[1], [0], [0], [1], [0, 0, 1, 1], [], []>} : vector<8x32xbf16>, vector<32x32xbf16>, vector<8x32xf32> -> vector<8x32xf32>
    %18 = arith.addf %17, %6 : vector<8x32xf32>
    %c0_13 = arith.constant 0 : index
    %c0_14 = arith.constant 0 : index
    %19 = vector.load %arg6[%c0_13, %c0_14] : memref<8x1xf32, #tpu.memory_space<vmem>>, vector<8x1xf32>
    %20 = vector.broadcast %19 : vector<8x1xf32> to vector<8x32xf32>
    %21 = arith.addf %18, %20 : vector<8x32xf32>
    %cst_15 = arith.constant 0.000000e+00 : f32
    %22 = vector.broadcast %cst_15 : f32 to vector<8x32xf32>
    %23 = arith.maximumf %21, %22 : vector<8x32xf32>
    %c0_16 = arith.constant 0 : index
    %c0_17 = arith.constant 0 : index
    %24 = vector.load %arg7[%c0_16, %c0_17] : memref<8x32xf32, #tpu.memory_space<vmem>>, vector<8x32xf32>
    tpu.vector_store %arg7[%c0_16, %c0_17], %23 {strides = array<i32>} : memref<8x32xf32, #tpu.memory_space<vmem>>, vector<8x32xf32>,
    return
  }
  func.func @transform_0(%arg0: i32) -> (i32, i32) {
    %c0_i32 = arith.constant 0 : i32
    %c0_i32_0 = arith.constant 0 : i32
    return %c0_i32, %arg0 : i32, i32
  }
  func.func @transform_1(%arg0: i32) -> (i32, i32) {
    %c0_i32 = arith.constant 0 : i32
    %c0_i32_0 = arith.constant 0 : i32
    %c0_i32_1 = arith.constant 0 : i32
    return %c0_i32, %c0_i32_0 : i32, i32
  }
  func.func @transform_2(%arg0: i32) -> (i32, i32) {
    %c0_i32 = arith.constant 0 : i32
    %c0_i32_0 = arith.constant 0 : i32
    %c0_i32_1 = arith.constant 0 : i32
    return %c0_i32, %c0_i32_0 : i32, i32
  }
  func.func @transform_3(%arg0: i32) -> (i32, i32) {
    %c0_i32 = arith.constant 0 : i32
    %c0_i32_0 = arith.constant 0 : i32
    %c0_i32_1 = arith.constant 0 : i32
    return %c0_i32, %c0_i32_0 : i32, i32
  }
  func.func @transform_4(%arg0: i32) -> (i32, i32) {
    %c0_i32 = arith.constant 0 : i32
    %c0_i32_0 = arith.constant 0 : i32
    %c0_i32_1 = arith.constant 0 : i32
    return %c0_i32, %c0_i32_0 : i32, i32
  }
  func.func @transform_5(%arg0: i32) -> (i32, i32) {
    %c0_i32 = arith.constant 0 : i32
    %c0_i32_0 = arith.constant 0 : i32
    %c0_i32_1 = arith.constant 0 : i32
    return %c0_i32, %c0_i32_0 : i32, i32
  }
  func.func @transform_6(%arg0: i32) -> (i32, i32) {
    %c0_i32 = arith.constant 0 : i32
    %c0_i32_0 = arith.constant 0 : i32
    return %c0_i32, %arg0 : i32, i32
  }
}

module attributes {stable_mosaic.version = 11 : i64} {
  func.func @_upsample_add_kernel(%arg0: i32, %arg1: memref<64x32xf32, #tpu.memory_space<vmem>>, %arg2: memref<4x8xf32, #tpu.memory_space<vmem>>, %arg3: memref<1x32x4xf32, #tpu.memory_space<vmem>>, %arg4: memref<1x64x8xf32, #tpu.memory_space<vmem>>, %arg5: memref<1x64x8xf32, #tpu.memory_space<vmem>>) attributes {dimension_semantics = [#tpu.dimension_semantics<parallel>], iteration_bounds = array<i64: 2>, scalar_prefetch = 0 : i64, scratch_operands = 0 : i64, tpu.core_type = #tpu.core_type<tc>, window_params = [{pipeline_mode = #tpu.pipeline_mode<synchronous>, transform_indices = @transform_0, window_bounds = array<i64: 64, 32>}, {pipeline_mode = #tpu.pipeline_mode<synchronous>, transform_indices = @transform_1, window_bounds = array<i64: 4, 8>}, {transform_indices = @transform_2, window_bounds = array<i64: 1, 32, 4>}, {transform_indices = @transform_3, window_bounds = array<i64: 1, 64, 8>}, {transform_indices = @transform_4, window_bounds = array<i64: 1, 64, 8>}]} {
    %c0 = arith.constant 0 : index
    %c0_0 = arith.constant 0 : index
    %c0_1 = arith.constant 0 : index
    %0 = vector.load %arg3[%c0, %c0_0, %c0_1] : memref<1x32x4xf32, #tpu.memory_space<vmem>>, vector<1x32x4xf32>
    %1 = vector.shape_cast %0 : vector<1x32x4xf32> to vector<32x4xf32>
    %c0_2 = arith.constant 0 : index
    %c0_3 = arith.constant 0 : index
    %2 = vector.load %arg2[%c0_2, %c0_3] : memref<4x8xf32, #tpu.memory_space<vmem>>, vector<4x8xf32>
    %cst = arith.constant dense<0.000000e+00> : vector<32x8xf32>
    %3 = tpu.matmul %1, %2, %cst {dimension_numbers = #tpu.dot_dimension_numbers<[1], [0], [0], [1], [0, 0, 1, 1], [], []>} : vector<32x4xf32>, vector<4x8xf32>, vector<32x8xf32> -> vector<32x8xf32>
    %c0_4 = arith.constant 0 : index
    %c0_5 = arith.constant 0 : index
    %4 = vector.load %arg1[%c0_4, %c0_5] : memref<64x32xf32, #tpu.memory_space<vmem>>, vector<64x32xf32>
    %cst_6 = arith.constant dense<0.000000e+00> : vector<64x8xf32>
    %5 = tpu.matmul %4, %3, %cst_6 {dimension_numbers = #tpu.dot_dimension_numbers<[1], [0], [0], [1], [0, 0, 1, 1], [], []>} : vector<64x32xf32>, vector<32x8xf32>, vector<64x8xf32> -> vector<64x8xf32>
    %c0_7 = arith.constant 0 : index
    %c0_8 = arith.constant 0 : index
    %c0_9 = arith.constant 0 : index
    %6 = vector.load %arg4[%c0_7, %c0_8, %c0_9] : memref<1x64x8xf32, #tpu.memory_space<vmem>>, vector<1x64x8xf32>
    %7 = vector.shape_cast %6 : vector<1x64x8xf32> to vector<64x8xf32>
    %8 = arith.addf %5, %7 : vector<64x8xf32>
    %c0_10 = arith.constant 0 : index
    %c0_11 = arith.constant 0 : index
    %c0_12 = arith.constant 0 : index
    %9 = vector.load %arg5[%c0_10, %c0_11, %c0_12] : memref<1x64x8xf32, #tpu.memory_space<vmem>>, vector<1x64x8xf32>
    %10 = vector.shape_cast %9 : vector<1x64x8xf32> to vector<64x8xf32>
    %11 = vector.shape_cast %8 : vector<64x8xf32> to vector<1x64x8xf32>
    tpu.vector_store %arg5[%c0_10, %c0_11, %c0_12], %11 {strides = array<i32>} : memref<1x64x8xf32, #tpu.memory_space<vmem>>, vector<1x64x8xf32>,
    return
  }
  func.func @transform_0(%arg0: i32) -> (i32, i32) {
    %c0_i32 = arith.constant 0 : i32
    %c0_i32_0 = arith.constant 0 : i32
    %c0_i32_1 = arith.constant 0 : i32
    return %c0_i32, %c0_i32_0 : i32, i32
  }
  func.func @transform_1(%arg0: i32) -> (i32, i32) {
    %c0_i32 = arith.constant 0 : i32
    %c0_i32_0 = arith.constant 0 : i32
    %c0_i32_1 = arith.constant 0 : i32
    return %c0_i32, %c0_i32_0 : i32, i32
  }
  func.func @transform_2(%arg0: i32) -> (i32, i32, i32) {
    %c0_i32 = arith.constant 0 : i32
    %c0_i32_0 = arith.constant 0 : i32
    %c0_i32_1 = arith.constant 0 : i32
    return %arg0, %c0_i32, %c0_i32_0 : i32, i32, i32
  }
  func.func @transform_3(%arg0: i32) -> (i32, i32, i32) {
    %c0_i32 = arith.constant 0 : i32
    %c0_i32_0 = arith.constant 0 : i32
    %c0_i32_1 = arith.constant 0 : i32
    return %arg0, %c0_i32, %c0_i32_0 : i32, i32, i32
  }
  func.func @transform_4(%arg0: i32) -> (i32, i32, i32) {
    %c0_i32 = arith.constant 0 : i32
    %c0_i32_0 = arith.constant 0 : i32
    %c0_i32_1 = arith.constant 0 : i32
    return %arg0, %c0_i32, %c0_i32_0 : i32, i32, i32
  }
}

module attributes {stable_mosaic.version = 11 : i64} {
  func.func @_upsample_add_kernel(%arg0: i32, %arg1: memref<32x16xf32, #tpu.memory_space<vmem>>, %arg2: memref<2x4xf32, #tpu.memory_space<vmem>>, %arg3: memref<1x16x2xf32, #tpu.memory_space<vmem>>, %arg4: memref<1x32x4xf32, #tpu.memory_space<vmem>>, %arg5: memref<1x32x4xf32, #tpu.memory_space<vmem>>) attributes {dimension_semantics = [#tpu.dimension_semantics<parallel>], iteration_bounds = array<i64: 2>, scalar_prefetch = 0 : i64, scratch_operands = 0 : i64, tpu.core_type = #tpu.core_type<tc>, window_params = [{pipeline_mode = #tpu.pipeline_mode<synchronous>, transform_indices = @transform_0, window_bounds = array<i64: 32, 16>}, {pipeline_mode = #tpu.pipeline_mode<synchronous>, transform_indices = @transform_1, window_bounds = array<i64: 2, 4>}, {transform_indices = @transform_2, window_bounds = array<i64: 1, 16, 2>}, {transform_indices = @transform_3, window_bounds = array<i64: 1, 32, 4>}, {transform_indices = @transform_4, window_bounds = array<i64: 1, 32, 4>}]} {
    %c0 = arith.constant 0 : index
    %c0_0 = arith.constant 0 : index
    %c0_1 = arith.constant 0 : index
    %0 = vector.load %arg3[%c0, %c0_0, %c0_1] : memref<1x16x2xf32, #tpu.memory_space<vmem>>, vector<1x16x2xf32>
    %1 = vector.shape_cast %0 : vector<1x16x2xf32> to vector<16x2xf32>
    %c0_2 = arith.constant 0 : index
    %c0_3 = arith.constant 0 : index
    %2 = vector.load %arg2[%c0_2, %c0_3] : memref<2x4xf32, #tpu.memory_space<vmem>>, vector<2x4xf32>
    %cst = arith.constant dense<0.000000e+00> : vector<16x4xf32>
    %3 = tpu.matmul %1, %2, %cst {dimension_numbers = #tpu.dot_dimension_numbers<[1], [0], [0], [1], [0, 0, 1, 1], [], []>} : vector<16x2xf32>, vector<2x4xf32>, vector<16x4xf32> -> vector<16x4xf32>
    %c0_4 = arith.constant 0 : index
    %c0_5 = arith.constant 0 : index
    %4 = vector.load %arg1[%c0_4, %c0_5] : memref<32x16xf32, #tpu.memory_space<vmem>>, vector<32x16xf32>
    %cst_6 = arith.constant dense<0.000000e+00> : vector<32x4xf32>
    %5 = tpu.matmul %4, %3, %cst_6 {dimension_numbers = #tpu.dot_dimension_numbers<[1], [0], [0], [1], [0, 0, 1, 1], [], []>} : vector<32x16xf32>, vector<16x4xf32>, vector<32x4xf32> -> vector<32x4xf32>
    %c0_7 = arith.constant 0 : index
    %c0_8 = arith.constant 0 : index
    %c0_9 = arith.constant 0 : index
    %6 = vector.load %arg4[%c0_7, %c0_8, %c0_9] : memref<1x32x4xf32, #tpu.memory_space<vmem>>, vector<1x32x4xf32>
    %7 = vector.shape_cast %6 : vector<1x32x4xf32> to vector<32x4xf32>
    %8 = arith.addf %5, %7 : vector<32x4xf32>
    %c0_10 = arith.constant 0 : index
    %c0_11 = arith.constant 0 : index
    %c0_12 = arith.constant 0 : index
    %9 = vector.load %arg5[%c0_10, %c0_11, %c0_12] : memref<1x32x4xf32, #tpu.memory_space<vmem>>, vector<1x32x4xf32>
    %10 = vector.shape_cast %9 : vector<1x32x4xf32> to vector<32x4xf32>
    %11 = vector.shape_cast %8 : vector<32x4xf32> to vector<1x32x4xf32>
    tpu.vector_store %arg5[%c0_10, %c0_11, %c0_12], %11 {strides = array<i32>} : memref<1x32x4xf32, #tpu.memory_space<vmem>>, vector<1x32x4xf32>,
    return
  }
  func.func @transform_0(%arg0: i32) -> (i32, i32) {
    %c0_i32 = arith.constant 0 : i32
    %c0_i32_0 = arith.constant 0 : i32
    %c0_i32_1 = arith.constant 0 : i32
    return %c0_i32, %c0_i32_0 : i32, i32
  }
  func.func @transform_1(%arg0: i32) -> (i32, i32) {
    %c0_i32 = arith.constant 0 : i32
    %c0_i32_0 = arith.constant 0 : i32
    %c0_i32_1 = arith.constant 0 : i32
    return %c0_i32, %c0_i32_0 : i32, i32
  }
  func.func @transform_2(%arg0: i32) -> (i32, i32, i32) {
    %c0_i32 = arith.constant 0 : i32
    %c0_i32_0 = arith.constant 0 : i32
    %c0_i32_1 = arith.constant 0 : i32
    return %arg0, %c0_i32, %c0_i32_0 : i32, i32, i32
  }
  func.func @transform_3(%arg0: i32) -> (i32, i32, i32) {
    %c0_i32 = arith.constant 0 : i32
    %c0_i32_0 = arith.constant 0 : i32
    %c0_i32_1 = arith.constant 0 : i32
    return %arg0, %c0_i32, %c0_i32_0 : i32, i32, i32
  }
  func.func @transform_4(%arg0: i32) -> (i32, i32, i32) {
    %c0_i32 = arith.constant 0 : i32
    %c0_i32_0 = arith.constant 0 : i32
    %c0_i32_1 = arith.constant 0 : i32
    return %arg0, %c0_i32, %c0_i32_0 : i32, i32, i32
  }
}

module attributes {stable_mosaic.version = 11 : i64} {
  func.func @_res_block_kernel(%arg0: i32, %arg1: memref<80x8xbf16, #tpu.memory_space<vmem>>, %arg2: memref<304x80xbf16, #tpu.memory_space<vmem>>, %arg3: memref<32x288xbf16, #tpu.memory_space<vmem>>, %arg4: memref<32x1xf32, #tpu.memory_space<vmem>>, %arg5: memref<8x32xbf16, #tpu.memory_space<vmem>>, %arg6: memref<8x1xf32, #tpu.memory_space<vmem>>, %arg7: memref<8x8xf32, #tpu.memory_space<vmem>>) attributes {dimension_semantics = [#tpu.dimension_semantics<parallel>], iteration_bounds = array<i64: 1>, scalar_prefetch = 0 : i64, scratch_operands = 0 : i64, tpu.core_type = #tpu.core_type<tc>, window_params = [{transform_indices = @transform_0, window_bounds = array<i64: 80, 8>}, {pipeline_mode = #tpu.pipeline_mode<synchronous>, transform_indices = @transform_1, window_bounds = array<i64: 304, 80>}, {pipeline_mode = #tpu.pipeline_mode<synchronous>, transform_indices = @transform_2, window_bounds = array<i64: 32, 288>}, {pipeline_mode = #tpu.pipeline_mode<synchronous>, transform_indices = @transform_3, window_bounds = array<i64: 32, 1>}, {pipeline_mode = #tpu.pipeline_mode<synchronous>, transform_indices = @transform_4, window_bounds = array<i64: 8, 32>}, {pipeline_mode = #tpu.pipeline_mode<synchronous>, transform_indices = @transform_5, window_bounds = array<i64: 8, 1>}, {transform_indices = @transform_6, window_bounds = array<i64: 8, 8>}]} {
    %c0 = arith.constant 0 : index
    %c0_0 = arith.constant 0 : index
    %0 = vector.load %arg1[%c0, %c0_0] : memref<80x8xbf16, #tpu.memory_space<vmem>>, vector<80x8xbf16>
    %c0_1 = arith.constant 0 : index
    %c0_2 = arith.constant 0 : index
    %1 = vector.load %arg2[%c0_1, %c0_2] : memref<304x80xbf16, #tpu.memory_space<vmem>>, vector<304x80xbf16>
    %cst = arith.constant dense<0.000000e+00> : vector<304x8xf32>
    %2 = tpu.matmul %1, %0, %cst {dimension_numbers = #tpu.dot_dimension_numbers<[1], [0], [0], [1], [0, 0, 1, 1], [], []>} : vector<304x80xbf16>, vector<80x8xbf16>, vector<304x8xf32> -> vector<304x8xf32>
    %3 = vector.extract_strided_slice %2 {offsets = [0, 0], sizes = [288, 8], strides = [1, 1]} : vector<304x8xf32> to vector<288x8xf32>
    %cst_3 = arith.constant 0.000000e+00 : f32
    %4 = vector.broadcast %cst_3 : f32 to vector<288x8xf32>
    %5 = arith.maximumf %3, %4 : vector<288x8xf32>
    %6 = vector.extract_strided_slice %2 {offsets = [288, 0], sizes = [8, 8], strides = [1, 1]} : vector<304x8xf32> to vector<8x8xf32>
    %c0_4 = arith.constant 0 : index
    %c0_5 = arith.constant 0 : index
    %7 = vector.load %arg3[%c0_4, %c0_5] : memref<32x288xbf16, #tpu.memory_space<vmem>>, vector<32x288xbf16>
    %8 = arith.truncf %5 : vector<288x8xf32> to vector<288x8xbf16>
    %cst_6 = arith.constant dense<0.000000e+00> : vector<32x8xf32>
    %9 = tpu.matmul %7, %8, %cst_6 {dimension_numbers = #tpu.dot_dimension_numbers<[1], [0], [0], [1], [0, 0, 1, 1], [], []>} : vector<32x288xbf16>, vector<288x8xbf16>, vector<32x8xf32> -> vector<32x8xf32>
    %c0_7 = arith.constant 0 : index
    %c0_8 = arith.constant 0 : index
    %10 = vector.load %arg4[%c0_7, %c0_8] : memref<32x1xf32, #tpu.memory_space<vmem>>, vector<32x1xf32>
    %11 = vector.broadcast %10 : vector<32x1xf32> to vector<32x8xf32>
    %12 = arith.addf %9, %11 : vector<32x8xf32>
    %cst_9 = arith.constant 0.000000e+00 : f32
    %13 = vector.broadcast %cst_9 : f32 to vector<32x8xf32>
    %14 = arith.maximumf %12, %13 : vector<32x8xf32>
    %c0_10 = arith.constant 0 : index
    %c0_11 = arith.constant 0 : index
    %15 = vector.load %arg5[%c0_10, %c0_11] : memref<8x32xbf16, #tpu.memory_space<vmem>>, vector<8x32xbf16>
    %16 = arith.truncf %14 : vector<32x8xf32> to vector<32x8xbf16>
    %cst_12 = arith.constant dense<0.000000e+00> : vector<8x8xf32>
    %17 = tpu.matmul %15, %16, %cst_12 {dimension_numbers = #tpu.dot_dimension_numbers<[1], [0], [0], [1], [0, 0, 1, 1], [], []>} : vector<8x32xbf16>, vector<32x8xbf16>, vector<8x8xf32> -> vector<8x8xf32>
    %18 = arith.addf %17, %6 : vector<8x8xf32>
    %c0_13 = arith.constant 0 : index
    %c0_14 = arith.constant 0 : index
    %19 = vector.load %arg6[%c0_13, %c0_14] : memref<8x1xf32, #tpu.memory_space<vmem>>, vector<8x1xf32>
    %20 = vector.broadcast %19 : vector<8x1xf32> to vector<8x8xf32>
    %21 = arith.addf %18, %20 : vector<8x8xf32>
    %cst_15 = arith.constant 0.000000e+00 : f32
    %22 = vector.broadcast %cst_15 : f32 to vector<8x8xf32>
    %23 = arith.maximumf %21, %22 : vector<8x8xf32>
    %c0_16 = arith.constant 0 : index
    %c0_17 = arith.constant 0 : index
    %24 = vector.load %arg7[%c0_16, %c0_17] : memref<8x8xf32, #tpu.memory_space<vmem>>, vector<8x8xf32>
    tpu.vector_store %arg7[%c0_16, %c0_17], %23 {strides = array<i32>} : memref<8x8xf32, #tpu.memory_space<vmem>>, vector<8x8xf32>,
    return
  }
  func.func @transform_0(%arg0: i32) -> (i32, i32) {
    %c0_i32 = arith.constant 0 : i32
    %c0_i32_0 = arith.constant 0 : i32
    return %c0_i32, %arg0 : i32, i32
  }
  func.func @transform_1(%arg0: i32) -> (i32, i32) {
    %c0_i32 = arith.constant 0 : i32
    %c0_i32_0 = arith.constant 0 : i32
    %c0_i32_1 = arith.constant 0 : i32
    return %c0_i32, %c0_i32_0 : i32, i32
  }
  func.func @transform_2(%arg0: i32) -> (i32, i32) {
    %c0_i32 = arith.constant 0 : i32
    %c0_i32_0 = arith.constant 0 : i32
    %c0_i32_1 = arith.constant 0 : i32
    return %c0_i32, %c0_i32_0 : i32, i32
  }
  func.func @transform_3(%arg0: i32) -> (i32, i32) {
    %c0_i32 = arith.constant 0 : i32
    %c0_i32_0 = arith.constant 0 : i32
    %c0_i32_1 = arith.constant 0 : i32
    return %c0_i32, %c0_i32_0 : i32, i32
  }
  func.func @transform_4(%arg0: i32) -> (i32, i32) {
    %c0_i32 = arith.constant 0 : i32
    %c0_i32_0 = arith.constant 0 : i32
    %c0_i32_1 = arith.constant 0 : i32
    return %c0_i32, %c0_i32_0 : i32, i32
  }
  func.func @transform_5(%arg0: i32) -> (i32, i32) {
    %c0_i32 = arith.constant 0 : i32
    %c0_i32_0 = arith.constant 0 : i32
    %c0_i32_1 = arith.constant 0 : i32
    return %c0_i32, %c0_i32_0 : i32, i32
  }
  func.func @transform_6(%arg0: i32) -> (i32, i32) {
    %c0_i32 = arith.constant 0 : i32
    %c0_i32_0 = arith.constant 0 : i32
    return %c0_i32, %arg0 : i32, i32
  }
}

module attributes {stable_mosaic.version = 11 : i64} {
  func.func @_upsample_add_kernel(%arg0: i32, %arg1: memref<128x64xf32, #tpu.memory_space<vmem>>, %arg2: memref<8x16xf32, #tpu.memory_space<vmem>>, %arg3: memref<1x64x8xf32, #tpu.memory_space<vmem>>, %arg4: memref<1x128x16xf32, #tpu.memory_space<vmem>>, %arg5: memref<1x128x16xf32, #tpu.memory_space<vmem>>) attributes {dimension_semantics = [#tpu.dimension_semantics<parallel>], iteration_bounds = array<i64: 2>, scalar_prefetch = 0 : i64, scratch_operands = 0 : i64, tpu.core_type = #tpu.core_type<tc>, window_params = [{pipeline_mode = #tpu.pipeline_mode<synchronous>, transform_indices = @transform_0, window_bounds = array<i64: 128, 64>}, {pipeline_mode = #tpu.pipeline_mode<synchronous>, transform_indices = @transform_1, window_bounds = array<i64: 8, 16>}, {transform_indices = @transform_2, window_bounds = array<i64: 1, 64, 8>}, {transform_indices = @transform_3, window_bounds = array<i64: 1, 128, 16>}, {transform_indices = @transform_4, window_bounds = array<i64: 1, 128, 16>}]} {
    %c0 = arith.constant 0 : index
    %c0_0 = arith.constant 0 : index
    %c0_1 = arith.constant 0 : index
    %0 = vector.load %arg3[%c0, %c0_0, %c0_1] : memref<1x64x8xf32, #tpu.memory_space<vmem>>, vector<1x64x8xf32>
    %1 = vector.shape_cast %0 : vector<1x64x8xf32> to vector<64x8xf32>
    %c0_2 = arith.constant 0 : index
    %c0_3 = arith.constant 0 : index
    %2 = vector.load %arg2[%c0_2, %c0_3] : memref<8x16xf32, #tpu.memory_space<vmem>>, vector<8x16xf32>
    %cst = arith.constant dense<0.000000e+00> : vector<64x16xf32>
    %3 = tpu.matmul %1, %2, %cst {dimension_numbers = #tpu.dot_dimension_numbers<[1], [0], [0], [1], [0, 0, 1, 1], [], []>} : vector<64x8xf32>, vector<8x16xf32>, vector<64x16xf32> -> vector<64x16xf32>
    %c0_4 = arith.constant 0 : index
    %c0_5 = arith.constant 0 : index
    %4 = vector.load %arg1[%c0_4, %c0_5] : memref<128x64xf32, #tpu.memory_space<vmem>>, vector<128x64xf32>
    %cst_6 = arith.constant dense<0.000000e+00> : vector<128x16xf32>
    %5 = tpu.matmul %4, %3, %cst_6 {dimension_numbers = #tpu.dot_dimension_numbers<[1], [0], [0], [1], [0, 0, 1, 1], [], []>} : vector<128x64xf32>, vector<64x16xf32>, vector<128x16xf32> -> vector<128x16xf32>
    %c0_7 = arith.constant 0 : index
    %c0_8 = arith.constant 0 : index
    %c0_9 = arith.constant 0 : index
    %6 = vector.load %arg4[%c0_7, %c0_8, %c0_9] : memref<1x128x16xf32, #tpu.memory_space<vmem>>, vector<1x128x16xf32>
    %7 = vector.shape_cast %6 : vector<1x128x16xf32> to vector<128x16xf32>
    %8 = arith.addf %5, %7 : vector<128x16xf32>
    %c0_10 = arith.constant 0 : index
    %c0_11 = arith.constant 0 : index
    %c0_12 = arith.constant 0 : index
    %9 = vector.load %arg5[%c0_10, %c0_11, %c0_12] : memref<1x128x16xf32, #tpu.memory_space<vmem>>, vector<1x128x16xf32>
    %10 = vector.shape_cast %9 : vector<1x128x16xf32> to vector<128x16xf32>
    %11 = vector.shape_cast %8 : vector<128x16xf32> to vector<1x128x16xf32>
    tpu.vector_store %arg5[%c0_10, %c0_11, %c0_12], %11 {strides = array<i32>} : memref<1x128x16xf32, #tpu.memory_space<vmem>>, vector<1x128x16xf32>,
    return
  }
  func.func @transform_0(%arg0: i32) -> (i32, i32) {
    %c0_i32 = arith.constant 0 : i32
    %c0_i32_0 = arith.constant 0 : i32
    %c0_i32_1 = arith.constant 0 : i32
    return %c0_i32, %c0_i32_0 : i32, i32
  }
  func.func @transform_1(%arg0: i32) -> (i32, i32) {
    %c0_i32 = arith.constant 0 : i32
    %c0_i32_0 = arith.constant 0 : i32
    %c0_i32_1 = arith.constant 0 : i32
    return %c0_i32, %c0_i32_0 : i32, i32
  }
  func.func @transform_2(%arg0: i32) -> (i32, i32, i32) {
    %c0_i32 = arith.constant 0 : i32
    %c0_i32_0 = arith.constant 0 : i32
    %c0_i32_1 = arith.constant 0 : i32
    return %arg0, %c0_i32, %c0_i32_0 : i32, i32, i32
  }
  func.func @transform_3(%arg0: i32) -> (i32, i32, i32) {
    %c0_i32 = arith.constant 0 : i32
    %c0_i32_0 = arith.constant 0 : i32
    %c0_i32_1 = arith.constant 0 : i32
    return %arg0, %c0_i32, %c0_i32_0 : i32, i32, i32
  }
  func.func @transform_4(%arg0: i32) -> (i32, i32, i32) {
    %c0_i32 = arith.constant 0 : i32
    %c0_i32_0 = arith.constant 0 : i32
    %c0_i32_1 = arith.constant 0 : i32
    return %arg0, %c0_i32, %c0_i32_0 : i32, i32, i32
  }
}

</mosaic_0001>

<llo_original>
// kernel: hourglass_forward.6
$region0: #{hourglass_forward.6}
  #allocation0 [shape = 'u32[]', space=smem, size = 0x4, offset = 0x4, fixed_abs, tag = 'smem constant byte address 0x4 - core index']
  #allocation1 [shape = 'u32[144,128]{1,0:T(1,128)}', space=vmem, size = 0x12000, scoped, tag = 'internal scratch']
  %s0 = inlined_call_operand.vmem [shape: bf16[80,128], index: 0, kind: input, shape index: {}]
  %s1 = inlined_call_operand.vmem [shape: bf16[304,80], index: 1, kind: input, shape index: {}]
  %s2 = inlined_call_operand.vmem [shape: bf16[32,288], index: 2, kind: input, shape index: {}]
  %s3 = inlined_call_operand.vmem [shape: f32[32,1], index: 3, kind: input, shape index: {}]
  %s4 = inlined_call_operand.vmem [shape: bf16[8,32], index: 4, kind: input, shape index: {}]
  %s5 = inlined_call_operand.vmem [shape: f32[8,1], index: 5, kind: input, shape index: {}]
  %s6 = inlined_call_operand.vmem [shape: f32[8,128], index: 6, kind: output, shape index: {}]
  %s7 = sld [smem:[#allocation0]]
  $region34: #{hourglass_forward.6} parent=0
    _
  %s9 = ssub.s32 1, %s7
  %s10 = scalar_select 0, %s9, %s7
  // Predicated region
  $region2: #{hourglass_forward.6} parent=0 // pred_check
    _
  $region3: #{hourglass_forward.6} parent=0 // pred_check_branch
    %12 = sbr.rel (0) target = $region5
  $region4: #{hourglass_forward.6} parent=0 // pred_region
    _
  $region5: #{hourglass_forward.6} parent=0 // pred_fallthru
    _
  // Predicated region
  $region6: #{hourglass_forward.6} parent=0 // pred_check
    _
  $region7: #{hourglass_forward.6} parent=0 // pred_check_branch
    %14 = sbr.rel (0) target = $region9
  $region8: #{hourglass_forward.6} parent=0 // pred_region
    _
  $region9: #{hourglass_forward.6} parent=0 // pred_fallthru
    _
  // Predicated region
  $region10: #{hourglass_forward.6} parent=0 // pred_check
    _
  $region11: #{hourglass_forward.6} parent=0 // pred_check_branch
    %16 = sbr.rel (0) target = $region13
  $region12: #{hourglass_forward.6} parent=0 // pred_region
    _
  $region13: #{hourglass_forward.6} parent=0 // pred_fallthru
    _
  // Predicated region
  $region14: #{hourglass_forward.6} parent=0 // pred_check
    _
  $region15: #{hourglass_forward.6} parent=0 // pred_check_branch
    %18 = sbr.rel (0) target = $region17
  $region16: #{hourglass_forward.6} parent=0 // pred_region
    _
  $region17: #{hourglass_forward.6} parent=0 // pred_fallthru
    _
  // Predicated region
  $region18: #{hourglass_forward.6} parent=0 // pred_check
    _
  $region19: #{hourglass_forward.6} parent=0 // pred_check_branch
    %20 = sbr.rel (0) target = $region21
  $region20: #{hourglass_forward.6} parent=0 // pred_region
    _
  $region21: #{hourglass_forward.6} parent=0 // pred_fallthru
    _
  // Predicated region
  $region22: #{hourglass_forward.6} parent=0 // pred_check
    _
  $region23: #{hourglass_forward.6} parent=0 // pred_check_branch
    %22 = sbr.rel (0) target = $region25
  $region24: #{hourglass_forward.6} parent=0 // pred_region
    _
  $region25: #{hourglass_forward.6} parent=0 // pred_fallthru
    _
  %v24 = vld [vmem:[%s0] sm:$0xf]
  %v25 = vld [vmem:[%s0 + $0x4] sm:$0xf]
  %v26 = vld [vmem:[%s0 + $0x8] sm:$0xf]
  %v27 = vld [vmem:[%s0 + $0xc] sm:$0xf]
  %v28 = vld [vmem:[%s0 + $0x10] sm:$0xf]
  %v29 = vld [vmem:[%s0 + $0x14] sm:$0xf]
  %v30 = vld [vmem:[%s0 + $0x18] sm:$0xf]
  %v31 = vld [vmem:[%s0 + $0x1c] sm:$0xf]
  %v32 = vld [vmem:[%s0 + $0x20] sm:$0xf]
  %v33 = vld [vmem:[%s0 + $0x24] sm:$0xf]
  %v34 = vld [vmem:[%s1] sm:$0xf]
  %v35 = vld [vmem:[%s1 + $0x4] sm:$0xf]
  %v36 = vld [vmem:[%s1 + $0x8] sm:$0xf]
  %v37 = vld [vmem:[%s1 + $0xc] sm:$0xf]
  %v38 = vld [vmem:[%s1 + $0x10] sm:$0xf]
  %v39 = vld [vmem:[%s1 + $0x14] sm:$0xf]
  %v40 = vld [vmem:[%s1 + $0x18] sm:$0xf]
  %v41 = vld [vmem:[%s1 + $0x1c] sm:$0xf]
  %v42 = vld [vmem:[%s1 + $0x20] sm:$0xf]
  %v43 = vld [vmem:[%s1 + $0x24] sm:$0xf]
  %v44 = vld [vmem:[%s1 + $0x28] sm:$0xf]
  %v45 = vld [vmem:[%s1 + $0x2c] sm:$0xf]
  %v46 = vld [vmem:[%s1 + $0x30] sm:$0xf]
  %v47 = vld [vmem:[%s1 + $0x34] sm:$0xf]
  %v48 = vld [vmem:[%s1 + $0x38] sm:$0xf]
  %v49 = vld [vmem:[%s1 + $0x3c] sm:$0xf]
  %v50 = vld [vmem:[%s1 + $0x40] sm:$0xf]
  %v51 = vld [vmem:[%s1 + $0x44] sm:$0xf]
  %v52 = vld [vmem:[%s1 + $0x48] sm:$0xf]
  %v53 = vld [vmem:[%s1 + $0x4c] sm:$0xf]
  %v54 = vld [vmem:[%s1 + $0x50] sm:$0xf]
  %v55 = vld [vmem:[%s1 + $0x54] sm:$0xf]
  %v56 = vld [vmem:[%s1 + $0x58] sm:$0xf]
  %v57 = vld [vmem:[%s1 + $0x5c] sm:$0xf]
  %v58 = vld [vmem:[%s1 + $0x60] sm:$0xf]
  %v59 = vld [vmem:[%s1 + $0x64] sm:$0xf]
  %v60 = vld [vmem:[%s1 + $0x68] sm:$0xf]
  %v61 = vld [vmem:[%s1 + $0x6c] sm:$0xf]
  %v62 = vld [vmem:[%s1 + $0x70] sm:$0xf]
  %v63 = vld [vmem:[%s1 + $0x74] sm:$0xf]
  %v64 = vld [vmem:[%s1 + $0x78] sm:$0xf]
  %v65 = vld [vmem:[%s1 + $0x7c] sm:$0xf]
  %v66 = vld [vmem:[%s1 + $0x80] sm:$0xf]
  %v67 = vld [vmem:[%s1 + $0x84] sm:$0xf]
  %v68 = vld [vmem:[%s1 + $0x88] sm:$0xf]
  %v69 = vld [vmem:[%s1 + $0x8c] sm:$0xf]
  %v70 = vld [vmem:[%s1 + $0x90] sm:$0xf]
  %v71 = vld [vmem:[%s1 + $0x94] sm:$0xf]
  %v110 = vunpack.c.l.b16 %v34
  %v111 = vunpack.c.l.b16 %v35
  %v112 = vunpack.c.l.b16 %v36
  %v113 = vunpack.c.l.b16 %v37
  %v114 = vunpack.c.l.b16 %v38
  %v115 = vunpack.c.l.b16 %v39
  %v116 = vunpack.c.l.b16 %v40
  %v117 = vunpack.c.l.b16 %v41
  %v118 = vunpack.c.l.b16 %v42
  %v119 = vunpack.c.l.b16 %v43
  %v120 = vunpack.c.l.b16 %v44
  %v121 = vunpack.c.l.b16 %v45
  %v122 = vunpack.c.l.b16 %v46
  %v123 = vunpack.c.l.b16 %v47
  %v124 = vunpack.c.l.b16 %v48
  %v125 = vunpack.c.l.b16 %v49
  %v126 = vunpack.c.l.b16 %v50
  %v127 = vunpack.c.l.b16 %v51
  %v128 = vunpack.c.l.b16 %v52
  %v129 = vunpack.c.l.b16 %v53
  %v130 = vunpack.c.l.b16 %v54
  %v131 = vunpack.c.l.b16 %v55
  %v132 = vunpack.c.l.b16 %v56
  %v133 = vunpack.c.l.b16 %v57
  %v134 = vunpack.c.l.b16 %v58
  %v135 = vunpack.c.l.b16 %v59
  %v136 = vunpack.c.l.b16 %v60
  %v137 = vunpack.c.l.b16 %v61
  %v138 = vunpack.c.l.b16 %v62
  %v139 = vunpack.c.l.b16 %v63
  %v140 = vunpack.c.l.b16 %v64
  %v141 = vunpack.c.l.b16 %v65
  %v142 = vunpack.c.l.b16 %v66
  %v143 = vunpack.c.l.b16 %v67
  %v144 = vunpack.c.l.b16 %v68
  %v145 = vunpack.c.l.b16 %v69
  %v146 = vunpack.c.l.b16 %v70
  %v147 = vunpack.c.l.b16 %v71
  %v148 = vpack.c.b16 %v111, %v110
  %v149 = vpack.c.b16 %v113, %v112
  %v150 = vpack.c.b16 %v115, %v114
  %v151 = vpack.c.b16 %v117, %v116
  %v152 = vpack.c.b16 %v119, %v118
  %v153 = vpack.c.b16 %v121, %v120
  %v154 = vpack.c.b16 %v123, %v122
  %v155 = vpack.c.b16 %v125, %v124
  %v156 = vpack.c.b16 %v127, %v126
  %v157 = vpack.c.b16 %v129, %v128
  %v158 = vpack.c.b16 %v131, %v130
  %v159 = vpack.c.b16 %v133, %v132
  %v160 = vpack.c.b16 %v135, %v134
  %v161 = vpack.c.b16 %v137, %v136
  %v162 = vpack.c.b16 %v139, %v138
  %v163 = vpack.c.b16 %v141, %v140
  %v164 = vpack.c.b16 %v143, %v142
  %v165 = vpack.c.b16 %v145, %v144
  %v166 = vpack.c.b16 %v147, %v146
  %v177 = vunpack.c.l.b16 %v24
  %v178 = vunpack.c.l.b16 %v25
  %v179 = vunpack.c.l.b16 %v26
  %v180 = vunpack.c.l.b16 %v27
  %v181 = vunpack.c.l.b16 %v28
  %v182 = vunpack.c.l.b16 %v29
  %v183 = vunpack.c.l.b16 %v30
  %v184 = vunpack.c.l.b16 %v31
  %v185 = vunpack.c.l.b16 %v32
  %v186 = vunpack.c.l.b16 %v33
  %v187 = vpack.c.b16 %v178, %v177
  %v188 = vpack.c.b16 %v180, %v179
  %v189 = vpack.c.b16 %v182, %v181
  %v190 = vpack.c.b16 %v184, %v183
  %v191 = vpack.c.b16 %v186, %v185
  %vm197 = vcmask 654336
  %v199 = vsel %vm197, %v148, 0
  %v202 = vsel %vm197, %v149, 0
  %v205 = vsel %vm197, %v150, 0
  %v208 = vsel %vm197, %v151, 0
  %v211 = vsel %vm197, %v152, 0
  %v214 = vsel %vm197, %v153, 0
  %v217 = vsel %vm197, %v154, 0
  %v220 = vsel %vm197, %v155, 0
  %v223 = vsel %vm197, %v156, 0
  %v226 = vsel %vm197, %v157, 0
  %v229 = vsel %vm197, %v158, 0
  %v232 = vsel %vm197, %v159, 0
  %v235 = vsel %vm197, %v160, 0
  %v238 = vsel %vm197, %v161, 0
  %v241 = vsel %vm197, %v162, 0
  %v244 = vsel %vm197, %v163, 0
  %v247 = vsel %vm197, %v164, 0
  %v250 = vsel %vm197, %v165, 0
  %v253 = vsel %vm197, %v166, 0
  %255 = vmatprep.subr.bf16.mxu0 0
  %256 = vmatpush1.bf16.msra.mxu0 %v187
  %257 = vmatprep.subr.bf16.mxu0 0
  %258 = vmatpush1.bf16.msra.mxu0 %v188
  %259 = vmatprep.subr.bf16.mxu0 0
  %260 = vmatpush1.bf16.msra.mxu0 %v189
  %261 = vmatprep.subr.bf16.mxu0 0
  %262 = vmatpush1.bf16.msra.mxu0 %v190
  %263 = vmatprep.subr.bf16.mxu0 0
  %264 = vmatpush1.bf16.msra.mxu0 %v191
  %265 = vmatprep.subr.bf16.mxu0 0
  %266 = vmatpush1.bf16.msra.mxu0 0
  %267 = vmatprep.subr.bf16.mxu0 0
  %268 = vmatpush1.bf16.msra.mxu0 0
  %269 = vmatprep.subr.bf16.mxu0 0
  %270 = vmatpush1.bf16.msra.mxu0 0
  %271 = vmatprep.subr.bf16.mxu0 0
  %272 = vmatpush1.bf16.msra.mxu0 0
  %273 = vmatprep.subr.bf16.mxu0 0
  %274 = vmatpush1.bf16.msra.mxu0 0
  %275 = vmatprep.subr.bf16.mxu0 0
  %276 = vmatpush1.bf16.msra.mxu0 0
  %277 = vmatprep.subr.bf16.mxu0 0
  %278 = vmatpush1.bf16.msra.mxu0 0
  %279 = vmatprep.subr.bf16.mxu0 0
  %280 = vmatpush1.bf16.msra.mxu0 0
  %281 = vmatprep.subr.bf16.mxu0 0
  %282 = vmatpush1.bf16.msra.mxu0 0
  %283 = vmatprep.subr.bf16.mxu0 0
  %284 = vmatpush1.bf16.msra.mxu0 0
  %285 = vmatprep.subr.bf16.mxu0 0
  %286 = vmatpush1.bf16.msra.mxu0 0
  %287 = vmatprep.mubr.bf16.mxu0 0
  %288 = vmatmul.mubr.bf16.gmra.mrb[0].mxu0 %v199
  %v289 = vpop.f32.mrb[0].mxu0
  %v290 = vadd.f32 0.0, %v289
  %v291 = vpop.f32.mrb[0].mxu0
  %v292 = vpop.f32.mrb[0].mxu0
  %v293 = vadd.f32 0.0, %v292
  %v294 = vpop.f32.mrb[0].mxu0
  %295 = vmatprep.mubr.bf16.mxu0 0
  %296 = vmatmul.mubr.bf16.gmra.mrb[0].mxu0 %v202
  %v297 = vpop.f32.mrb[0].mxu0
  %v298 = vadd.f32 0.0, %v297
  %v299 = vpop.f32.mrb[0].mxu0
  %v300 = vpop.f32.mrb[0].mxu0
  %v301 = vadd.f32 0.0, %v300
  %v302 = vpop.f32.mrb[0].mxu0
  %303 = vmatprep.mubr.bf16.mxu0 0
  %304 = vmatmul.mubr.bf16.gmra.mrb[0].mxu0 %v205
  %v305 = vpop.f32.mrb[0].mxu0
  %v306 = vadd.f32 0.0, %v305
  %v307 = vpop.f32.mrb[0].mxu0
  %v308 = vpop.f32.mrb[0].mxu0
  %v309 = vadd.f32 0.0, %v308
  %v310 = vpop.f32.mrb[0].mxu0
  %311 = vmatprep.mubr.bf16.mxu0 0
  %312 = vmatmul.mubr.bf16.gmra.mrb[0].mxu0 %v208
  %v313 = vpop.f32.mrb[0].mxu0
  %v314 = vadd.f32 0.0, %v313
  %v315 = vpop.f32.mrb[0].mxu0
  %v316 = vpop.f32.mrb[0].mxu0
  %v317 = vadd.f32 0.0, %v316
  %v318 = vpop.f32.mrb[0].mxu0
  %319 = vmatprep.mubr.bf16.mxu0 0
  %320 = vmatmul.mubr.bf16.gmra.mrb[0].mxu0 %v211
  %v321 = vpop.f32.mrb[0].mxu0
  %v322 = vadd.f32 0.0, %v321
  %v323 = vpop.f32.mrb[0].mxu0
  %v324 = vpop.f32.mrb[0].mxu0
  %v325 = vadd.f32 0.0, %v324
  %v326 = vpop.f32.mrb[0].mxu0
  %327 = vmatprep.mubr.bf16.mxu0 0
  %328 = vmatmul.mubr.bf16.gmra.mrb[0].mxu0 %v214
  %v329 = vpop.f32.mrb[0].mxu0
  %v330 = vadd.f32 0.0, %v329
  %v331 = vpop.f32.mrb[0].mxu0
  %v332 = vpop.f32.mrb[0].mxu0
  %v333 = vadd.f32 0.0, %v332
  %v334 = vpop.f32.mrb[0].mxu0
  %335 = vmatprep.mubr.bf16.mxu0 0
  %336 = vmatmul.mubr.bf16.gmra.mrb[0].mxu0 %v217
  %v337 = vpop.f32.mrb[0].mxu0
  %v338 = vadd.f32 0.0, %v337
  %v339 = vpop.f32.mrb[0].mxu0
  %v340 = vpop.f32.mrb[0].mxu0
  %v341 = vadd.f32 0.0, %v340
  %v342 = vpop.f32.mrb[0].mxu0
  %343 = vmatprep.mubr.bf16.mxu0 0
  %344 = vmatmul.mubr.bf16.gmra.mrb[0].mxu0 %v220
  %v345 = vpop.f32.mrb[0].mxu0
  %v346 = vadd.f32 0.0, %v345
  %v347 = vpop.f32.mrb[0].mxu0
  %v348 = vpop.f32.mrb[0].mxu0
  %v349 = vadd.f32 0.0, %v348
  %v350 = vpop.f32.mrb[0].mxu0
  %351 = vmatprep.mubr.bf16.mxu0 0
  %352 = vmatmul.mubr.bf16.gmra.mrb[0].mxu0 %v223
  %v353 = vpop.f32.mrb[0].mxu0
  %v354 = vadd.f32 0.0, %v353
  %v355 = vpop.f32.mrb[0].mxu0
  %v356 = vpop.f32.mrb[0].mxu0
  %v357 = vadd.f32 0.0, %v356
  %v358 = vpop.f32.mrb[0].mxu0
  %359 = vmatprep.mubr.bf16.mxu0 0
  %360 = vmatmul.mubr.bf16.gmra.mrb[0].mxu0 %v226
  %v361 = vpop.f32.mrb[0].mxu0
  %v362 = vadd.f32 0.0, %v361
  %v363 = vpop.f32.mrb[0].mxu0
  %v364 = vpop.f32.mrb[0].mxu0
  %v365 = vadd.f32 0.0, %v364
  %v366 = vpop.f32.mrb[0].mxu0
  %367 = vmatprep.mubr.bf16.mxu0 0
  %368 = vmatmul.mubr.bf16.gmra.mrb[0].mxu0 %v229
  %v369 = vpop.f32.mrb[0].mxu0
  %v370 = vadd.f32 0.0, %v369
  %v371 = vpop.f32.mrb[0].mxu0
  %v372 = vpop.f32.mrb[0].mxu0
  %v373 = vadd.f32 0.0, %v372
  %v374 = vpop.f32.mrb[0].mxu0
  %375 = vmatprep.mubr.bf16.mxu0 0
  %376 = vmatmul.mubr.bf16.gmra.mrb[0].mxu0 %v232
  %v377 = vpop.f32.mrb[0].mxu0
  %v378 = vadd.f32 0.0, %v377
  %v379 = vpop.f32.mrb[0].mxu0
  %v380 = vpop.f32.mrb[0].mxu0
  %v381 = vadd.f32 0.0, %v380
  %v382 = vpop.f32.mrb[0].mxu0
  %383 = vmatprep.mubr.bf16.mxu0 0
  %384 = vmatmul.mubr.bf16.gmra.mrb[0].mxu0 %v235
  %v385 = vpop.f32.mrb[0].mxu0
  %v386 = vadd.f32 0.0, %v385
  %v387 = vpop.f32.mrb[0].mxu0
  %v388 = vpop.f32.mrb[0].mxu0
  %v389 = vadd.f32 0.0, %v388
  %v390 = vpop.f32.mrb[0].mxu0
  %391 = vmatprep.mubr.bf16.mxu0 0
  %392 = vmatmul.mubr.bf16.gmra.mrb[0].mxu0 %v238
  %v393 = vpop.f32.mrb[0].mxu0
  %v394 = vadd.f32 0.0, %v393
  %v395 = vpop.f32.mrb[0].mxu0
  %v396 = vpop.f32.mrb[0].mxu0
  %v397 = vadd.f32 0.0, %v396
  %v398 = vpop.f32.mrb[0].mxu0
  %399 = vmatprep.mubr.bf16.mxu0 0
  %400 = vmatmul.mubr.bf16.gmra.mrb[0].mxu0 %v241
  %v401 = vpop.f32.mrb[0].mxu0
  %v402 = vadd.f32 0.0, %v401
  %v403 = vpop.f32.mrb[0].mxu0
  %v404 = vpop.f32.mrb[0].mxu0
  %v405 = vadd.f32 0.0, %v404
  %v406 = vpop.f32.mrb[0].mxu0
  %407 = vmatprep.mubr.bf16.mxu0 0
  %408 = vmatmul.mubr.bf16.gmra.mrb[0].mxu0 %v244
  %v409 = vpop.f32.mrb[0].mxu0
  %v410 = vadd.f32 0.0, %v409
  %v411 = vpop.f32.mrb[0].mxu0
  %v412 = vpop.f32.mrb[0].mxu0
  %v413 = vadd.f32 0.0, %v412
  %v414 = vpop.f32.mrb[0].mxu0
  %415 = vmatprep.mubr.bf16.mxu0 0
  %416 = vmatmul.mubr.bf16.gmra.mrb[0].mxu0 %v247
  %v417 = vpop.f32.mrb[0].mxu0
  %v418 = vadd.f32 0.0, %v417
  %v419 = vpop.f32.mrb[0].mxu0
  %v420 = vpop.f32.mrb[0].mxu0
  %v421 = vadd.f32 0.0, %v420
  %v422 = vpop.f32.mrb[0].mxu0
  %423 = vmatprep.mubr.bf16.mxu0 0
  %424 = vmatmul.mubr.bf16.gmra.mrb[0].mxu0 %v250
  %v425 = vpop.f32.mrb[0].mxu0
  %v426 = vadd.f32 0.0, %v425
  %v427 = vpop.f32.mrb[0].mxu0
  %v428 = vpop.f32.mrb[0].mxu0
  %v429 = vadd.f32 0.0, %v428
  %v430 = vpop.f32.mrb[0].mxu0
  %431 = vmatprep.mubr.bf16.mxu0 0
  %432 = vmatmul.mubr.bf16.gmra.mrb[0].mxu0 %v253
  %v433 = vpop.f32.mrb[0].mxu0
  %v434 = vadd.f32 0.0, %v433
  %v435 = vpop.f32.mrb[0].mxu0
  %v436 = vpop.f32.mrb[0].mxu0
  %v437 = vpop.f32.mrb[0].mxu0
  %438 = vdwg.mxu0
  %v439 = vmax.f32 %v290, 0.0
  %v440 = vmax.f32 %v293, 0.0
  %v441 = vmax.f32 %v298, 0.0
  %v442 = vmax.f32 %v301, 0.0
  %v443 = vmax.f32 %v306, 0.0
  %v444 = vmax.f32 %v309, 0.0
  %v445 = vmax.f32 %v314, 0.0
  %v446 = vmax.f32 %v317, 0.0
  %v447 = vmax.f32 %v322, 0.0
  %v448 = vmax.f32 %v325, 0.0
  %v449 = vmax.f32 %v330, 0.0
  %v450 = vmax.f32 %v333, 0.0
  %v451 = vmax.f32 %v338, 0.0
  %v452 = vmax.f32 %v341, 0.0
  %v453 = vmax.f32 %v346, 0.0
  %v454 = vmax.f32 %v349, 0.0
  %v455 = vmax.f32 %v354, 0.0
  %v456 = vmax.f32 %v357, 0.0
  %v457 = vmax.f32 %v362, 0.0
  %v458 = vmax.f32 %v365, 0.0
  %v459 = vmax.f32 %v370, 0.0
  %v460 = vmax.f32 %v373, 0.0
  %v461 = vmax.f32 %v378, 0.0
  %v462 = vmax.f32 %v381, 0.0
  %v463 = vmax.f32 %v386, 0.0
  %v464 = vmax.f32 %v389, 0.0
  %v465 = vmax.f32 %v394, 0.0
  %v466 = vmax.f32 %v397, 0.0
  %v467 = vmax.f32 %v402, 0.0
  %v468 = vmax.f32 %v405, 0.0
  %v469 = vmax.f32 %v410, 0.0
  %v470 = vmax.f32 %v413, 0.0
  %v471 = vmax.f32 %v418, 0.0
  %v472 = vmax.f32 %v421, 0.0
  %v473 = vmax.f32 %v426, 0.0
  %v474 = vmax.f32 %v429, 0.0
  %v475 = vld [vmem:[%s2] sm:$0xff]
  %v476 = vld [vmem:[%s2 + $0x8] sm:$0xf]
  %v477 = vld [vmem:[%s2 + $0xc] sm:$0xff]
  %v478 = vld [vmem:[%s2 + $0x14] sm:$0xf]
  %v479 = vld [vmem:[%s2 + $0x18] sm:$0xff]
  %v480 = vld [vmem:[%s2 + $0x20] sm:$0xf]
  %v481 = vld [vmem:[%s2 + $0x24] sm:$0xff]
  %v482 = vld [vmem:[%s2 + $0x2c] sm:$0xf]
  %v483 = vpack.c.bf16 %v440, %v439
  %v484 = vpack.c.bf16 %v442, %v441
  %v485 = vpack.c.bf16 %v444, %v443
  %v486 = vpack.c.bf16 %v446, %v445
  %v487 = vpack.c.bf16 %v448, %v447
  %v488 = vpack.c.bf16 %v450, %v449
  %v489 = vpack.c.bf16 %v452, %v451
  %v490 = vpack.c.bf16 %v454, %v453
  %v491 = vpack.c.bf16 %v456, %v455
  %v492 = vpack.c.bf16 %v458, %v457
  %v493 = vpack.c.bf16 %v460, %v459
  %v494 = vpack.c.bf16 %v462, %v461
  %v495 = vpack.c.bf16 %v464, %v463
  %v496 = vpack.c.bf16 %v466, %v465
  %v497 = vpack.c.bf16 %v468, %v467
  %v498 = vpack.c.bf16 %v470, %v469
  %v499 = vpack.c.bf16 %v472, %v471
  %v500 = vpack.c.bf16 %v474, %v473
  %v501 = vld [vmem:[%s3] sm:$0xff]
  %v502 = vld [vmem:[%s3 + $0x8] sm:$0xff]
  %v503 = vld [vmem:[%s3 + $0x10] sm:$0xff]
  %v504 = vld [vmem:[%s3 + $0x18] sm:$0xff]
  %506 = vset.pattern.permute.xlu0 0
  %507 = vperm.xlu0 %506, %v501
  %v508 = vpop.permute.xlu0 %507
  %511 = vset.pattern.permute.xlu0 0
  %512 = vperm.xlu0 %511, %v502
  %v513 = vpop.permute.xlu0 %512
  %516 = vset.pattern.permute.xlu0 0
  %517 = vperm.xlu0 %516, %v503
  %v518 = vpop.permute.xlu0 %517
  %521 = vset.pattern.permute.xlu0 0
  %522 = vperm.xlu0 %521, %v504
  %v523 = vpop.permute.xlu0 %522
  %v533 = vunpack.c.l.b16 %v475
  %v534 = vunpack.c.h.b16 %v475
  %v535 = vunpack.c.l.b16 %v476
  %v536 = vunpack.c.l.b16 %v477
  %v537 = vunpack.c.h.b16 %v477
  %v538 = vunpack.c.l.b16 %v478
  %v539 = vunpack.c.l.b16 %v479
  %v540 = vunpack.c.h.b16 %v479
  %v541 = vunpack.c.l.b16 %v480
  %v542 = vunpack.c.l.b16 %v481
  %v543 = vunpack.c.h.b16 %v481
  %v544 = vunpack.c.l.b16 %v482
  %v545 = vpack.c.b16 %v536, %v533
  %v546 = vpack.c.b16 %v537, %v534
  %v547 = vpack.c.b16 %v538, %v535
  %v548 = vpack.c.b16 %v542, %v539
  %v549 = vpack.c.b16 %v543, %v540
  %v550 = vpack.c.b16 %v544, %v541
  %vm555 = vcmask 261120
  %v557 = vsel %vm555, %v547, 0
  %v560 = vsel %vm555, %v550, 0
  %562 = vmatprep.subr.bf16.mxu0 0
  %563 = vmatpush1.bf16.msra.mxu0 %v483
  %564 = vmatprep.subr.bf16.mxu0 0
  %565 = vmatpush1.bf16.msra.mxu0 %v484
  %566 = vmatprep.subr.bf16.mxu0 0
  %567 = vmatpush1.bf16.msra.mxu0 %v485
  %568 = vmatprep.subr.bf16.mxu0 0
  %569 = vmatpush1.bf16.msra.mxu0 %v486
  %570 = vmatprep.subr.bf16.mxu0 0
  %571 = vmatpush1.bf16.msra.mxu0 %v487
  %572 = vmatprep.subr.bf16.mxu0 0
  %573 = vmatpush1.bf16.msra.mxu0 %v488
  %574 = vmatprep.subr.bf16.mxu0 0
  %575 = vmatpush1.bf16.msra.mxu0 %v489
  %576 = vmatprep.subr.bf16.mxu0 0
  %577 = vmatpush1.bf16.msra.mxu0 %v490
  %578 = vmatprep.subr.bf16.mxu0 0
  %579 = vmatpush1.bf16.msra.mxu0 %v491
  %580 = vmatprep.subr.bf16.mxu0 0
  %581 = vmatpush1.bf16.msra.mxu0 %v492
  %582 = vmatprep.subr.bf16.mxu0 0
  %583 = vmatpush1.bf16.msra.mxu0 %v493
  %584 = vmatprep.subr.bf16.mxu0 0
  %585 = vmatpush1.bf16.msra.mxu0 %v494
  %586 = vmatprep.subr.bf16.mxu0 0
  %587 = vmatpush1.bf16.msra.mxu0 %v495
  %588 = vmatprep.subr.bf16.mxu0 0
  %589 = vmatpush1.bf16.msra.mxu0 %v496
  %590 = vmatprep.subr.bf16.mxu0 0
  %591 = vmatpush1.bf16.msra.mxu0 %v497
  %592 = vmatprep.subr.bf16.mxu0 0
  %593 = vmatpush1.bf16.msra.mxu0 %v498
  %594 = vmatprep.mubr.bf16.mxu0 %v546
  %595 = vmatmul.mubr.bf16.gmra.mrb[0].mxu0 %v545
  %v596 = vpop.f32.mrb[0].mxu0
  %v597 = vadd.f32 %v508, %v596
  %v598 = vpop.f32.mrb[0].mxu0
  %v599 = vpop.f32.mrb[0].mxu0
  %v600 = vadd.f32 %v513, %v599
  %v601 = vpop.f32.mrb[0].mxu0
  %602 = vmatprep.mubr.bf16.mxu0 %v549
  %603 = vmatmul.mubr.bf16.gmra.mrb[0].mxu0 %v548
  %v604 = vpop.f32.mrb[0].mxu0
  %v605 = vadd.f32 %v518, %v604
  %v606 = vpop.f32.mrb[0].mxu0
  %v607 = vpop.f32.mrb[0].mxu0
  %v608 = vadd.f32 %v523, %v607
  %v609 = vpop.f32.mrb[0].mxu0
  %610 = vdwg.mxu0
  %611 = vmatprep.subr.bf16.mxu0 0
  %612 = vmatpush1.bf16.msra.mxu0 %v499
  %613 = vmatprep.subr.bf16.mxu0 0
  %614 = vmatpush1.bf16.msra.mxu0 %v500
  %615 = vmatprep.subr.bf16.mxu0 0
  %616 = vmatpush1.bf16.msra.mxu0 0
  %617 = vmatprep.subr.bf16.mxu0 0
  %618 = vmatpush1.bf16.msra.mxu0 0
  %619 = vmatprep.subr.bf16.mxu0 0
  %620 = vmatpush1.bf16.msra.mxu0 0
  %621 = vmatprep.subr.bf16.mxu0 0
  %622 = vmatpush1.bf16.msra.mxu0 0
  %623 = vmatprep.subr.bf16.mxu0 0
  %624 = vmatpush1.bf16.msra.mxu0 0
  %625 = vmatprep.subr.bf16.mxu0 0
  %626 = vmatpush1.bf16.msra.mxu0 0
  %627 = vmatprep.subr.bf16.mxu0 0
  %628 = vmatpush1.bf16.msra.mxu0 0
  %629 = vmatprep.subr.bf16.mxu0 0
  %630 = vmatpush1.bf16.msra.mxu0 0
  %631 = vmatprep.subr.bf16.mxu0 0
  %632 = vmatpush1.bf16.msra.mxu0 0
  %633 = vmatprep.subr.bf16.mxu0 0
  %634 = vmatpush1.bf16.msra.mxu0 0
  %635 = vmatprep.subr.bf16.mxu0 0
  %636 = vmatpush1.bf16.msra.mxu0 0
  %637 = vmatprep.subr.bf16.mxu0 0
  %638 = vmatpush1.bf16.msra.mxu0 0
  %639 = vmatprep.subr.bf16.mxu0 0
  %640 = vmatpush1.bf16.msra.mxu0 0
  %641 = vmatprep.subr.bf16.mxu0 0
  %642 = vmatpush1.bf16.msra.mxu0 0
  %643 = vmatprep.mubr.bf16.mxu0 0
  %644 = vmatmul.mubr.bf16.gmra.mrb[0].mxu0 %v557
  %v645 = vpop.f32.mrb[0].mxu0
  %v646 = vadd.f32 %v597, %v645
  %v647 = vpop.f32.mrb[0].mxu0
  %v648 = vpop.f32.mrb[0].mxu0
  %v649 = vadd.f32 %v600, %v648
  %v650 = vpop.f32.mrb[0].mxu0
  %651 = vmatprep.mubr.bf16.mxu0 0
  %652 = vmatmul.mubr.bf16.gmra.mrb[0].mxu0 %v560
  %v653 = vpop.f32.mrb[0].mxu0
  %v654 = vadd.f32 %v605, %v653
  %v655 = vpop.f32.mrb[0].mxu0
  %v656 = vpop.f32.mrb[0].mxu0
  %v657 = vadd.f32 %v608, %v656
  %v658 = vpop.f32.mrb[0].mxu0
  %659 = vdwg.mxu0
  %v660 = vmax.f32 %v646, 0.0
  %v661 = vmax.f32 %v649, 0.0
  %v662 = vmax.f32 %v654, 0.0
  %v663 = vmax.f32 %v657, 0.0
  %v664 = vld [vmem:[%s4] sm:$0xf]
  %v665 = vpack.c.bf16 %v661, %v660
  %v666 = vpack.c.bf16 %v663, %v662
  %v668 = vsel %vm555, %v664, 0
  %670 = vmatprep.subr.bf16.mxu0 0
  %671 = vmatpush1.bf16.msra.mxu0 %v665
  %672 = vmatprep.subr.bf16.mxu0 0
  %673 = vmatpush1.bf16.msra.mxu0 %v666
  %674 = vmatprep.subr.bf16.mxu0 0
  %675 = vmatpush1.bf16.msra.mxu0 0
  %676 = vmatprep.subr.bf16.mxu0 0
  %677 = vmatpush1.bf16.msra.mxu0 0
  %678 = vmatprep.subr.bf16.mxu0 0
  %679 = vmatpush1.bf16.msra.mxu0 0
  %680 = vmatprep.subr.bf16.mxu0 0
  %681 = vmatpush1.bf16.msra.mxu0 0
  %682 = vmatprep.subr.bf16.mxu0 0
  %683 = vmatpush1.bf16.msra.mxu0 0
  %684 = vmatprep.subr.bf16.mxu0 0
  %685 = vmatpush1.bf16.msra.mxu0 0
  %686 = vmatprep.subr.bf16.mxu0 0
  %687 = vmatpush1.bf16.msra.mxu0 0
  %688 = vmatprep.subr.bf16.mxu0 0
  %689 = vmatpush1.bf16.msra.mxu0 0
  %690 = vmatprep.subr.bf16.mxu0 0
  %691 = vmatpush1.bf16.msra.mxu0 0
  %692 = vmatprep.subr.bf16.mxu0 0
  %693 = vmatpush1.bf16.msra.mxu0 0
  %694 = vmatprep.subr.bf16.mxu0 0
  %695 = vmatpush1.bf16.msra.mxu0 0
  %696 = vmatprep.subr.bf16.mxu0 0
  %697 = vmatpush1.bf16.msra.mxu0 0
  %698 = vmatprep.subr.bf16.mxu0 0
  %699 = vmatpush1.bf16.msra.mxu0 0
  %700 = vmatprep.subr.bf16.mxu0 0
  %701 = vmatpush1.bf16.msra.mxu0 0
  %702 = vmatprep.mubr.bf16.mxu0 0
  %703 = vmatmul.mubr.bf16.gmra.mrb[0].mxu0 %v668
  %v704 = vpop.f32.mrb[0].mxu0
  %v705 = vadd.f32 %v434, %v704
  %v706 = vpop.f32.mrb[0].mxu0
  %v707 = vpop.f32.mrb[0].mxu0
  %v708 = vpop.f32.mrb[0].mxu0
  %709 = vdwg.mxu0
  %v710 = vld [vmem:[%s5] sm:$0xff]
  %712 = vset.pattern.permute.xlu0 0
  %713 = vperm.xlu0 %712, %v710
  %v714 = vpop.permute.xlu0 %713
  %v716 = vadd.f32 %v705, %v714
  %v717 = vmax.f32 %v716, 0.0
  %718 = vst [vmem:[%s6] sm:$0xff] %v717
  // Predicated region
  $region26: #{hourglass_forward.6} parent=0 // pred_check
    _
  $region27: #{hourglass_forward.6} parent=0 // pred_check_branch
    %720 = sbr.rel (0) target = $region29
  $region28: #{hourglass_forward.6} parent=0 // pred_region
    _
  $region29: #{hourglass_forward.6} parent=0 // pred_fallthru
    _
  // Predicated region
  $region30: #{hourglass_forward.6} parent=0 // pred_check
    _
  $region31: #{hourglass_forward.6} parent=0 // pred_check_branch
    %722 = sbr.rel (0) target = $region33
  $region32: #{hourglass_forward.6} parent=0 // pred_region
    _
  $region33: #{hourglass_forward.6} parent=0 // pred_fallthru
    _

// kernel: hourglass_forward.7
$region0: #{hourglass_forward.7}
  #allocation0 [shape = 'u32[]', space=smem, size = 0x4, offset = 0x4, fixed_abs, tag = 'smem constant byte address 0x4 - core index']
  #allocation1 [shape = 'u32[144,128]{1,0:T(1,128)}', space=vmem, size = 0x12000, scoped, tag = 'internal scratch']
  %s0 = inlined_call_operand.vmem [shape: bf16[80,32], index: 0, kind: input, shape index: {}]
  %s1 = inlined_call_operand.vmem [shape: bf16[304,80], index: 1, kind: input, shape index: {}]
  %s2 = inlined_call_operand.vmem [shape: bf16[32,288], index: 2, kind: input, shape index: {}]
  %s3 = inlined_call_operand.vmem [shape: f32[32,1], index: 3, kind: input, shape index: {}]
  %s4 = inlined_call_operand.vmem [shape: bf16[8,32], index: 4, kind: input, shape index: {}]
  %s5 = inlined_call_operand.vmem [shape: f32[8,1], index: 5, kind: input, shape index: {}]
  %s6 = inlined_call_operand.vmem [shape: f32[8,32], index: 6, kind: output, shape index: {}]
  %s7 = sld [smem:[#allocation0]]
  $region34: #{hourglass_forward.7} parent=0
    _
  %s9 = ssub.s32 1, %s7
  %s10 = scalar_select 0, %s9, %s7
  // Predicated region
  $region2: #{hourglass_forward.7} parent=0 // pred_check
    _
  $region3: #{hourglass_forward.7} parent=0 // pred_check_branch
    %12 = sbr.rel (0) target = $region5
  $region4: #{hourglass_forward.7} parent=0 // pred_region
    _
  $region5: #{hourglass_forward.7} parent=0 // pred_fallthru
    _
  // Predicated region
  $region6: #{hourglass_forward.7} parent=0 // pred_check
    _
  $region7: #{hourglass_forward.7} parent=0 // pred_check_branch
    %14 = sbr.rel (0) target = $region9
  $region8: #{hourglass_forward.7} parent=0 // pred_region
    _
  $region9: #{hourglass_forward.7} parent=0 // pred_fallthru
    _
  // Predicated region
  $region10: #{hourglass_forward.7} parent=0 // pred_check
    _
  $region11: #{hourglass_forward.7} parent=0 // pred_check_branch
    %16 = sbr.rel (0) target = $region13
  $region12: #{hourglass_forward.7} parent=0 // pred_region
    _
  $region13: #{hourglass_forward.7} parent=0 // pred_fallthru
    _
  // Predicated region
  $region14: #{hourglass_forward.7} parent=0 // pred_check
    _
  $region15: #{hourglass_forward.7} parent=0 // pred_check_branch
    %18 = sbr.rel (0) target = $region17
  $region16: #{hourglass_forward.7} parent=0 // pred_region
    _
  $region17: #{hourglass_forward.7} parent=0 // pred_fallthru
    _
  // Predicated region
  $region18: #{hourglass_forward.7} parent=0 // pred_check
    _
  $region19: #{hourglass_forward.7} parent=0 // pred_check_branch
    %20 = sbr.rel (0) target = $region21
  $region20: #{hourglass_forward.7} parent=0 // pred_region
    _
  $region21: #{hourglass_forward.7} parent=0 // pred_fallthru
    _
  // Predicated region
  $region22: #{hourglass_forward.7} parent=0 // pred_check
    _
  $region23: #{hourglass_forward.7} parent=0 // pred_check_branch
    %22 = sbr.rel (0) target = $region25
  $region24: #{hourglass_forward.7} parent=0 // pred_region
    _
  $region25: #{hourglass_forward.7} parent=0 // pred_fallthru
    _
  %v24 = vld [vmem:[%s0] sm:$0xf]
  %v25 = vld [vmem:[%s0 + $0x4] sm:$0xf]
  %v26 = vld [vmem:[%s0 + $0x8] sm:$0xf]
  %v27 = vld [vmem:[%s0 + $0xc] sm:$0xf]
  %v28 = vld [vmem:[%s0 + $0x10] sm:$0xf]
  %v29 = vld [vmem:[%s0 + $0x14] sm:$0xf]
  %v30 = vld [vmem:[%s0 + $0x18] sm:$0xf]
  %v31 = vld [vmem:[%s0 + $0x1c] sm:$0xf]
  %v32 = vld [vmem:[%s0 + $0x20] sm:$0xf]
  %v33 = vld [vmem:[%s0 + $0x24] sm:$0xf]
  %v34 = vld [vmem:[%s1] sm:$0xf]
  %v35 = vld [vmem:[%s1 + $0x4] sm:$0xf]
  %v36 = vld [vmem:[%s1 + $0x8] sm:$0xf]
  %v37 = vld [vmem:[%s1 + $0xc] sm:$0xf]
  %v38 = vld [vmem:[%s1 + $0x10] sm:$0xf]
  %v39 = vld [vmem:[%s1 + $0x14] sm:$0xf]
  %v40 = vld [vmem:[%s1 + $0x18] sm:$0xf]
  %v41 = vld [vmem:[%s1 + $0x1c] sm:$0xf]
  %v42 = vld [vmem:[%s1 + $0x20] sm:$0xf]
  %v43 = vld [vmem:[%s1 + $0x24] sm:$0xf]
  %v44 = vld [vmem:[%s1 + $0x28] sm:$0xf]
  %v45 = vld [vmem:[%s1 + $0x2c] sm:$0xf]
  %v46 = vld [vmem:[%s1 + $0x30] sm:$0xf]
  %v47 = vld [vmem:[%s1 + $0x34] sm:$0xf]
  %v48 = vld [vmem:[%s1 + $0x38] sm:$0xf]
  %v49 = vld [vmem:[%s1 + $0x3c] sm:$0xf]
  %v50 = vld [vmem:[%s1 + $0x40] sm:$0xf]
  %v51 = vld [vmem:[%s1 + $0x44] sm:$0xf]
  %v52 = vld [vmem:[%s1 + $0x48] sm:$0xf]
  %v53 = vld [vmem:[%s1 + $0x4c] sm:$0xf]
  %v54 = vld [vmem:[%s1 + $0x50] sm:$0xf]
  %v55 = vld [vmem:[%s1 + $0x54] sm:$0xf]
  %v56 = vld [vmem:[%s1 + $0x58] sm:$0xf]
  %v57 = vld [vmem:[%s1 + $0x5c] sm:$0xf]
  %v58 = vld [vmem:[%s1 + $0x60] sm:$0xf]
  %v59 = vld [vmem:[%s1 + $0x64] sm:$0xf]
  %v60 = vld [vmem:[%s1 + $0x68] sm:$0xf]
  %v61 = vld [vmem:[%s1 + $0x6c] sm:$0xf]
  %v62 = vld [vmem:[%s1 + $0x70] sm:$0xf]
  %v63 = vld [vmem:[%s1 + $0x74] sm:$0xf]
  %v64 = vld [vmem:[%s1 + $0x78] sm:$0xf]
  %v65 = vld [vmem:[%s1 + $0x7c] sm:$0xf]
  %v66 = vld [vmem:[%s1 + $0x80] sm:$0xf]
  %v67 = vld [vmem:[%s1 + $0x84] sm:$0xf]
  %v68 = vld [vmem:[%s1 + $0x88] sm:$0xf]
  %v69 = vld [vmem:[%s1 + $0x8c] sm:$0xf]
  %v70 = vld [vmem:[%s1 + $0x90] sm:$0xf]
  %v71 = vld [vmem:[%s1 + $0x94] sm:$0xf]
  %v110 = vunpack.c.l.b16 %v34
  %v111 = vunpack.c.l.b16 %v35
  %v112 = vunpack.c.l.b16 %v36
  %v113 = vunpack.c.l.b16 %v37
  %v114 = vunpack.c.l.b16 %v38
  %v115 = vunpack.c.l.b16 %v39
  %v116 = vunpack.c.l.b16 %v40
  %v117 = vunpack.c.l.b16 %v41
  %v118 = vunpack.c.l.b16 %v42
  %v119 = vunpack.c.l.b16 %v43
  %v120 = vunpack.c.l.b16 %v44
  %v121 = vunpack.c.l.b16 %v45
  %v122 = vunpack.c.l.b16 %v46
  %v123 = vunpack.c.l.b16 %v47
  %v124 = vunpack.c.l.b16 %v48
  %v125 = vunpack.c.l.b16 %v49
  %v126 = vunpack.c.l.b16 %v50
  %v127 = vunpack.c.l.b16 %v51
  %v128 = vunpack.c.l.b16 %v52
  %v129 = vunpack.c.l.b16 %v53
  %v130 = vunpack.c.l.b16 %v54
  %v131 = vunpack.c.l.b16 %v55
  %v132 = vunpack.c.l.b16 %v56
  %v133 = vunpack.c.l.b16 %v57
  %v134 = vunpack.c.l.b16 %v58
  %v135 = vunpack.c.l.b16 %v59
  %v136 = vunpack.c.l.b16 %v60
  %v137 = vunpack.c.l.b16 %v61
  %v138 = vunpack.c.l.b16 %v62
  %v139 = vunpack.c.l.b16 %v63
  %v140 = vunpack.c.l.b16 %v64
  %v141 = vunpack.c.l.b16 %v65
  %v142 = vunpack.c.l.b16 %v66
  %v143 = vunpack.c.l.b16 %v67
  %v144 = vunpack.c.l.b16 %v68
  %v145 = vunpack.c.l.b16 %v69
  %v146 = vunpack.c.l.b16 %v70
  %v147 = vunpack.c.l.b16 %v71
  %v148 = vpack.c.b16 %v111, %v110
  %v149 = vpack.c.b16 %v113, %v112
  %v150 = vpack.c.b16 %v115, %v114
  %v151 = vpack.c.b16 %v117, %v116
  %v152 = vpack.c.b16 %v119, %v118
  %v153 = vpack.c.b16 %v121, %v120
  %v154 = vpack.c.b16 %v123, %v122
  %v155 = vpack.c.b16 %v125, %v124
  %v156 = vpack.c.b16 %v127, %v126
  %v157 = vpack.c.b16 %v129, %v128
  %v158 = vpack.c.b16 %v131, %v130
  %v159 = vpack.c.b16 %v133, %v132
  %v160 = vpack.c.b16 %v135, %v134
  %v161 = vpack.c.b16 %v137, %v136
  %v162 = vpack.c.b16 %v139, %v138
  %v163 = vpack.c.b16 %v141, %v140
  %v164 = vpack.c.b16 %v143, %v142
  %v165 = vpack.c.b16 %v145, %v144
  %v166 = vpack.c.b16 %v147, %v146
  %v177 = vunpack.c.l.b16 %v24
  %v178 = vunpack.c.l.b16 %v25
  %v179 = vunpack.c.l.b16 %v26
  %v180 = vunpack.c.l.b16 %v27
  %v181 = vunpack.c.l.b16 %v28
  %v182 = vunpack.c.l.b16 %v29
  %v183 = vunpack.c.l.b16 %v30
  %v184 = vunpack.c.l.b16 %v31
  %v185 = vunpack.c.l.b16 %v32
  %v186 = vunpack.c.l.b16 %v33
  %v187 = vpack.c.b16 %v178, %v177
  %v188 = vpack.c.b16 %v180, %v179
  %v189 = vpack.c.b16 %v182, %v181
  %v190 = vpack.c.b16 %v184, %v183
  %v191 = vpack.c.b16 %v186, %v185
  %vm197 = vcmask 654336
  %v199 = vsel %vm197, %v148, 0
  %v202 = vsel %vm197, %v149, 0
  %v205 = vsel %vm197, %v150, 0
  %v208 = vsel %vm197, %v151, 0
  %v211 = vsel %vm197, %v152, 0
  %v214 = vsel %vm197, %v153, 0
  %v217 = vsel %vm197, %v154, 0
  %v220 = vsel %vm197, %v155, 0
  %v223 = vsel %vm197, %v156, 0
  %v226 = vsel %vm197, %v157, 0
  %v229 = vsel %vm197, %v158, 0
  %v232 = vsel %vm197, %v159, 0
  %v235 = vsel %vm197, %v160, 0
  %v238 = vsel %vm197, %v161, 0
  %v241 = vsel %vm197, %v162, 0
  %v244 = vsel %vm197, %v163, 0
  %v247 = vsel %vm197, %v164, 0
  %v250 = vsel %vm197, %v165, 0
  %v253 = vsel %vm197, %v166, 0
  %255 = vmatprep.subr.bf16.mxu0 0
  %256 = vmatpush1.bf16.msra.mxu0 %v187
  %257 = vmatprep.subr.bf16.mxu0 0
  %258 = vmatpush1.bf16.msra.mxu0 %v188
  %259 = vmatprep.subr.bf16.mxu0 0
  %260 = vmatpush1.bf16.msra.mxu0 %v189
  %261 = vmatprep.subr.bf16.mxu0 0
  %262 = vmatpush1.bf16.msra.mxu0 %v190
  %263 = vmatprep.subr.bf16.mxu0 0
  %264 = vmatpush1.bf16.msra.mxu0 %v191
  %265 = vmatprep.subr.bf16.mxu0 0
  %266 = vmatpush1.bf16.msra.mxu0 0
  %267 = vmatprep.subr.bf16.mxu0 0
  %268 = vmatpush1.bf16.msra.mxu0 0
  %269 = vmatprep.subr.bf16.mxu0 0
  %270 = vmatpush1.bf16.msra.mxu0 0
  %271 = vmatprep.subr.bf16.mxu0 0
  %272 = vmatpush1.bf16.msra.mxu0 0
  %273 = vmatprep.subr.bf16.mxu0 0
  %274 = vmatpush1.bf16.msra.mxu0 0
  %275 = vmatprep.subr.bf16.mxu0 0
  %276 = vmatpush1.bf16.msra.mxu0 0
  %277 = vmatprep.subr.bf16.mxu0 0
  %278 = vmatpush1.bf16.msra.mxu0 0
  %279 = vmatprep.subr.bf16.mxu0 0
  %280 = vmatpush1.bf16.msra.mxu0 0
  %281 = vmatprep.subr.bf16.mxu0 0
  %282 = vmatpush1.bf16.msra.mxu0 0
  %283 = vmatprep.subr.bf16.mxu0 0
  %284 = vmatpush1.bf16.msra.mxu0 0
  %285 = vmatprep.subr.bf16.mxu0 0
  %286 = vmatpush1.bf16.msra.mxu0 0
  %287 = vmatprep.mubr.bf16.mxu0 0
  %288 = vmatmul.mubr.bf16.gmra.mrb[0].mxu0 %v199
  %v289 = vpop.f32.mrb[0].mxu0
  %v290 = vadd.f32 0.0, %v289
  %v291 = vpop.f32.mrb[0].mxu0
  %v292 = vpop.f32.mrb[0].mxu0
  %v293 = vadd.f32 0.0, %v292
  %v294 = vpop.f32.mrb[0].mxu0
  %295 = vmatprep.mubr.bf16.mxu0 0
  %296 = vmatmul.mubr.bf16.gmra.mrb[0].mxu0 %v202
  %v297 = vpop.f32.mrb[0].mxu0
  %v298 = vadd.f32 0.0, %v297
  %v299 = vpop.f32.mrb[0].mxu0
  %v300 = vpop.f32.mrb[0].mxu0
  %v301 = vadd.f32 0.0, %v300
  %v302 = vpop.f32.mrb[0].mxu0
  %303 = vmatprep.mubr.bf16.mxu0 0
  %304 = vmatmul.mubr.bf16.gmra.mrb[0].mxu0 %v205
  %v305 = vpop.f32.mrb[0].mxu0
  %v306 = vadd.f32 0.0, %v305
  %v307 = vpop.f32.mrb[0].mxu0
  %v308 = vpop.f32.mrb[0].mxu0
  %v309 = vadd.f32 0.0, %v308
  %v310 = vpop.f32.mrb[0].mxu0
  %311 = vmatprep.mubr.bf16.mxu0 0
  %312 = vmatmul.mubr.bf16.gmra.mrb[0].mxu0 %v208
  %v313 = vpop.f32.mrb[0].mxu0
  %v314 = vadd.f32 0.0, %v313
  %v315 = vpop.f32.mrb[0].mxu0
  %v316 = vpop.f32.mrb[0].mxu0
  %v317 = vadd.f32 0.0, %v316
  %v318 = vpop.f32.mrb[0].mxu0
  %319 = vmatprep.mubr.bf16.mxu0 0
  %320 = vmatmul.mubr.bf16.gmra.mrb[0].mxu0 %v211
  %v321 = vpop.f32.mrb[0].mxu0
  %v322 = vadd.f32 0.0, %v321
  %v323 = vpop.f32.mrb[0].mxu0
  %v324 = vpop.f32.mrb[0].mxu0
  %v325 = vadd.f32 0.0, %v324
  %v326 = vpop.f32.mrb[0].mxu0
  %327 = vmatprep.mubr.bf16.mxu0 0
  %328 = vmatmul.mubr.bf16.gmra.mrb[0].mxu0 %v214
  %v329 = vpop.f32.mrb[0].mxu0
  %v330 = vadd.f32 0.0, %v329
  %v331 = vpop.f32.mrb[0].mxu0
  %v332 = vpop.f32.mrb[0].mxu0
  %v333 = vadd.f32 0.0, %v332
  %v334 = vpop.f32.mrb[0].mxu0
  %335 = vmatprep.mubr.bf16.mxu0 0
  %336 = vmatmul.mubr.bf16.gmra.mrb[0].mxu0 %v217
  %v337 = vpop.f32.mrb[0].mxu0
  %v338 = vadd.f32 0.0, %v337
  %v339 = vpop.f32.mrb[0].mxu0
  %v340 = vpop.f32.mrb[0].mxu0
  %v341 = vadd.f32 0.0, %v340
  %v342 = vpop.f32.mrb[0].mxu0
  %343 = vmatprep.mubr.bf16.mxu0 0
  %344 = vmatmul.mubr.bf16.gmra.mrb[0].mxu0 %v220
  %v345 = vpop.f32.mrb[0].mxu0
  %v346 = vadd.f32 0.0, %v345
  %v347 = vpop.f32.mrb[0].mxu0
  %v348 = vpop.f32.mrb[0].mxu0
  %v349 = vadd.f32 0.0, %v348
  %v350 = vpop.f32.mrb[0].mxu0
  %351 = vmatprep.mubr.bf16.mxu0 0
  %352 = vmatmul.mubr.bf16.gmra.mrb[0].mxu0 %v223
  %v353 = vpop.f32.mrb[0].mxu0
  %v354 = vadd.f32 0.0, %v353
  %v355 = vpop.f32.mrb[0].mxu0
  %v356 = vpop.f32.mrb[0].mxu0
  %v357 = vadd.f32 0.0, %v356
  %v358 = vpop.f32.mrb[0].mxu0
  %359 = vmatprep.mubr.bf16.mxu0 0
  %360 = vmatmul.mubr.bf16.gmra.mrb[0].mxu0 %v226
  %v361 = vpop.f32.mrb[0].mxu0
  %v362 = vadd.f32 0.0, %v361
  %v363 = vpop.f32.mrb[0].mxu0
  %v364 = vpop.f32.mrb[0].mxu0
  %v365 = vadd.f32 0.0, %v364
  %v366 = vpop.f32.mrb[0].mxu0
  %367 = vmatprep.mubr.bf16.mxu0 0
  %368 = vmatmul.mubr.bf16.gmra.mrb[0].mxu0 %v229
  %v369 = vpop.f32.mrb[0].mxu0
  %v370 = vadd.f32 0.0, %v369
  %v371 = vpop.f32.mrb[0].mxu0
  %v372 = vpop.f32.mrb[0].mxu0
  %v373 = vadd.f32 0.0, %v372
  %v374 = vpop.f32.mrb[0].mxu0
  %375 = vmatprep.mubr.bf16.mxu0 0
  %376 = vmatmul.mubr.bf16.gmra.mrb[0].mxu0 %v232
  %v377 = vpop.f32.mrb[0].mxu0
  %v378 = vadd.f32 0.0, %v377
  %v379 = vpop.f32.mrb[0].mxu0
  %v380 = vpop.f32.mrb[0].mxu0
  %v381 = vadd.f32 0.0, %v380
  %v382 = vpop.f32.mrb[0].mxu0
  %383 = vmatprep.mubr.bf16.mxu0 0
  %384 = vmatmul.mubr.bf16.gmra.mrb[0].mxu0 %v235
  %v385 = vpop.f32.mrb[0].mxu0
  %v386 = vadd.f32 0.0, %v385
  %v387 = vpop.f32.mrb[0].mxu0
  %v388 = vpop.f32.mrb[0].mxu0
  %v389 = vadd.f32 0.0, %v388
  %v390 = vpop.f32.mrb[0].mxu0
  %391 = vmatprep.mubr.bf16.mxu0 0
  %392 = vmatmul.mubr.bf16.gmra.mrb[0].mxu0 %v238
  %v393 = vpop.f32.mrb[0].mxu0
  %v394 = vadd.f32 0.0, %v393
  %v395 = vpop.f32.mrb[0].mxu0
  %v396 = vpop.f32.mrb[0].mxu0
  %v397 = vadd.f32 0.0, %v396
  %v398 = vpop.f32.mrb[0].mxu0
  %399 = vmatprep.mubr.bf16.mxu0 0
  %400 = vmatmul.mubr.bf16.gmra.mrb[0].mxu0 %v241
  %v401 = vpop.f32.mrb[0].mxu0
  %v402 = vadd.f32 0.0, %v401
  %v403 = vpop.f32.mrb[0].mxu0
  %v404 = vpop.f32.mrb[0].mxu0
  %v405 = vadd.f32 0.0, %v404
  %v406 = vpop.f32.mrb[0].mxu0
  %407 = vmatprep.mubr.bf16.mxu0 0
  %408 = vmatmul.mubr.bf16.gmra.mrb[0].mxu0 %v244
  %v409 = vpop.f32.mrb[0].mxu0
  %v410 = vadd.f32 0.0, %v409
  %v411 = vpop.f32.mrb[0].mxu0
  %v412 = vpop.f32.mrb[0].mxu0
  %v413 = vadd.f32 0.0, %v412
  %v414 = vpop.f32.mrb[0].mxu0
  %415 = vmatprep.mubr.bf16.mxu0 0
  %416 = vmatmul.mubr.bf16.gmra.mrb[0].mxu0 %v247
  %v417 = vpop.f32.mrb[0].mxu0
  %v418 = vadd.f32 0.0, %v417
  %v419 = vpop.f32.mrb[0].mxu0
  %v420 = vpop.f32.mrb[0].mxu0
  %v421 = vadd.f32 0.0, %v420
  %v422 = vpop.f32.mrb[0].mxu0
  %423 = vmatprep.mubr.bf16.mxu0 0
  %424 = vmatmul.mubr.bf16.gmra.mrb[0].mxu0 %v250
  %v425 = vpop.f32.mrb[0].mxu0
  %v426 = vadd.f32 0.0, %v425
  %v427 = vpop.f32.mrb[0].mxu0
  %v428 = vpop.f32.mrb[0].mxu0
  %v429 = vadd.f32 0.0, %v428
  %v430 = vpop.f32.mrb[0].mxu0
  %431 = vmatprep.mubr.bf16.mxu0 0
  %432 = vmatmul.mubr.bf16.gmra.mrb[0].mxu0 %v253
  %v433 = vpop.f32.mrb[0].mxu0
  %v434 = vadd.f32 0.0, %v433
  %v435 = vpop.f32.mrb[0].mxu0
  %v436 = vpop.f32.mrb[0].mxu0
  %v437 = vpop.f32.mrb[0].mxu0
  %438 = vdwg.mxu0
  %v439 = vmax.f32 %v290, 0.0
  %v440 = vmax.f32 %v293, 0.0
  %v441 = vmax.f32 %v298, 0.0
  %v442 = vmax.f32 %v301, 0.0
  %v443 = vmax.f32 %v306, 0.0
  %v444 = vmax.f32 %v309, 0.0
  %v445 = vmax.f32 %v314, 0.0
  %v446 = vmax.f32 %v317, 0.0
  %v447 = vmax.f32 %v322, 0.0
  %v448 = vmax.f32 %v325, 0.0
  %v449 = vmax.f32 %v330, 0.0
  %v450 = vmax.f32 %v333, 0.0
  %v451 = vmax.f32 %v338, 0.0
  %v452 = vmax.f32 %v341, 0.0
  %v453 = vmax.f32 %v346, 0.0
  %v454 = vmax.f32 %v349, 0.0
  %v455 = vmax.f32 %v354, 0.0
  %v456 = vmax.f32 %v357, 0.0
  %v457 = vmax.f32 %v362, 0.0
  %v458 = vmax.f32 %v365, 0.0
  %v459 = vmax.f32 %v370, 0.0
  %v460 = vmax.f32 %v373, 0.0
  %v461 = vmax.f32 %v378, 0.0
  %v462 = vmax.f32 %v381, 0.0
  %v463 = vmax.f32 %v386, 0.0
  %v464 = vmax.f32 %v389, 0.0
  %v465 = vmax.f32 %v394, 0.0
  %v466 = vmax.f32 %v397, 0.0
  %v467 = vmax.f32 %v402, 0.0
  %v468 = vmax.f32 %v405, 0.0
  %v469 = vmax.f32 %v410, 0.0
  %v470 = vmax.f32 %v413, 0.0
  %v471 = vmax.f32 %v418, 0.0
  %v472 = vmax.f32 %v421, 0.0
  %v473 = vmax.f32 %v426, 0.0
  %v474 = vmax.f32 %v429, 0.0
  %v475 = vld [vmem:[%s2] sm:$0xff]
  %v476 = vld [vmem:[%s2 + $0x8] sm:$0xf]
  %v477 = vld [vmem:[%s2 + $0xc] sm:$0xff]
  %v478 = vld [vmem:[%s2 + $0x14] sm:$0xf]
  %v479 = vld [vmem:[%s2 + $0x18] sm:$0xff]
  %v480 = vld [vmem:[%s2 + $0x20] sm:$0xf]
  %v481 = vld [vmem:[%s2 + $0x24] sm:$0xff]
  %v482 = vld [vmem:[%s2 + $0x2c] sm:$0xf]
  %v483 = vpack.c.bf16 %v440, %v439
  %v484 = vpack.c.bf16 %v442, %v441
  %v485 = vpack.c.bf16 %v444, %v443
  %v486 = vpack.c.bf16 %v446, %v445
  %v487 = vpack.c.bf16 %v448, %v447
  %v488 = vpack.c.bf16 %v450, %v449
  %v489 = vpack.c.bf16 %v452, %v451
  %v490 = vpack.c.bf16 %v454, %v453
  %v491 = vpack.c.bf16 %v456, %v455
  %v492 = vpack.c.bf16 %v458, %v457
  %v493 = vpack.c.bf16 %v460, %v459
  %v494 = vpack.c.bf16 %v462, %v461
  %v495 = vpack.c.bf16 %v464, %v463
  %v496 = vpack.c.bf16 %v466, %v465
  %v497 = vpack.c.bf16 %v468, %v467
  %v498 = vpack.c.bf16 %v470, %v469
  %v499 = vpack.c.bf16 %v472, %v471
  %v500 = vpack.c.bf16 %v474, %v473
  %v501 = vld [vmem:[%s3] sm:$0xff]
  %v502 = vld [vmem:[%s3 + $0x8] sm:$0xff]
  %v503 = vld [vmem:[%s3 + $0x10] sm:$0xff]
  %v504 = vld [vmem:[%s3 + $0x18] sm:$0xff]
  %506 = vset.pattern.permute.xlu0 0
  %507 = vperm.xlu0 %506, %v501
  %v508 = vpop.permute.xlu0 %507
  %511 = vset.pattern.permute.xlu0 0
  %512 = vperm.xlu0 %511, %v502
  %v513 = vpop.permute.xlu0 %512
  %516 = vset.pattern.permute.xlu0 0
  %517 = vperm.xlu0 %516, %v503
  %v518 = vpop.permute.xlu0 %517
  %521 = vset.pattern.permute.xlu0 0
  %522 = vperm.xlu0 %521, %v504
  %v523 = vpop.permute.xlu0 %522
  %v533 = vunpack.c.l.b16 %v475
  %v534 = vunpack.c.h.b16 %v475
  %v535 = vunpack.c.l.b16 %v476
  %v536 = vunpack.c.l.b16 %v477
  %v537 = vunpack.c.h.b16 %v477
  %v538 = vunpack.c.l.b16 %v478
  %v539 = vunpack.c.l.b16 %v479
  %v540 = vunpack.c.h.b16 %v479
  %v541 = vunpack.c.l.b16 %v480
  %v542 = vunpack.c.l.b16 %v481
  %v543 = vunpack.c.h.b16 %v481
  %v544 = vunpack.c.l.b16 %v482
  %v545 = vpack.c.b16 %v536, %v533
  %v546 = vpack.c.b16 %v537, %v534
  %v547 = vpack.c.b16 %v538, %v535
  %v548 = vpack.c.b16 %v542, %v539
  %v549 = vpack.c.b16 %v543, %v540
  %v550 = vpack.c.b16 %v544, %v541
  %vm555 = vcmask 261120
  %v557 = vsel %vm555, %v547, 0
  %v560 = vsel %vm555, %v550, 0
  %562 = vmatprep.subr.bf16.mxu0 0
  %563 = vmatpush1.bf16.msra.mxu0 %v483
  %564 = vmatprep.subr.bf16.mxu0 0
  %565 = vmatpush1.bf16.msra.mxu0 %v484
  %566 = vmatprep.subr.bf16.mxu0 0
  %567 = vmatpush1.bf16.msra.mxu0 %v485
  %568 = vmatprep.subr.bf16.mxu0 0
  %569 = vmatpush1.bf16.msra.mxu0 %v486
  %570 = vmatprep.subr.bf16.mxu0 0
  %571 = vmatpush1.bf16.msra.mxu0 %v487
  %572 = vmatprep.subr.bf16.mxu0 0
  %573 = vmatpush1.bf16.msra.mxu0 %v488
  %574 = vmatprep.subr.bf16.mxu0 0
  %575 = vmatpush1.bf16.msra.mxu0 %v489
  %576 = vmatprep.subr.bf16.mxu0 0
  %577 = vmatpush1.bf16.msra.mxu0 %v490
  %578 = vmatprep.subr.bf16.mxu0 0
  %579 = vmatpush1.bf16.msra.mxu0 %v491
  %580 = vmatprep.subr.bf16.mxu0 0
  %581 = vmatpush1.bf16.msra.mxu0 %v492
  %582 = vmatprep.subr.bf16.mxu0 0
  %583 = vmatpush1.bf16.msra.mxu0 %v493
  %584 = vmatprep.subr.bf16.mxu0 0
  %585 = vmatpush1.bf16.msra.mxu0 %v494
  %586 = vmatprep.subr.bf16.mxu0 0
  %587 = vmatpush1.bf16.msra.mxu0 %v495
  %588 = vmatprep.subr.bf16.mxu0 0
  %589 = vmatpush1.bf16.msra.mxu0 %v496
  %590 = vmatprep.subr.bf16.mxu0 0
  %591 = vmatpush1.bf16.msra.mxu0 %v497
  %592 = vmatprep.subr.bf16.mxu0 0
  %593 = vmatpush1.bf16.msra.mxu0 %v498
  %594 = vmatprep.mubr.bf16.mxu0 %v546
  %595 = vmatmul.mubr.bf16.gmra.mrb[0].mxu0 %v545
  %v596 = vpop.f32.mrb[0].mxu0
  %v597 = vadd.f32 %v508, %v596
  %v598 = vpop.f32.mrb[0].mxu0
  %v599 = vpop.f32.mrb[0].mxu0
  %v600 = vadd.f32 %v513, %v599
  %v601 = vpop.f32.mrb[0].mxu0
  %602 = vmatprep.mubr.bf16.mxu0 %v549
  %603 = vmatmul.mubr.bf16.gmra.mrb[0].mxu0 %v548
  %v604 = vpop.f32.mrb[0].mxu0
  %v605 = vadd.f32 %v518, %v604
  %v606 = vpop.f32.mrb[0].mxu0
  %v607 = vpop.f32.mrb[0].mxu0
  %v608 = vadd.f32 %v523, %v607
  %v609 = vpop.f32.mrb[0].mxu0
  %610 = vdwg.mxu0
  %611 = vmatprep.subr.bf16.mxu0 0
  %612 = vmatpush1.bf16.msra.mxu0 %v499
  %613 = vmatprep.subr.bf16.mxu0 0
  %614 = vmatpush1.bf16.msra.mxu0 %v500
  %615 = vmatprep.subr.bf16.mxu0 0
  %616 = vmatpush1.bf16.msra.mxu0 0
  %617 = vmatprep.subr.bf16.mxu0 0
  %618 = vmatpush1.bf16.msra.mxu0 0
  %619 = vmatprep.subr.bf16.mxu0 0
  %620 = vmatpush1.bf16.msra.mxu0 0
  %621 = vmatprep.subr.bf16.mxu0 0
  %622 = vmatpush1.bf16.msra.mxu0 0
  %623 = vmatprep.subr.bf16.mxu0 0
  %624 = vmatpush1.bf16.msra.mxu0 0
  %625 = vmatprep.subr.bf16.mxu0 0
  %626 = vmatpush1.bf16.msra.mxu0 0
  %627 = vmatprep.subr.bf16.mxu0 0
  %628 = vmatpush1.bf16.msra.mxu0 0
  %629 = vmatprep.subr.bf16.mxu0 0
  %630 = vmatpush1.bf16.msra.mxu0 0
  %631 = vmatprep.subr.bf16.mxu0 0
  %632 = vmatpush1.bf16.msra.mxu0 0
  %633 = vmatprep.subr.bf16.mxu0 0
  %634 = vmatpush1.bf16.msra.mxu0 0
  %635 = vmatprep.subr.bf16.mxu0 0
  %636 = vmatpush1.bf16.msra.mxu0 0
  %637 = vmatprep.subr.bf16.mxu0 0
  %638 = vmatpush1.bf16.msra.mxu0 0
  %639 = vmatprep.subr.bf16.mxu0 0
  %640 = vmatpush1.bf16.msra.mxu0 0
  %641 = vmatprep.subr.bf16.mxu0 0
  %642 = vmatpush1.bf16.msra.mxu0 0
  %643 = vmatprep.mubr.bf16.mxu0 0
  %644 = vmatmul.mubr.bf16.gmra.mrb[0].mxu0 %v557
  %v645 = vpop.f32.mrb[0].mxu0
  %v646 = vadd.f32 %v597, %v645
  %v647 = vpop.f32.mrb[0].mxu0
  %v648 = vpop.f32.mrb[0].mxu0
  %v649 = vadd.f32 %v600, %v648
  %v650 = vpop.f32.mrb[0].mxu0
  %651 = vmatprep.mubr.bf16.mxu0 0
  %652 = vmatmul.mubr.bf16.gmra.mrb[0].mxu0 %v560
  %v653 = vpop.f32.mrb[0].mxu0
  %v654 = vadd.f32 %v605, %v653
  %v655 = vpop.f32.mrb[0].mxu0
  %v656 = vpop.f32.mrb[0].mxu0
  %v657 = vadd.f32 %v608, %v656
  %v658 = vpop.f32.mrb[0].mxu0
  %659 = vdwg.mxu0
  %v660 = vmax.f32 %v646, 0.0
  %v661 = vmax.f32 %v649, 0.0
  %v662 = vmax.f32 %v654, 0.0
  %v663 = vmax.f32 %v657, 0.0
  %v664 = vld [vmem:[%s4] sm:$0xf]
  %v665 = vpack.c.bf16 %v661, %v660
  %v666 = vpack.c.bf16 %v663, %v662
  %v668 = vsel %vm555, %v664, 0
  %670 = vmatprep.subr.bf16.mxu0 0
  %671 = vmatpush1.bf16.msra.mxu0 %v665
  %672 = vmatprep.subr.bf16.mxu0 0
  %673 = vmatpush1.bf16.msra.mxu0 %v666
  %674 = vmatprep.subr.bf16.mxu0 0
  %675 = vmatpush1.bf16.msra.mxu0 0
  %676 = vmatprep.subr.bf16.mxu0 0
  %677 = vmatpush1.bf16.msra.mxu0 0
  %678 = vmatprep.subr.bf16.mxu0 0
  %679 = vmatpush1.bf16.msra.mxu0 0
  %680 = vmatprep.subr.bf16.mxu0 0
  %681 = vmatpush1.bf16.msra.mxu0 0
  %682 = vmatprep.subr.bf16.mxu0 0
  %683 = vmatpush1.bf16.msra.mxu0 0
  %684 = vmatprep.subr.bf16.mxu0 0
  %685 = vmatpush1.bf16.msra.mxu0 0
  %686 = vmatprep.subr.bf16.mxu0 0
  %687 = vmatpush1.bf16.msra.mxu0 0
  %688 = vmatprep.subr.bf16.mxu0 0
  %689 = vmatpush1.bf16.msra.mxu0 0
  %690 = vmatprep.subr.bf16.mxu0 0
  %691 = vmatpush1.bf16.msra.mxu0 0
  %692 = vmatprep.subr.bf16.mxu0 0
  %693 = vmatpush1.bf16.msra.mxu0 0
  %694 = vmatprep.subr.bf16.mxu0 0
  %695 = vmatpush1.bf16.msra.mxu0 0
  %696 = vmatprep.subr.bf16.mxu0 0
  %697 = vmatpush1.bf16.msra.mxu0 0
  %698 = vmatprep.subr.bf16.mxu0 0
  %699 = vmatpush1.bf16.msra.mxu0 0
  %700 = vmatprep.subr.bf16.mxu0 0
  %701 = vmatpush1.bf16.msra.mxu0 0
  %702 = vmatprep.mubr.bf16.mxu0 0
  %703 = vmatmul.mubr.bf16.gmra.mrb[0].mxu0 %v668
  %v704 = vpop.f32.mrb[0].mxu0
  %v705 = vadd.f32 %v434, %v704
  %v706 = vpop.f32.mrb[0].mxu0
  %v707 = vpop.f32.mrb[0].mxu0
  %v708 = vpop.f32.mrb[0].mxu0
  %709 = vdwg.mxu0
  %v710 = vld [vmem:[%s5] sm:$0xff]
  %712 = vset.pattern.permute.xlu0 0
  %713 = vperm.xlu0 %712, %v710
  %v714 = vpop.permute.xlu0 %713
  %v716 = vadd.f32 %v705, %v714
  %v717 = vmax.f32 %v716, 0.0
  %718 = vst.msk [vmem:[%s6] sm:$0xff] %vm555, %v717
  // Predicated region
  $region26: #{hourglass_forward.7} parent=0 // pred_check
    _
  $region27: #{hourglass_forward.7} parent=0 // pred_check_branch
    %720 = sbr.rel (0) target = $region29
  $region28: #{hourglass_forward.7} parent=0 // pred_region
    _
  $region29: #{hourglass_forward.7} parent=0 // pred_fallthru
    _
  // Predicated region
  $region30: #{hourglass_forward.7} parent=0 // pred_check
    _
  $region31: #{hourglass_forward.7} parent=0 // pred_check_branch
    %722 = sbr.rel (0) target = $region33
  $region32: #{hourglass_forward.7} parent=0 // pred_region
    _
  $region33: #{hourglass_forward.7} parent=0 // pred_fallthru
    _

// kernel: hourglass_forward.9
$region0: #{hourglass_forward.9}
  #allocation0 [shape = 'u32[]', space=smem, size = 0x4, offset = 0x4, fixed_abs, tag = 'smem constant byte address 0x4 - core index']
  #allocation1 [shape = 'u32[144,128]{1,0:T(1,128)}', space=vmem, size = 0x12000, scoped, tag = 'internal scratch']
  %s0 = inlined_call_operand.vmem [shape: f32[32,16], index: 0, kind: input, shape index: {}]
  %s1 = inlined_call_operand.vmem [shape: f32[2,4], index: 1, kind: input, shape index: {}]
  %s2 = inlined_call_operand.vmem [shape: f32[2,16,2], index: 2, kind: input, shape index: {}]
  %s3 = inlined_call_operand.vmem [shape: f32[2,32,4], index: 3, kind: input, shape index: {}]
  %s4 = inlined_call_operand.vmem [shape: f32[2,32,4], index: 4, kind: output, shape index: {}]
  %s5 = sld [smem:[#allocation0]]
  $region49: #{hourglass_forward.9} parent=0
    _
  %s7 = ssub.s32 1, %s5
  %s8 = scalar_select 0, %s7, %s5
  loop: start=0, step=1, limit=4
  $region2: #{hourglass_forward.9} parent=0 // loop_pre_header
    _
  $region3: #{hourglass_forward.9} parent=0 // loop_header
    %s10 = sphi 0, %s14
    %p11 = scmp.ge.s32.totalorder %s10, 4
    %s18 = sphi 0, %s18
    %s20 = sphi 0, %s18
    %s21 = sphi 0, %s20
    %s35 = sphi 0, %s21
    %s39 = sphi 0, %s39
    %s41 = sphi 0, %s39
    %s42 = sphi 0, %s41
    %s56 = sphi 0, %s42
    %s62 = sphi 0, %s64
    %s65 = sphi 0, %s62
    %s66 = sphi 0, %s65
    %s82 = sphi 0, %s66
    %s88 = sphi 0, %s90
    %s91 = sphi 0, %s88
    %s92 = sphi 0, %s91
    %s108 = sphi 0, %s92
    %s114 = sphi 0, %s116
    %s117 = sphi 0, %s114
    %s118 = sphi 0, %s117
    %s134 = sphi 0, %s118
  $region4: #{hourglass_forward.9} parent=0 // loop_header_branch
    %13 = sbr.rel (%p11) target = $region8
  $region5: #{hourglass_forward.9} parent=0 // loop_body
    %s15 = ssub.s32 %s10, 1
    %s16 = ssub.s32 %s10, 2
    %s17 = sadd.s32 %s10, 1
    %s19 = sadd.s32 %s18, 1
    %p22 = scmp.eq.s32.totalorder %s10, 1
    %p23 = scmp.ne.s32.totalorder %s18, %s20
    %p24 = scmp.eq.s32.totalorder %s10, 0
    %p25 = por %p23, %p24
    %p26 = scmp.ne.s32.totalorder %s18, %s20
    %p27 = scmp.eq.s32.totalorder %s15, 1
    %p28 = por %p26, %p27
    %p29 = scmp.ne.s32.totalorder %s20, %s21
    %p30 = scmp.eq.s32.totalorder %s15, 0
    %p31 = por %p29, %p30
    %p32 = scmp.ne.s32.totalorder %s20, %s21
    %p33 = scmp.eq.s32.totalorder %s16, 1
    %p34 = por %p32, %p33
    %p36 = scmp.ne.s32.totalorder %s21, %s35
    %p37 = scmp.eq.s32.totalorder %s16, 0
    %p38 = por %p36, %p37
    %s40 = sadd.s32 %s39, 1
    %p43 = scmp.eq.s32.totalorder %s10, 1
    %p44 = scmp.ne.s32.totalorder %s39, %s41
    %p45 = scmp.eq.s32.totalorder %s10, 0
    %p46 = por %p44, %p45
    %p47 = scmp.ne.s32.totalorder %s39, %s41
    %p48 = scmp.eq.s32.totalorder %s15, 1
    %p49 = por %p47, %p48
    %p50 = scmp.ne.s32.totalorder %s41, %s42
    %p51 = scmp.eq.s32.totalorder %s15, 0
    %p52 = por %p50, %p51
    %p53 = scmp.ne.s32.totalorder %s41, %s42
    %p54 = scmp.eq.s32.totalorder %s16, 1
    %p55 = por %p53, %p54
    %p57 = scmp.ne.s32.totalorder %s42, %s56
    %p58 = scmp.eq.s32.totalorder %s16, 0
    %p59 = por %p57, %p58
    %s60 = ssub.s32 %s10, %s17
    %p61 = scmp.eq.s32.totalorder %s60, 0
    %s63 = sadd.s32 %s62, 1
    %s64 = scalar_select %p61, %s62, %s63
    %p67 = pneg %p61
    %p68 = scmp.eq.s32.totalorder %s10, 1
    %p69 = por %p67, %p68
    %p70 = scmp.ne.s32.totalorder %s62, %s65
    %p71 = scmp.eq.s32.totalorder %s10, 0
    %p72 = por %p70, %p71
    %p73 = scmp.ne.s32.totalorder %s62, %s65
    %p74 = scmp.eq.s32.totalorder %s15, 1
    %p75 = por %p73, %p74
    %p76 = scmp.ne.s32.totalorder %s65, %s66
    %p77 = scmp.eq.s32.totalorder %s15, 0
    %p78 = por %p76, %p77
    %p79 = scmp.ne.s32.totalorder %s65, %s66
    %p80 = scmp.eq.s32.totalorder %s16, 1
    %p81 = por %p79, %p80
    %p83 = scmp.ne.s32.totalorder %s66, %s82
    %p84 = scmp.eq.s32.totalorder %s16, 0
    %p85 = por %p83, %p84
    %s86 = ssub.s32 %s10, %s17
    %p87 = scmp.eq.s32.totalorder %s86, 0
    %s89 = sadd.s32 %s88, 1
    %s90 = scalar_select %p87, %s88, %s89
    %p93 = pneg %p87
    %p94 = scmp.eq.s32.totalorder %s10, 1
    %p95 = por %p93, %p94
    %p96 = scmp.ne.s32.totalorder %s88, %s91
    %p97 = scmp.eq.s32.totalorder %s10, 0
    %p98 = por %p96, %p97
    %p99 = scmp.ne.s32.totalorder %s88, %s91
    %p100 = scmp.eq.s32.totalorder %s15, 1
    %p101 = por %p99, %p100
    %p102 = scmp.ne.s32.totalorder %s91, %s92
    %p103 = scmp.eq.s32.totalorder %s15, 0
    %p104 = por %p102, %p103
    %p105 = scmp.ne.s32.totalorder %s91, %s92
    %p106 = scmp.eq.s32.totalorder %s16, 1
    %p107 = por %p105, %p106
    %p109 = scmp.ne.s32.totalorder %s92, %s108
    %p110 = scmp.eq.s32.totalorder %s16, 0
    %p111 = por %p109, %p110
    %s112 = ssub.s32 %s10, %s17
    %p113 = scmp.eq.s32.totalorder %s112, 0
    %s115 = sadd.s32 %s114, 1
    %s116 = scalar_select %p113, %s114, %s115
    %p119 = pneg %p113
    %p120 = scmp.eq.s32.totalorder %s10, 1
    %p121 = por %p119, %p120
    %p122 = scmp.ne.s32.totalorder %s114, %s117
    %p123 = scmp.eq.s32.totalorder %s10, 0
    %p124 = por %p122, %p123
    %p125 = scmp.ne.s32.totalorder %s114, %s117
    %p126 = scmp.eq.s32.totalorder %s15, 1
    %p127 = por %p125, %p126
    %p128 = scmp.ne.s32.totalorder %s117, %s118
    %p129 = scmp.eq.s32.totalorder %s15, 0
    %p130 = por %p128, %p129
    %p131 = scmp.ne.s32.totalorder %s117, %s118
    %p132 = scmp.eq.s32.totalorder %s16, 1
    %p133 = por %p131, %p132
    %p135 = scmp.ne.s32.totalorder %s118, %s134
    %p136 = scmp.eq.s32.totalorder %s16, 0
    %p137 = por %p135, %p136
    %p138 = scmp.le.s32.totalorder 1, %s10
    %p139 = scmp.lt.s32.totalorder %s10, 3
    %p140 = pnand %p138, %p139
    %p141 = pneg %p140
    // Predicated region
    $region9: #{hourglass_forward.9} parent=5 // pred_check
      _
    $region10: #{hourglass_forward.9} parent=5 // pred_check_branch
      %143 = sbr.rel (%p140) target = $region12
    $region11: #{hourglass_forward.9} parent=5 // pred_region
      %s144 = ssub.s32 %s10, 1
      // Predicated region
      $region13: #{hourglass_forward.9} parent=11 // pred_check
        %p145 = pneg %p31
      $region14: #{hourglass_forward.9} parent=11 // pred_check_branch
        %147 = sbr.rel (%p145) target = $region16
      $region15: #{hourglass_forward.9} parent=11 // pred_region
        _
      $region16: #{hourglass_forward.9} parent=11 // pred_fallthru
        _
      // Predicated region
      $region17: #{hourglass_forward.9} parent=11 // pred_check
        %p148 = pneg %p52
      $region18: #{hourglass_forward.9} parent=11 // pred_check_branch
        %150 = sbr.rel (%p148) target = $region20
      $region19: #{hourglass_forward.9} parent=11 // pred_region
        _
      $region20: #{hourglass_forward.9} parent=11 // pred_fallthru
        _
    $region12: #{hourglass_forward.9} parent=5 // pred_fallthru
      _
    %p151 = scmp.lt.s32.totalorder %s10, 2
    // Predicated region
    $region21: #{hourglass_forward.9} parent=5 // pred_check
      %p152 = pneg %p151
    $region22: #{hourglass_forward.9} parent=5 // pred_check_branch
      %154 = sbr.rel (%p152) target = $region24
    $region23: #{hourglass_forward.9} parent=5 // pred_region
      // Predicated region
      $region25: #{hourglass_forward.9} parent=23 // pred_check
        %p155 = pneg %p72
      $region26: #{hourglass_forward.9} parent=23 // pred_check_branch
        %157 = sbr.rel (%p155) target = $region28
      $region27: #{hourglass_forward.9} parent=23 // pred_region
        %p158 = scmp.lt.s32.totalorder %s10, 1
        %s159 = scalar_select %p158, %s10, 1
        %s160 = smul.addr %s159, 2
        %s161 = smul.addr %s160, 8
        %s162 = scalar_lea.vmem %s2, %s161
      $region28: #{hourglass_forward.9} parent=23 // pred_fallthru
        _
      // Predicated region
      $region29: #{hourglass_forward.9} parent=23 // pred_check
        %p163 = pneg %p98
      $region30: #{hourglass_forward.9} parent=23 // pred_check_branch
        %165 = sbr.rel (%p163) target = $region32
      $region31: #{hourglass_forward.9} parent=23 // pred_region
        %p166 = scmp.lt.s32.totalorder %s10, 1
        %s167 = scalar_select %p166, %s10, 1
        %s168 = smul.addr %s167, 4
        %s169 = smul.addr %s168, 8
        %s170 = scalar_lea.vmem %s3, %s169
      $region32: #{hourglass_forward.9} parent=23 // pred_fallthru
        _
    $region24: #{hourglass_forward.9} parent=5 // pred_fallthru
      _
    %p171 = scmp.le.s32.totalorder 1, %s10
    %p172 = scmp.lt.s32.totalorder %s10, 3
    %p173 = pnand %p171, %p172
    %p174 = pneg %p173
    // Predicated region
    $region33: #{hourglass_forward.9} parent=5 // pred_check
      _
    $region34: #{hourglass_forward.9} parent=5 // pred_check_branch
      %176 = sbr.rel (%p173) target = $region36
    $region35: #{hourglass_forward.9} parent=5 // pred_region
      %s177 = ssub.s32 %s10, 1
      %p178 = pneg %p31
      %p179 = pneg %p28
      %p180 = pneg %p52
      %p181 = pneg %p49
      %p182 = scmp.lt.s32.totalorder %s15, 1
      %s183 = scalar_select %p182, %s15, 1
      %s184 = smul.addr %s183, 2
      %s185 = smul.addr %s184, 8
      %s186 = scalar_lea.vmem %s2, %s185
      %p187 = pneg %p78
      %p188 = pneg %p75
      %p189 = scmp.lt.s32.totalorder %s15, 1
      %s190 = scalar_select %p189, %s15, 1
      %s191 = smul.addr %s190, 4
      %s192 = smul.addr %s191, 8
      %s193 = scalar_lea.vmem %s3, %s192
      %p194 = pneg %p104
      %p195 = pneg %p101
      %p196 = pneg %p130
      %p197 = pneg %p127
      %p198 = scmp.lt.s32.totalorder %s15, 1
      %s199 = scalar_select %p198, %s15, 1
      %s200 = smul.addr %s199, 4
      %s201 = smul.addr %s200, 8
      %s202 = scalar_lea.vmem %s4, %s201
      %p203 = scmp.lt.s32.totalorder %s15, 1
      %s204 = scalar_select %p203, %s15, 1
      %s205 = smul.addr %s204, 2
      %s206 = smul.addr %s205, 8
      %s207 = scalar_lea.vmem %s2, %s206
      %p208 = scmp.lt.s32.totalorder %s15, 1
      %s209 = scalar_select %p208, %s15, 1
      %s210 = smul.addr %s209, 4
      %s211 = smul.addr %s210, 8
      %s212 = scalar_lea.vmem %s3, %s211
      %p213 = scmp.lt.s32.totalorder %s15, 1
      %s214 = scalar_select %p213, %s15, 1
      %s215 = smul.addr %s214, 4
      %s216 = smul.addr %s215, 8
      %s217 = scalar_lea.vmem %s4, %s216
      %v218 = vld [vmem:[%s207] sm:$0xff]
      %v219 = vld [vmem:[%s207 + $0x8] sm:$0xff]
      %v220 = vld [vmem:[%s1] sm:$0x3]
      %vm221 = vcmask 15360
      %v223 = vsel %vm221, %v218, 0
      %v226 = vsel %vm221, %v219, 0
      %vm228 = vcmask 1041408
      %v230 = vsel %vm228, %v220, 0
      %232 = vmatprep.subr.mxu0 0.0
      %233 = vmatpush1.msra.mxu0 %v230
      %234 = vmatprep.subr.mxu0 0.0
      %235 = vmatpush1.msra.mxu0 0.0
      %236 = vmatprep.subr.mxu0 0.0
      %237 = vmatpush1.msra.mxu0 0.0
      %238 = vmatprep.subr.mxu0 0.0
      %239 = vmatpush1.msra.mxu0 0.0
      %240 = vmatprep.subr.mxu0 0.0
      %241 = vmatpush1.msra.mxu0 0.0
      %242 = vmatprep.subr.mxu0 0.0
      %243 = vmatpush1.msra.mxu0 0.0
      %244 = vmatprep.subr.mxu0 0.0
      %245 = vmatpush1.msra.mxu0 0.0
      %246 = vmatprep.subr.mxu0 0.0
      %247 = vmatpush1.msra.mxu0 0.0
      %248 = vmatprep.subr.mxu0 0.0
      %249 = vmatpush1.msra.mxu0 0.0
      %250 = vmatprep.subr.mxu0 0.0
      %251 = vmatpush1.msra.mxu0 0.0
      %252 = vmatprep.subr.mxu0 0.0
      %253 = vmatpush1.msra.mxu0 0.0
      %254 = vmatprep.subr.mxu0 0.0
      %255 = vmatpush1.msra.mxu0 0.0
      %256 = vmatprep.subr.mxu0 0.0
      %257 = vmatpush1.msra.mxu0 0.0
      %258 = vmatprep.subr.mxu0 0.0
      %259 = vmatpush1.msra.mxu0 0.0
      %260 = vmatprep.subr.mxu0 0.0
      %261 = vmatpush1.msra.mxu0 0.0
      %262 = vmatprep.subr.mxu0 0.0
      %263 = vmatpush1.msra.mxu0 0.0
      %264 = vmatprep.subr.mxu0 0.0
      %265 = vmatpush1.msra.mxu0 0.0
      %266 = vmatprep.subr.mxu0 0.0
      %267 = vmatpush1.msra.mxu0 0.0
      %268 = vmatprep.subr.mxu0 0.0
      %269 = vmatpush1.msra.mxu0 0.0
      %270 = vmatprep.subr.mxu0 0.0
      %271 = vmatpush1.msra.mxu0 0.0
      %272 = vmatprep.subr.mxu0 0.0
      %273 = vmatpush1.msra.mxu0 0.0
      %274 = vmatprep.subr.mxu0 0.0
      %275 = vmatpush1.msra.mxu0 0.0
      %276 = vmatprep.subr.mxu0 0.0
      %277 = vmatpush1.msra.mxu0 0.0
      %278 = vmatprep.subr.mxu0 0.0
      %279 = vmatpush1.msra.mxu0 0.0
      %280 = vmatprep.subr.mxu0 0.0
      %281 = vmatpush1.msra.mxu0 0.0
      %282 = vmatprep.subr.mxu0 0.0
      %283 = vmatpush1.msra.mxu0 0.0
      %284 = vmatprep.subr.mxu0 0.0
      %285 = vmatpush1.msra.mxu0 0.0
      %286 = vmatprep.subr.mxu0 0.0
      %287 = vmatpush1.msra.mxu0 0.0
      %288 = vmatprep.subr.mxu0 0.0
      %289 = vmatpush1.msra.mxu0 0.0
      %290 = vmatprep.subr.mxu0 0.0
      %291 = vmatpush1.msra.mxu0 0.0
      %292 = vmatprep.subr.mxu0 0.0
      %293 = vmatpush1.msra.mxu0 0.0
      %294 = vmatprep.subr.mxu0 0.0
      %295 = vmatpush1.msra.mxu0 0.0
      %296 = vmatprep.mubr.f32.mxu0 0.0
      %297 = vmatmul.mubr.f32.gmra.mrb[0].mxu0 %v223
      %v298 = vpop.f32.mrb[0].mxu0
      %v299 = vadd.f32 0.0, %v298
      %v300 = vpop.f32.mrb[0].mxu0
      %301 = vmatprep.mubr.f32.mxu0 0.0
      %302 = vmatmul.mubr.f32.gmra.mrb[0].mxu0 %v226
      %v303 = vpop.f32.mrb[0].mxu0
      %v304 = vadd.f32 0.0, %v303
      %v305 = vpop.f32.mrb[0].mxu0
      %306 = vdwg.mxu0
      %v307 = vld [vmem:[%s0] sm:$0xff]
      %v308 = vld [vmem:[%s0 + $0x8] sm:$0xff]
      %v309 = vld [vmem:[%s0 + $0x10] sm:$0xff]
      %v310 = vld [vmem:[%s0 + $0x18] sm:$0xff]
      %v311 = vld [vmem:[%s212] sm:$0xff]
      %v312 = vld [vmem:[%s212 + $0x8] sm:$0xff]
      %v313 = vld [vmem:[%s212 + $0x10] sm:$0xff]
      %v314 = vld [vmem:[%s212 + $0x18] sm:$0xff]
      %vm315 = vcmask 130048
      %v317 = vsel %vm315, %v307, 0
      %v320 = vsel %vm315, %v308, 0
      %v323 = vsel %vm315, %v309, 0
      %v326 = vsel %vm315, %v310, 0
      %328 = vmatprep.subr.mxu0 0.0
      %329 = vmatpush1.msra.mxu0 %v299
      %330 = vmatprep.subr.mxu0 0.0
      %331 = vmatpush1.msra.mxu0 %v304
      %332 = vmatprep.subr.mxu0 0.0
      %333 = vmatpush1.msra.mxu0 0.0
      %334 = vmatprep.subr.mxu0 0.0
      %335 = vmatpush1.msra.mxu0 0.0
      %336 = vmatprep.subr.mxu0 0.0
      %337 = vmatpush1.msra.mxu0 0.0
      %338 = vmatprep.subr.mxu0 0.0
      %339 = vmatpush1.msra.mxu0 0.0
      %340 = vmatprep.subr.mxu0 0.0
      %341 = vmatpush1.msra.mxu0 0.0
      %342 = vmatprep.subr.mxu0 0.0
      %343 = vmatpush1.msra.mxu0 0.0
      %344 = vmatprep.subr.mxu0 0.0
      %345 = vmatpush1.msra.mxu0 0.0
      %346 = vmatprep.subr.mxu0 0.0
      %347 = vmatpush1.msra.mxu0 0.0
      %348 = vmatprep.subr.mxu0 0.0
      %349 = vmatpush1.msra.mxu0 0.0
      %350 = vmatprep.subr.mxu0 0.0
      %351 = vmatpush1.msra.mxu0 0.0
      %352 = vmatprep.subr.mxu0 0.0
      %353 = vmatpush1.msra.mxu0 0.0
      %354 = vmatprep.subr.mxu0 0.0
      %355 = vmatpush1.msra.mxu0 0.0
      %356 = vmatprep.subr.mxu0 0.0
      %357 = vmatpush1.msra.mxu0 0.0
      %358 = vmatprep.subr.mxu0 0.0
      %359 = vmatpush1.msra.mxu0 0.0
      %360 = vmatprep.subr.mxu0 0.0
      %361 = vmatpush1.msra.mxu0 0.0
      %362 = vmatprep.subr.mxu0 0.0
      %363 = vmatpush1.msra.mxu0 0.0
      %364 = vmatprep.subr.mxu0 0.0
      %365 = vmatpush1.msra.mxu0 0.0
      %366 = vmatprep.subr.mxu0 0.0
      %367 = vmatpush1.msra.mxu0 0.0
      %368 = vmatprep.subr.mxu0 0.0
      %369 = vmatpush1.msra.mxu0 0.0
      %370 = vmatprep.subr.mxu0 0.0
      %371 = vmatpush1.msra.mxu0 0.0
      %372 = vmatprep.subr.mxu0 0.0
      %373 = vmatpush1.msra.mxu0 0.0
      %374 = vmatprep.subr.mxu0 0.0
      %375 = vmatpush1.msra.mxu0 0.0
      %376 = vmatprep.subr.mxu0 0.0
      %377 = vmatpush1.msra.mxu0 0.0
      %378 = vmatprep.subr.mxu0 0.0
      %379 = vmatpush1.msra.mxu0 0.0
      %380 = vmatprep.subr.mxu0 0.0
      %381 = vmatpush1.msra.mxu0 0.0
      %382 = vmatprep.subr.mxu0 0.0
      %383 = vmatpush1.msra.mxu0 0.0
      %384 = vmatprep.subr.mxu0 0.0
      %385 = vmatpush1.msra.mxu0 0.0
      %386 = vmatprep.subr.mxu0 0.0
      %387 = vmatpush1.msra.mxu0 0.0
      %388 = vmatprep.subr.mxu0 0.0
      %389 = vmatpush1.msra.mxu0 0.0
      %390 = vmatprep.subr.mxu0 0.0
      %391 = vmatpush1.msra.mxu0 0.0
      %392 = vmatprep.mubr.f32.mxu0 0.0
      %393 = vmatmul.mubr.f32.gmra.mrb[0].mxu0 %v317
      %v394 = vpop.f32.mrb[0].mxu0
      %v395 = vadd.f32 %v311, %v394
      %v396 = vpop.f32.mrb[0].mxu0
      %397 = vmatprep.mubr.f32.mxu0 0.0
      %398 = vmatmul.mubr.f32.gmra.mrb[0].mxu0 %v320
      %v399 = vpop.f32.mrb[0].mxu0
      %v400 = vadd.f32 %v312, %v399
      %v401 = vpop.f32.mrb[0].mxu0
      %402 = vmatprep.mubr.f32.mxu0 0.0
      %403 = vmatmul.mubr.f32.gmra.mrb[0].mxu0 %v323
      %v404 = vpop.f32.mrb[0].mxu0
      %v405 = vadd.f32 %v313, %v404
      %v406 = vpop.f32.mrb[0].mxu0
      %407 = vmatprep.mubr.f32.mxu0 0.0
      %408 = vmatmul.mubr.f32.gmra.mrb[0].mxu0 %v326
      %v409 = vpop.f32.mrb[0].mxu0
      %v410 = vadd.f32 %v314, %v409
      %v411 = vpop.f32.mrb[0].mxu0
      %412 = vdwg.mxu0
      %vm413 = vcmask 31744
      %414 = vst.msk [vmem:[%s217] sm:$0xff] %vm413, %v395
      %415 = vst.msk [vmem:[%s217 + $0x8] sm:$0xff] %vm413, %v400
      %416 = vst.msk [vmem:[%s217 + $0x10] sm:$0xff] %vm413, %v405
      %417 = vst.msk [vmem:[%s217 + $0x18] sm:$0xff] %vm413, %v410
      %p418 = scmp.lt.s32.totalorder %s15, 1
      %s419 = scalar_select %p418, %s15, 1
      %s420 = smul.addr %s419, 4
      %s421 = smul.addr %s420, 8
      %s422 = scalar_lea.vmem %s4, %s421
      // Predicated region
      $region37: #{hourglass_forward.9} parent=35 // pred_check
        %p423 = pneg %p127
      $region38: #{hourglass_forward.9} parent=35 // pred_check_branch
        %425 = sbr.rel (%p423) target = $region40
      $region39: #{hourglass_forward.9} parent=35 // pred_region
        _
      $region40: #{hourglass_forward.9} parent=35 // pred_fallthru
        _
    $region36: #{hourglass_forward.9} parent=5 // pred_fallthru
      _
    %p426 = scmp.le.s32.totalorder 2, %s10
    // Predicated region
    $region41: #{hourglass_forward.9} parent=5 // pred_check
      %p427 = pneg %p426
    $region42: #{hourglass_forward.9} parent=5 // pred_check_branch
      %429 = sbr.rel (%p427) target = $region44
    $region43: #{hourglass_forward.9} parent=5 // pred_region
      %s430 = ssub.s32 %s10, 2
      // Predicated region
      $region45: #{hourglass_forward.9} parent=43 // pred_check
        %p431 = pneg %p133
      $region46: #{hourglass_forward.9} parent=43 // pred_check_branch
        %433 = sbr.rel (%p431) target = $region48
      $region47: #{hourglass_forward.9} parent=43 // pred_region
        %p434 = scmp.lt.s32.totalorder %s16, 1
        %s435 = scalar_select %p434, %s16, 1
        %s436 = smul.addr %s435, 4
        %s437 = smul.addr %s436, 8
        %s438 = scalar_lea.vmem %s4, %s437
      $region48: #{hourglass_forward.9} parent=43 // pred_fallthru
        _
    $region44: #{hourglass_forward.9} parent=5 // pred_fallthru
      _
  $region6: #{hourglass_forward.9} parent=0 // loop_footer
    %s14 = sadd.s32 1, %s10
  $region7: #{hourglass_forward.9} parent=0 // loop_footer_branch
    %9 = sbr.rel target = $region3
  $region8: #{hourglass_forward.9} parent=0 // loop_exit
    _

// kernel: hourglass_forward.10
$region0: #{hourglass_forward.10}
  #allocation0 [shape = 'u32[]', space=smem, size = 0x4, offset = 0x4, fixed_abs, tag = 'smem constant byte address 0x4 - core index']
  #allocation1 [shape = 'u32[144,128]{1,0:T(1,128)}', space=vmem, size = 0x12000, scoped, tag = 'internal scratch']
  %s0 = inlined_call_operand.vmem [shape: f32[64,32], index: 0, kind: input, shape index: {}]
  %s1 = inlined_call_operand.vmem [shape: f32[4,8], index: 1, kind: input, shape index: {}]
  %s2 = inlined_call_operand.vmem [shape: f32[2,32,4], index: 2, kind: input, shape index: {}]
  %s3 = inlined_call_operand.vmem [shape: f32[2,64,8], index: 3, kind: input, shape index: {}]
  %s4 = inlined_call_operand.vmem [shape: f32[2,64,8], index: 4, kind: output, shape index: {}]
  %s5 = sld [smem:[#allocation0]]
  $region49: #{hourglass_forward.10} parent=0
    _
  %s7 = ssub.s32 1, %s5
  %s8 = scalar_select 0, %s7, %s5
  loop: start=0, step=1, limit=4
  $region2: #{hourglass_forward.10} parent=0 // loop_pre_header
    _
  $region3: #{hourglass_forward.10} parent=0 // loop_header
    %s10 = sphi 0, %s14
    %p11 = scmp.ge.s32.totalorder %s10, 4
    %s18 = sphi 0, %s18
    %s20 = sphi 0, %s18
    %s21 = sphi 0, %s20
    %s35 = sphi 0, %s21
    %s39 = sphi 0, %s39
    %s41 = sphi 0, %s39
    %s42 = sphi 0, %s41
    %s56 = sphi 0, %s42
    %s62 = sphi 0, %s64
    %s65 = sphi 0, %s62
    %s66 = sphi 0, %s65
    %s82 = sphi 0, %s66
    %s88 = sphi 0, %s90
    %s91 = sphi 0, %s88
    %s92 = sphi 0, %s91
    %s108 = sphi 0, %s92
    %s114 = sphi 0, %s116
    %s117 = sphi 0, %s114
    %s118 = sphi 0, %s117
    %s134 = sphi 0, %s118
  $region4: #{hourglass_forward.10} parent=0 // loop_header_branch
    %13 = sbr.rel (%p11) target = $region8
  $region5: #{hourglass_forward.10} parent=0 // loop_body
    %s15 = ssub.s32 %s10, 1
    %s16 = ssub.s32 %s10, 2
    %s17 = sadd.s32 %s10, 1
    %s19 = sadd.s32 %s18, 1
    %p22 = scmp.eq.s32.totalorder %s10, 1
    %p23 = scmp.ne.s32.totalorder %s18, %s20
    %p24 = scmp.eq.s32.totalorder %s10, 0
    %p25 = por %p23, %p24
    %p26 = scmp.ne.s32.totalorder %s18, %s20
    %p27 = scmp.eq.s32.totalorder %s15, 1
    %p28 = por %p26, %p27
    %p29 = scmp.ne.s32.totalorder %s20, %s21
    %p30 = scmp.eq.s32.totalorder %s15, 0
    %p31 = por %p29, %p30
    %p32 = scmp.ne.s32.totalorder %s20, %s21
    %p33 = scmp.eq.s32.totalorder %s16, 1
    %p34 = por %p32, %p33
    %p36 = scmp.ne.s32.totalorder %s21, %s35
    %p37 = scmp.eq.s32.totalorder %s16, 0
    %p38 = por %p36, %p37
    %s40 = sadd.s32 %s39, 1
    %p43 = scmp.eq.s32.totalorder %s10, 1
    %p44 = scmp.ne.s32.totalorder %s39, %s41
    %p45 = scmp.eq.s32.totalorder %s10, 0
    %p46 = por %p44, %p45
    %p47 = scmp.ne.s32.totalorder %s39, %s41
    %p48 = scmp.eq.s32.totalorder %s15, 1
    %p49 = por %p47, %p48
    %p50 = scmp.ne.s32.totalorder %s41, %s42
    %p51 = scmp.eq.s32.totalorder %s15, 0
    %p52 = por %p50, %p51
    %p53 = scmp.ne.s32.totalorder %s41, %s42
    %p54 = scmp.eq.s32.totalorder %s16, 1
    %p55 = por %p53, %p54
    %p57 = scmp.ne.s32.totalorder %s42, %s56
    %p58 = scmp.eq.s32.totalorder %s16, 0
    %p59 = por %p57, %p58
    %s60 = ssub.s32 %s10, %s17
    %p61 = scmp.eq.s32.totalorder %s60, 0
    %s63 = sadd.s32 %s62, 1
    %s64 = scalar_select %p61, %s62, %s63
    %p67 = pneg %p61
    %p68 = scmp.eq.s32.totalorder %s10, 1
    %p69 = por %p67, %p68
    %p70 = scmp.ne.s32.totalorder %s62, %s65
    %p71 = scmp.eq.s32.totalorder %s10, 0
    %p72 = por %p70, %p71
    %p73 = scmp.ne.s32.totalorder %s62, %s65
    %p74 = scmp.eq.s32.totalorder %s15, 1
    %p75 = por %p73, %p74
    %p76 = scmp.ne.s32.totalorder %s65, %s66
    %p77 = scmp.eq.s32.totalorder %s15, 0
    %p78 = por %p76, %p77
    %p79 = scmp.ne.s32.totalorder %s65, %s66
    %p80 = scmp.eq.s32.totalorder %s16, 1
    %p81 = por %p79, %p80
    %p83 = scmp.ne.s32.totalorder %s66, %s82
    %p84 = scmp.eq.s32.totalorder %s16, 0
    %p85 = por %p83, %p84
    %s86 = ssub.s32 %s10, %s17
    %p87 = scmp.eq.s32.totalorder %s86, 0
    %s89 = sadd.s32 %s88, 1
    %s90 = scalar_select %p87, %s88, %s89
    %p93 = pneg %p87
    %p94 = scmp.eq.s32.totalorder %s10, 1
    %p95 = por %p93, %p94
    %p96 = scmp.ne.s32.totalorder %s88, %s91
    %p97 = scmp.eq.s32.totalorder %s10, 0
    %p98 = por %p96, %p97
    %p99 = scmp.ne.s32.totalorder %s88, %s91
    %p100 = scmp.eq.s32.totalorder %s15, 1
    %p101 = por %p99, %p100
    %p102 = scmp.ne.s32.totalorder %s91, %s92
    %p103 = scmp.eq.s32.totalorder %s15, 0
    %p104 = por %p102, %p103
    %p105 = scmp.ne.s32.totalorder %s91, %s92
    %p106 = scmp.eq.s32.totalorder %s16, 1
    %p107 = por %p105, %p106
    %p109 = scmp.ne.s32.totalorder %s92, %s108
    %p110 = scmp.eq.s32.totalorder %s16, 0
    %p111 = por %p109, %p110
    %s112 = ssub.s32 %s10, %s17
    %p113 = scmp.eq.s32.totalorder %s112, 0
    %s115 = sadd.s32 %s114, 1
    %s116 = scalar_select %p113, %s114, %s115
    %p119 = pneg %p113
    %p120 = scmp.eq.s32.totalorder %s10, 1
    %p121 = por %p119, %p120
    %p122 = scmp.ne.s32.totalorder %s114, %s117
    %p123 = scmp.eq.s32.totalorder %s10, 0
    %p124 = por %p122, %p123
    %p125 = scmp.ne.s32.totalorder %s114, %s117
    %p126 = scmp.eq.s32.totalorder %s15, 1
    %p127 = por %p125, %p126
    %p128 = scmp.ne.s32.totalorder %s117, %s118
    %p129 = scmp.eq.s32.totalorder %s15, 0
    %p130 = por %p128, %p129
    %p131 = scmp.ne.s32.totalorder %s117, %s118
    %p132 = scmp.eq.s32.totalorder %s16, 1
    %p133 = por %p131, %p132
    %p135 = scmp.ne.s32.totalorder %s118, %s134
    %p136 = scmp.eq.s32.totalorder %s16, 0
    %p137 = por %p135, %p136
    %p138 = scmp.le.s32.totalorder 1, %s10
    %p139 = scmp.lt.s32.totalorder %s10, 3
    %p140 = pnand %p138, %p139
    %p141 = pneg %p140
    // Predicated region
    $region9: #{hourglass_forward.10} parent=5 // pred_check
      _
    $region10: #{hourglass_forward.10} parent=5 // pred_check_branch
      %143 = sbr.rel (%p140) target = $region12
    $region11: #{hourglass_forward.10} parent=5 // pred_region
      %s144 = ssub.s32 %s10, 1
      // Predicated region
      $region13: #{hourglass_forward.10} parent=11 // pred_check
        %p145 = pneg %p31
      $region14: #{hourglass_forward.10} parent=11 // pred_check_branch
        %147 = sbr.rel (%p145) target = $region16
      $region15: #{hourglass_forward.10} parent=11 // pred_region
        _
      $region16: #{hourglass_forward.10} parent=11 // pred_fallthru
        _
      // Predicated region
      $region17: #{hourglass_forward.10} parent=11 // pred_check
        %p148 = pneg %p52
      $region18: #{hourglass_forward.10} parent=11 // pred_check_branch
        %150 = sbr.rel (%p148) target = $region20
      $region19: #{hourglass_forward.10} parent=11 // pred_region
        _
      $region20: #{hourglass_forward.10} parent=11 // pred_fallthru
        _
    $region12: #{hourglass_forward.10} parent=5 // pred_fallthru
      _
    %p151 = scmp.lt.s32.totalorder %s10, 2
    // Predicated region
    $region21: #{hourglass_forward.10} parent=5 // pred_check
      %p152 = pneg %p151
    $region22: #{hourglass_forward.10} parent=5 // pred_check_branch
      %154 = sbr.rel (%p152) target = $region24
    $region23: #{hourglass_forward.10} parent=5 // pred_region
      // Predicated region
      $region25: #{hourglass_forward.10} parent=23 // pred_check
        %p155 = pneg %p72
      $region26: #{hourglass_forward.10} parent=23 // pred_check_branch
        %157 = sbr.rel (%p155) target = $region28
      $region27: #{hourglass_forward.10} parent=23 // pred_region
        %p158 = scmp.lt.s32.totalorder %s10, 1
        %s159 = scalar_select %p158, %s10, 1
        %s160 = smul.addr %s159, 4
        %s161 = smul.addr %s160, 8
        %s162 = scalar_lea.vmem %s2, %s161
      $region28: #{hourglass_forward.10} parent=23 // pred_fallthru
        _
      // Predicated region
      $region29: #{hourglass_forward.10} parent=23 // pred_check
        %p163 = pneg %p98
      $region30: #{hourglass_forward.10} parent=23 // pred_check_branch
        %165 = sbr.rel (%p163) target = $region32
      $region31: #{hourglass_forward.10} parent=23 // pred_region
        %p166 = scmp.lt.s32.totalorder %s10, 1
        %s167 = scalar_select %p166, %s10, 1
        %s168 = smul.addr %s167, 8
        %s169 = smul.addr %s168, 8
        %s170 = scalar_lea.vmem %s3, %s169
      $region32: #{hourglass_forward.10} parent=23 // pred_fallthru
        _
    $region24: #{hourglass_forward.10} parent=5 // pred_fallthru
      _
    %p171 = scmp.le.s32.totalorder 1, %s10
    %p172 = scmp.lt.s32.totalorder %s10, 3
    %p173 = pnand %p171, %p172
    %p174 = pneg %p173
    // Predicated region
    $region33: #{hourglass_forward.10} parent=5 // pred_check
      _
    $region34: #{hourglass_forward.10} parent=5 // pred_check_branch
      %176 = sbr.rel (%p173) target = $region36
    $region35: #{hourglass_forward.10} parent=5 // pred_region
      %s177 = ssub.s32 %s10, 1
      %p178 = pneg %p31
      %p179 = pneg %p28
      %p180 = pneg %p52
      %p181 = pneg %p49
      %p182 = scmp.lt.s32.totalorder %s15, 1
      %s183 = scalar_select %p182, %s15, 1
      %s184 = smul.addr %s183, 4
      %s185 = smul.addr %s184, 8
      %s186 = scalar_lea.vmem %s2, %s185
      %p187 = pneg %p78
      %p188 = pneg %p75
      %p189 = scmp.lt.s32.totalorder %s15, 1
      %s190 = scalar_select %p189, %s15, 1
      %s191 = smul.addr %s190, 8
      %s192 = smul.addr %s191, 8
      %s193 = scalar_lea.vmem %s3, %s192
      %p194 = pneg %p104
      %p195 = pneg %p101
      %p196 = pneg %p130
      %p197 = pneg %p127
      %p198 = scmp.lt.s32.totalorder %s15, 1
      %s199 = scalar_select %p198, %s15, 1
      %s200 = smul.addr %s199, 8
      %s201 = smul.addr %s200, 8
      %s202 = scalar_lea.vmem %s4, %s201
      %p203 = scmp.lt.s32.totalorder %s15, 1
      %s204 = scalar_select %p203, %s15, 1
      %s205 = smul.addr %s204, 4
      %s206 = smul.addr %s205, 8
      %s207 = scalar_lea.vmem %s2, %s206
      %p208 = scmp.lt.s32.totalorder %s15, 1
      %s209 = scalar_select %p208, %s15, 1
      %s210 = smul.addr %s209, 8
      %s211 = smul.addr %s210, 8
      %s212 = scalar_lea.vmem %s3, %s211
      %p213 = scmp.lt.s32.totalorder %s15, 1
      %s214 = scalar_select %p213, %s15, 1
      %s215 = smul.addr %s214, 8
      %s216 = smul.addr %s215, 8
      %s217 = scalar_lea.vmem %s4, %s216
      %v218 = vld [vmem:[%s207] sm:$0xff]
      %v219 = vld [vmem:[%s207 + $0x8] sm:$0xff]
      %v220 = vld [vmem:[%s207 + $0x10] sm:$0xff]
      %v221 = vld [vmem:[%s207 + $0x18] sm:$0xff]
      %v222 = vld [vmem:[%s1] sm:$0xf]
      %vm223 = vcmask 31744
      %v225 = vsel %vm223, %v218, 0
      %v228 = vsel %vm223, %v219, 0
      %v231 = vsel %vm223, %v220, 0
      %v234 = vsel %vm223, %v221, 0
      %vm236 = vcmask 1043456
      %v238 = vsel %vm236, %v222, 0
      %240 = vmatprep.subr.mxu0 0.0
      %241 = vmatpush1.msra.mxu0 %v238
      %242 = vmatprep.subr.mxu0 0.0
      %243 = vmatpush1.msra.mxu0 0.0
      %244 = vmatprep.subr.mxu0 0.0
      %245 = vmatpush1.msra.mxu0 0.0
      %246 = vmatprep.subr.mxu0 0.0
      %247 = vmatpush1.msra.mxu0 0.0
      %248 = vmatprep.subr.mxu0 0.0
      %249 = vmatpush1.msra.mxu0 0.0
      %250 = vmatprep.subr.mxu0 0.0
      %251 = vmatpush1.msra.mxu0 0.0
      %252 = vmatprep.subr.mxu0 0.0
      %253 = vmatpush1.msra.mxu0 0.0
      %254 = vmatprep.subr.mxu0 0.0
      %255 = vmatpush1.msra.mxu0 0.0
      %256 = vmatprep.subr.mxu0 0.0
      %257 = vmatpush1.msra.mxu0 0.0
      %258 = vmatprep.subr.mxu0 0.0
      %259 = vmatpush1.msra.mxu0 0.0
      %260 = vmatprep.subr.mxu0 0.0
      %261 = vmatpush1.msra.mxu0 0.0
      %262 = vmatprep.subr.mxu0 0.0
      %263 = vmatpush1.msra.mxu0 0.0
      %264 = vmatprep.subr.mxu0 0.0
      %265 = vmatpush1.msra.mxu0 0.0
      %266 = vmatprep.subr.mxu0 0.0
      %267 = vmatpush1.msra.mxu0 0.0
      %268 = vmatprep.subr.mxu0 0.0
      %269 = vmatpush1.msra.mxu0 0.0
      %270 = vmatprep.subr.mxu0 0.0
      %271 = vmatpush1.msra.mxu0 0.0
      %272 = vmatprep.subr.mxu0 0.0
      %273 = vmatpush1.msra.mxu0 0.0
      %274 = vmatprep.subr.mxu0 0.0
      %275 = vmatpush1.msra.mxu0 0.0
      %276 = vmatprep.subr.mxu0 0.0
      %277 = vmatpush1.msra.mxu0 0.0
      %278 = vmatprep.subr.mxu0 0.0
      %279 = vmatpush1.msra.mxu0 0.0
      %280 = vmatprep.subr.mxu0 0.0
      %281 = vmatpush1.msra.mxu0 0.0
      %282 = vmatprep.subr.mxu0 0.0
      %283 = vmatpush1.msra.mxu0 0.0
      %284 = vmatprep.subr.mxu0 0.0
      %285 = vmatpush1.msra.mxu0 0.0
      %286 = vmatprep.subr.mxu0 0.0
      %287 = vmatpush1.msra.mxu0 0.0
      %288 = vmatprep.subr.mxu0 0.0
      %289 = vmatpush1.msra.mxu0 0.0
      %290 = vmatprep.subr.mxu0 0.0
      %291 = vmatpush1.msra.mxu0 0.0
      %292 = vmatprep.subr.mxu0 0.0
      %293 = vmatpush1.msra.mxu0 0.0
      %294 = vmatprep.subr.mxu0 0.0
      %295 = vmatpush1.msra.mxu0 0.0
      %296 = vmatprep.subr.mxu0 0.0
      %297 = vmatpush1.msra.mxu0 0.0
      %298 = vmatprep.subr.mxu0 0.0
      %299 = vmatpush1.msra.mxu0 0.0
      %300 = vmatprep.subr.mxu0 0.0
      %301 = vmatpush1.msra.mxu0 0.0
      %302 = vmatprep.subr.mxu0 0.0
      %303 = vmatpush1.msra.mxu0 0.0
      %304 = vmatprep.mubr.f32.mxu0 0.0
      %305 = vmatmul.mubr.f32.gmra.mrb[0].mxu0 %v225
      %v306 = vpop.f32.mrb[0].mxu0
      %v307 = vadd.f32 0.0, %v306
      %v308 = vpop.f32.mrb[0].mxu0
      %309 = vmatprep.mubr.f32.mxu0 0.0
      %310 = vmatmul.mubr.f32.gmra.mrb[0].mxu0 %v228
      %v311 = vpop.f32.mrb[0].mxu0
      %v312 = vadd.f32 0.0, %v311
      %v313 = vpop.f32.mrb[0].mxu0
      %314 = vmatprep.mubr.f32.mxu0 0.0
      %315 = vmatmul.mubr.f32.gmra.mrb[0].mxu0 %v231
      %v316 = vpop.f32.mrb[0].mxu0
      %v317 = vadd.f32 0.0, %v316
      %v318 = vpop.f32.mrb[0].mxu0
      %319 = vmatprep.mubr.f32.mxu0 0.0
      %320 = vmatmul.mubr.f32.gmra.mrb[0].mxu0 %v234
      %v321 = vpop.f32.mrb[0].mxu0
      %v322 = vadd.f32 0.0, %v321
      %v323 = vpop.f32.mrb[0].mxu0
      %324 = vdwg.mxu0
      %v325 = vld [vmem:[%s0] sm:$0xff]
      %v326 = vld [vmem:[%s0 + $0x8] sm:$0xff]
      %v327 = vld [vmem:[%s0 + $0x10] sm:$0xff]
      %v328 = vld [vmem:[%s0 + $0x18] sm:$0xff]
      %v329 = vld [vmem:[%s0 + $0x20] sm:$0xff]
      %v330 = vld [vmem:[%s0 + $0x28] sm:$0xff]
      %v331 = vld [vmem:[%s0 + $0x30] sm:$0xff]
      %v332 = vld [vmem:[%s0 + $0x38] sm:$0xff]
      %v333 = vld [vmem:[%s212] sm:$0xff]
      %v334 = vld [vmem:[%s212 + $0x8] sm:$0xff]
      %v335 = vld [vmem:[%s212 + $0x10] sm:$0xff]
      %v336 = vld [vmem:[%s212 + $0x18] sm:$0xff]
      %v337 = vld [vmem:[%s212 + $0x20] sm:$0xff]
      %v338 = vld [vmem:[%s212 + $0x28] sm:$0xff]
      %v339 = vld [vmem:[%s212 + $0x30] sm:$0xff]
      %v340 = vld [vmem:[%s212 + $0x38] sm:$0xff]
      %vm341 = vcmask 261120
      %v343 = vsel %vm341, %v325, 0
      %v346 = vsel %vm341, %v326, 0
      %v349 = vsel %vm341, %v327, 0
      %v352 = vsel %vm341, %v328, 0
      %v355 = vsel %vm341, %v329, 0
      %v358 = vsel %vm341, %v330, 0
      %v361 = vsel %vm341, %v331, 0
      %v364 = vsel %vm341, %v332, 0
      %366 = vmatprep.subr.mxu0 0.0
      %367 = vmatpush1.msra.mxu0 %v307
      %368 = vmatprep.subr.mxu0 0.0
      %369 = vmatpush1.msra.mxu0 %v312
      %370 = vmatprep.subr.mxu0 0.0
      %371 = vmatpush1.msra.mxu0 %v317
      %372 = vmatprep.subr.mxu0 0.0
      %373 = vmatpush1.msra.mxu0 %v322
      %374 = vmatprep.subr.mxu0 0.0
      %375 = vmatpush1.msra.mxu0 0.0
      %376 = vmatprep.subr.mxu0 0.0
      %377 = vmatpush1.msra.mxu0 0.0
      %378 = vmatprep.subr.mxu0 0.0
      %379 = vmatpush1.msra.mxu0 0.0
      %380 = vmatprep.subr.mxu0 0.0
      %381 = vmatpush1.msra.mxu0 0.0
      %382 = vmatprep.subr.mxu0 0.0
      %383 = vmatpush1.msra.mxu0 0.0
      %384 = vmatprep.subr.mxu0 0.0
      %385 = vmatpush1.msra.mxu0 0.0
      %386 = vmatprep.subr.mxu0 0.0
      %387 = vmatpush1.msra.mxu0 0.0
      %388 = vmatprep.subr.mxu0 0.0
      %389 = vmatpush1.msra.mxu0 0.0
      %390 = vmatprep.subr.mxu0 0.0
      %391 = vmatpush1.msra.mxu0 0.0
      %392 = vmatprep.subr.mxu0 0.0
      %393 = vmatpush1.msra.mxu0 0.0
      %394 = vmatprep.subr.mxu0 0.0
      %395 = vmatpush1.msra.mxu0 0.0
      %396 = vmatprep.subr.mxu0 0.0
      %397 = vmatpush1.msra.mxu0 0.0
      %398 = vmatprep.subr.mxu0 0.0
      %399 = vmatpush1.msra.mxu0 0.0
      %400 = vmatprep.subr.mxu0 0.0
      %401 = vmatpush1.msra.mxu0 0.0
      %402 = vmatprep.subr.mxu0 0.0
      %403 = vmatpush1.msra.mxu0 0.0
      %404 = vmatprep.subr.mxu0 0.0
      %405 = vmatpush1.msra.mxu0 0.0
      %406 = vmatprep.subr.mxu0 0.0
      %407 = vmatpush1.msra.mxu0 0.0
      %408 = vmatprep.subr.mxu0 0.0
      %409 = vmatpush1.msra.mxu0 0.0
      %410 = vmatprep.subr.mxu0 0.0
      %411 = vmatpush1.msra.mxu0 0.0
      %412 = vmatprep.subr.mxu0 0.0
      %413 = vmatpush1.msra.mxu0 0.0
      %414 = vmatprep.subr.mxu0 0.0
      %415 = vmatpush1.msra.mxu0 0.0
      %416 = vmatprep.subr.mxu0 0.0
      %417 = vmatpush1.msra.mxu0 0.0
      %418 = vmatprep.subr.mxu0 0.0
      %419 = vmatpush1.msra.mxu0 0.0
      %420 = vmatprep.subr.mxu0 0.0
      %421 = vmatpush1.msra.mxu0 0.0
      %422 = vmatprep.subr.mxu0 0.0
      %423 = vmatpush1.msra.mxu0 0.0
      %424 = vmatprep.subr.mxu0 0.0
      %425 = vmatpush1.msra.mxu0 0.0
      %426 = vmatprep.subr.mxu0 0.0
      %427 = vmatpush1.msra.mxu0 0.0
      %428 = vmatprep.subr.mxu0 0.0
      %429 = vmatpush1.msra.mxu0 0.0
      %430 = vmatprep.mubr.f32.mxu0 0.0
      %431 = vmatmul.mubr.f32.gmra.mrb[0].mxu0 %v343
      %v432 = vpop.f32.mrb[0].mxu0
      %v433 = vadd.f32 %v333, %v432
      %v434 = vpop.f32.mrb[0].mxu0
      %435 = vmatprep.mubr.f32.mxu0 0.0
      %436 = vmatmul.mubr.f32.gmra.mrb[0].mxu0 %v346
      %v437 = vpop.f32.mrb[0].mxu0
      %v438 = vadd.f32 %v334, %v437
      %v439 = vpop.f32.mrb[0].mxu0
      %440 = vmatprep.mubr.f32.mxu0 0.0
      %441 = vmatmul.mubr.f32.gmra.mrb[0].mxu0 %v349
      %v442 = vpop.f32.mrb[0].mxu0
      %v443 = vadd.f32 %v335, %v442
      %v444 = vpop.f32.mrb[0].mxu0
      %445 = vmatprep.mubr.f32.mxu0 0.0
      %446 = vmatmul.mubr.f32.gmra.mrb[0].mxu0 %v352
      %v447 = vpop.f32.mrb[0].mxu0
      %v448 = vadd.f32 %v336, %v447
      %v449 = vpop.f32.mrb[0].mxu0
      %450 = vmatprep.mubr.f32.mxu0 0.0
      %451 = vmatmul.mubr.f32.gmra.mrb[0].mxu0 %v355
      %v452 = vpop.f32.mrb[0].mxu0
      %v453 = vadd.f32 %v337, %v452
      %v454 = vpop.f32.mrb[0].mxu0
      %455 = vmatprep.mubr.f32.mxu0 0.0
      %456 = vmatmul.mubr.f32.gmra.mrb[0].mxu0 %v358
      %v457 = vpop.f32.mrb[0].mxu0
      %v458 = vadd.f32 %v338, %v457
      %v459 = vpop.f32.mrb[0].mxu0
      %460 = vmatprep.mubr.f32.mxu0 0.0
      %461 = vmatmul.mubr.f32.gmra.mrb[0].mxu0 %v361
      %v462 = vpop.f32.mrb[0].mxu0
      %v463 = vadd.f32 %v339, %v462
      %v464 = vpop.f32.mrb[0].mxu0
      %465 = vmatprep.mubr.f32.mxu0 0.0
      %466 = vmatmul.mubr.f32.gmra.mrb[0].mxu0 %v364
      %v467 = vpop.f32.mrb[0].mxu0
      %v468 = vadd.f32 %v340, %v467
      %v469 = vpop.f32.mrb[0].mxu0
      %470 = vdwg.mxu0
      %vm471 = vcmask 64512
      %472 = vst.msk [vmem:[%s217] sm:$0xff] %vm471, %v433
      %473 = vst.msk [vmem:[%s217 + $0x8] sm:$0xff] %vm471, %v438
      %474 = vst.msk [vmem:[%s217 + $0x10] sm:$0xff] %vm471, %v443
      %475 = vst.msk [vmem:[%s217 + $0x18] sm:$0xff] %vm471, %v448
      %476 = vst.msk [vmem:[%s217 + $0x20] sm:$0xff] %vm471, %v453
      %477 = vst.msk [vmem:[%s217 + $0x28] sm:$0xff] %vm471, %v458
      %478 = vst.msk [vmem:[%s217 + $0x30] sm:$0xff] %vm471, %v463
      %479 = vst.msk [vmem:[%s217 + $0x38] sm:$0xff] %vm471, %v468
      %p480 = scmp.lt.s32.totalorder %s15, 1
      %s481 = scalar_select %p480, %s15, 1
      %s482 = smul.addr %s481, 8
      %s483 = smul.addr %s482, 8
      %s484 = scalar_lea.vmem %s4, %s483
      // Predicated region
      $region37: #{hourglass_forward.10} parent=35 // pred_check
        %p485 = pneg %p127
      $region38: #{hourglass_forward.10} parent=35 // pred_check_branch
        %487 = sbr.rel (%p485) target = $region40
      $region39: #{hourglass_forward.10} parent=35 // pred_region
        _
      $region40: #{hourglass_forward.10} parent=35 // pred_fallthru
        _
    $region36: #{hourglass_forward.10} parent=5 // pred_fallthru
      _
    %p488 = scmp.le.s32.totalorder 2, %s10
    // Predicated region
    $region41: #{hourglass_forward.10} parent=5 // pred_check
      %p489 = pneg %p488
    $region42: #{hourglass_forward.10} parent=5 // pred_check_branch
      %491 = sbr.rel (%p489) target = $region44
    $region43: #{hourglass_forward.10} parent=5 // pred_region
      %s492 = ssub.s32 %s10, 2
      // Predicated region
      $region45: #{hourglass_forward.10} parent=43 // pred_check
        %p493 = pneg %p133
      $region46: #{hourglass_forward.10} parent=43 // pred_check_branch
        %495 = sbr.rel (%p493) target = $region48
      $region47: #{hourglass_forward.10} parent=43 // pred_region
        %p496 = scmp.lt.s32.totalorder %s16, 1
        %s497 = scalar_select %p496, %s16, 1
        %s498 = smul.addr %s497, 8
        %s499 = smul.addr %s498, 8
        %s500 = scalar_lea.vmem %s4, %s499
      $region48: #{hourglass_forward.10} parent=43 // pred_fallthru
        _
    $region44: #{hourglass_forward.10} parent=5 // pred_fallthru
      _
  $region6: #{hourglass_forward.10} parent=0 // loop_footer
    %s14 = sadd.s32 1, %s10
  $region7: #{hourglass_forward.10} parent=0 // loop_footer_branch
    %9 = sbr.rel target = $region3
  $region8: #{hourglass_forward.10} parent=0 // loop_exit
    _

// kernel: hourglass_forward.11
$region0: #{hourglass_forward.11}
  #allocation0 [shape = 'u32[]', space=smem, size = 0x4, offset = 0x4, fixed_abs, tag = 'smem constant byte address 0x4 - core index']
  #allocation1 [shape = 'u32[144,128]{1,0:T(1,128)}', space=vmem, size = 0x12000, scoped, tag = 'internal scratch']
  %s0 = inlined_call_operand.vmem [shape: f32[128,64], index: 0, kind: input, shape index: {}]
  %s1 = inlined_call_operand.vmem [shape: f32[8,16], index: 1, kind: input, shape index: {}]
  %s2 = inlined_call_operand.vmem [shape: f32[2,64,8], index: 2, kind: input, shape index: {}]
  %s3 = inlined_call_operand.vmem [shape: f32[2,128,16], index: 3, kind: input, shape index: {}]
  %s4 = inlined_call_operand.vmem [shape: f32[2,128,16], index: 4, kind: output, shape index: {}]
  %s5 = sld [smem:[#allocation0]]
  $region49: #{hourglass_forward.11} parent=0
    _
  %s7 = ssub.s32 1, %s5
  %s8 = scalar_select 0, %s7, %s5
  loop: start=0, step=1, limit=4
  $region2: #{hourglass_forward.11} parent=0 // loop_pre_header
    _
  $region3: #{hourglass_forward.11} parent=0 // loop_header
    %s10 = sphi 0, %s14
    %p11 = scmp.ge.s32.totalorder %s10, 4
    %s18 = sphi 0, %s18
    %s20 = sphi 0, %s18
    %s21 = sphi 0, %s20
    %s35 = sphi 0, %s21
    %s39 = sphi 0, %s39
    %s41 = sphi 0, %s39
    %s42 = sphi 0, %s41
    %s56 = sphi 0, %s42
    %s62 = sphi 0, %s64
    %s65 = sphi 0, %s62
    %s66 = sphi 0, %s65
    %s82 = sphi 0, %s66
    %s88 = sphi 0, %s90
    %s91 = sphi 0, %s88
    %s92 = sphi 0, %s91
    %s108 = sphi 0, %s92
    %s114 = sphi 0, %s116
    %s117 = sphi 0, %s114
    %s118 = sphi 0, %s117
    %s134 = sphi 0, %s118
  $region4: #{hourglass_forward.11} parent=0 // loop_header_branch
    %13 = sbr.rel (%p11) target = $region8
  $region5: #{hourglass_forward.11} parent=0 // loop_body
    %s15 = ssub.s32 %s10, 1
    %s16 = ssub.s32 %s10, 2
    %s17 = sadd.s32 %s10, 1
    %s19 = sadd.s32 %s18, 1
    %p22 = scmp.eq.s32.totalorder %s10, 1
    %p23 = scmp.ne.s32.totalorder %s18, %s20
    %p24 = scmp.eq.s32.totalorder %s10, 0
    %p25 = por %p23, %p24
    %p26 = scmp.ne.s32.totalorder %s18, %s20
    %p27 = scmp.eq.s32.totalorder %s15, 1
    %p28 = por %p26, %p27
    %p29 = scmp.ne.s32.totalorder %s20, %s21
    %p30 = scmp.eq.s32.totalorder %s15, 0
    %p31 = por %p29, %p30
    %p32 = scmp.ne.s32.totalorder %s20, %s21
    %p33 = scmp.eq.s32.totalorder %s16, 1
    %p34 = por %p32, %p33
    %p36 = scmp.ne.s32.totalorder %s21, %s35
    %p37 = scmp.eq.s32.totalorder %s16, 0
    %p38 = por %p36, %p37
    %s40 = sadd.s32 %s39, 1
    %p43 = scmp.eq.s32.totalorder %s10, 1
    %p44 = scmp.ne.s32.totalorder %s39, %s41
    %p45 = scmp.eq.s32.totalorder %s10, 0
    %p46 = por %p44, %p45
    %p47 = scmp.ne.s32.totalorder %s39, %s41
    %p48 = scmp.eq.s32.totalorder %s15, 1
    %p49 = por %p47, %p48
    %p50 = scmp.ne.s32.totalorder %s41, %s42
    %p51 = scmp.eq.s32.totalorder %s15, 0
    %p52 = por %p50, %p51
    %p53 = scmp.ne.s32.totalorder %s41, %s42
    %p54 = scmp.eq.s32.totalorder %s16, 1
    %p55 = por %p53, %p54
    %p57 = scmp.ne.s32.totalorder %s42, %s56
    %p58 = scmp.eq.s32.totalorder %s16, 0
    %p59 = por %p57, %p58
    %s60 = ssub.s32 %s10, %s17
    %p61 = scmp.eq.s32.totalorder %s60, 0
    %s63 = sadd.s32 %s62, 1
    %s64 = scalar_select %p61, %s62, %s63
    %p67 = pneg %p61
    %p68 = scmp.eq.s32.totalorder %s10, 1
    %p69 = por %p67, %p68
    %p70 = scmp.ne.s32.totalorder %s62, %s65
    %p71 = scmp.eq.s32.totalorder %s10, 0
    %p72 = por %p70, %p71
    %p73 = scmp.ne.s32.totalorder %s62, %s65
    %p74 = scmp.eq.s32.totalorder %s15, 1
    %p75 = por %p73, %p74
    %p76 = scmp.ne.s32.totalorder %s65, %s66
    %p77 = scmp.eq.s32.totalorder %s15, 0
    %p78 = por %p76, %p77
    %p79 = scmp.ne.s32.totalorder %s65, %s66
    %p80 = scmp.eq.s32.totalorder %s16, 1
    %p81 = por %p79, %p80
    %p83 = scmp.ne.s32.totalorder %s66, %s82
    %p84 = scmp.eq.s32.totalorder %s16, 0
    %p85 = por %p83, %p84
    %s86 = ssub.s32 %s10, %s17
    %p87 = scmp.eq.s32.totalorder %s86, 0
    %s89 = sadd.s32 %s88, 1
    %s90 = scalar_select %p87, %s88, %s89
    %p93 = pneg %p87
    %p94 = scmp.eq.s32.totalorder %s10, 1
    %p95 = por %p93, %p94
    %p96 = scmp.ne.s32.totalorder %s88, %s91
    %p97 = scmp.eq.s32.totalorder %s10, 0
    %p98 = por %p96, %p97
    %p99 = scmp.ne.s32.totalorder %s88, %s91
    %p100 = scmp.eq.s32.totalorder %s15, 1
    %p101 = por %p99, %p100
    %p102 = scmp.ne.s32.totalorder %s91, %s92
    %p103 = scmp.eq.s32.totalorder %s15, 0
    %p104 = por %p102, %p103
    %p105 = scmp.ne.s32.totalorder %s91, %s92
    %p106 = scmp.eq.s32.totalorder %s16, 1
    %p107 = por %p105, %p106
    %p109 = scmp.ne.s32.totalorder %s92, %s108
    %p110 = scmp.eq.s32.totalorder %s16, 0
    %p111 = por %p109, %p110
    %s112 = ssub.s32 %s10, %s17
    %p113 = scmp.eq.s32.totalorder %s112, 0
    %s115 = sadd.s32 %s114, 1
    %s116 = scalar_select %p113, %s114, %s115
    %p119 = pneg %p113
    %p120 = scmp.eq.s32.totalorder %s10, 1
    %p121 = por %p119, %p120
    %p122 = scmp.ne.s32.totalorder %s114, %s117
    %p123 = scmp.eq.s32.totalorder %s10, 0
    %p124 = por %p122, %p123
    %p125 = scmp.ne.s32.totalorder %s114, %s117
    %p126 = scmp.eq.s32.totalorder %s15, 1
    %p127 = por %p125, %p126
    %p128 = scmp.ne.s32.totalorder %s117, %s118
    %p129 = scmp.eq.s32.totalorder %s15, 0
    %p130 = por %p128, %p129
    %p131 = scmp.ne.s32.totalorder %s117, %s118
    %p132 = scmp.eq.s32.totalorder %s16, 1
    %p133 = por %p131, %p132
    %p135 = scmp.ne.s32.totalorder %s118, %s134
    %p136 = scmp.eq.s32.totalorder %s16, 0
    %p137 = por %p135, %p136
    %p138 = scmp.le.s32.totalorder 1, %s10
    %p139 = scmp.lt.s32.totalorder %s10, 3
    %p140 = pnand %p138, %p139
    %p141 = pneg %p140
    // Predicated region
    $region9: #{hourglass_forward.11} parent=5 // pred_check
      _
    $region10: #{hourglass_forward.11} parent=5 // pred_check_branch
      %143 = sbr.rel (%p140) target = $region12
    $region11: #{hourglass_forward.11} parent=5 // pred_region
      %s144 = ssub.s32 %s10, 1
      // Predicated region
      $region13: #{hourglass_forward.11} parent=11 // pred_check
        %p145 = pneg %p31
      $region14: #{hourglass_forward.11} parent=11 // pred_check_branch
        %147 = sbr.rel (%p145) target = $region16
      $region15: #{hourglass_forward.11} parent=11 // pred_region
        _
      $region16: #{hourglass_forward.11} parent=11 // pred_fallthru
        _
      // Predicated region
      $region17: #{hourglass_forward.11} parent=11 // pred_check
        %p148 = pneg %p52
      $region18: #{hourglass_forward.11} parent=11 // pred_check_branch
        %150 = sbr.rel (%p148) target = $region20
      $region19: #{hourglass_forward.11} parent=11 // pred_region
        _
      $region20: #{hourglass_forward.11} parent=11 // pred_fallthru
        _
    $region12: #{hourglass_forward.11} parent=5 // pred_fallthru
      _
    %p151 = scmp.lt.s32.totalorder %s10, 2
    // Predicated region
    $region21: #{hourglass_forward.11} parent=5 // pred_check
      %p152 = pneg %p151
    $region22: #{hourglass_forward.11} parent=5 // pred_check_branch
      %154 = sbr.rel (%p152) target = $region24
    $region23: #{hourglass_forward.11} parent=5 // pred_region
      // Predicated region
      $region25: #{hourglass_forward.11} parent=23 // pred_check
        %p155 = pneg %p72
      $region26: #{hourglass_forward.11} parent=23 // pred_check_branch
        %157 = sbr.rel (%p155) target = $region28
      $region27: #{hourglass_forward.11} parent=23 // pred_region
        %p158 = scmp.lt.s32.totalorder %s10, 1
        %s159 = scalar_select %p158, %s10, 1
        %s160 = smul.addr %s159, 8
        %s161 = smul.addr %s160, 8
        %s162 = scalar_lea.vmem %s2, %s161
      $region28: #{hourglass_forward.11} parent=23 // pred_fallthru
        _
      // Predicated region
      $region29: #{hourglass_forward.11} parent=23 // pred_check
        %p163 = pneg %p98
      $region30: #{hourglass_forward.11} parent=23 // pred_check_branch
        %165 = sbr.rel (%p163) target = $region32
      $region31: #{hourglass_forward.11} parent=23 // pred_region
        %p166 = scmp.lt.s32.totalorder %s10, 1
        %s167 = scalar_select %p166, %s10, 1
        %s168 = smul.addr %s167, 16
        %s169 = smul.addr %s168, 8
        %s170 = scalar_lea.vmem %s3, %s169
      $region32: #{hourglass_forward.11} parent=23 // pred_fallthru
        _
    $region24: #{hourglass_forward.11} parent=5 // pred_fallthru
      _
    %p171 = scmp.le.s32.totalorder 1, %s10
    %p172 = scmp.lt.s32.totalorder %s10, 3
    %p173 = pnand %p171, %p172
    %p174 = pneg %p173
    // Predicated region
    $region33: #{hourglass_forward.11} parent=5 // pred_check
      _
    $region34: #{hourglass_forward.11} parent=5 // pred_check_branch
      %176 = sbr.rel (%p173) target = $region36
    $region35: #{hourglass_forward.11} parent=5 // pred_region
      %s177 = ssub.s32 %s10, 1
      %p178 = pneg %p31
      %p179 = pneg %p28
      %p180 = pneg %p52
      %p181 = pneg %p49
      %p182 = scmp.lt.s32.totalorder %s15, 1
      %s183 = scalar_select %p182, %s15, 1
      %s184 = smul.addr %s183, 8
      %s185 = smul.addr %s184, 8
      %s186 = scalar_lea.vmem %s2, %s185
      %p187 = pneg %p78
      %p188 = pneg %p75
      %p189 = scmp.lt.s32.totalorder %s15, 1
      %s190 = scalar_select %p189, %s15, 1
      %s191 = smul.addr %s190, 16
      %s192 = smul.addr %s191, 8
      %s193 = scalar_lea.vmem %s3, %s192
      %p194 = pneg %p104
      %p195 = pneg %p101
      %p196 = pneg %p130
      %p197 = pneg %p127
      %p198 = scmp.lt.s32.totalorder %s15, 1
      %s199 = scalar_select %p198, %s15, 1
      %s200 = smul.addr %s199, 16
      %s201 = smul.addr %s200, 8
      %s202 = scalar_lea.vmem %s4, %s201
      %p203 = scmp.lt.s32.totalorder %s15, 1
      %s204 = scalar_select %p203, %s15, 1
      %s205 = smul.addr %s204, 8
      %s206 = smul.addr %s205, 8
      %s207 = scalar_lea.vmem %s2, %s206
      %p208 = scmp.lt.s32.totalorder %s15, 1
      %s209 = scalar_select %p208, %s15, 1
      %s210 = smul.addr %s209, 16
      %s211 = smul.addr %s210, 8
      %s212 = scalar_lea.vmem %s3, %s211
      %p213 = scmp.lt.s32.totalorder %s15, 1
      %s214 = scalar_select %p213, %s15, 1
      %s215 = smul.addr %s214, 16
      %s216 = smul.addr %s215, 8
      %s217 = scalar_lea.vmem %s4, %s216
      %v218 = vld [vmem:[%s207] sm:$0xff]
      %v219 = vld [vmem:[%s207 + $0x8] sm:$0xff]
      %v220 = vld [vmem:[%s207 + $0x10] sm:$0xff]
      %v221 = vld [vmem:[%s207 + $0x18] sm:$0xff]
      %v222 = vld [vmem:[%s207 + $0x20] sm:$0xff]
      %v223 = vld [vmem:[%s207 + $0x28] sm:$0xff]
      %v224 = vld [vmem:[%s207 + $0x30] sm:$0xff]
      %v225 = vld [vmem:[%s207 + $0x38] sm:$0xff]
      %v226 = vld [vmem:[%s1] sm:$0xff]
      %vm227 = vcmask 64512
      %v229 = vsel %vm227, %v218, 0
      %v232 = vsel %vm227, %v219, 0
      %v235 = vsel %vm227, %v220, 0
      %v238 = vsel %vm227, %v221, 0
      %v241 = vsel %vm227, %v222, 0
      %v244 = vsel %vm227, %v223, 0
      %v247 = vsel %vm227, %v224, 0
      %v250 = vsel %vm227, %v225, 0
      %252 = vmatprep.subr.mxu0 0.0
      %253 = vmatpush1.msra.mxu0 %v226
      %254 = vmatprep.subr.mxu0 0.0
      %255 = vmatpush1.msra.mxu0 0.0
      %256 = vmatprep.subr.mxu0 0.0
      %257 = vmatpush1.msra.mxu0 0.0
      %258 = vmatprep.subr.mxu0 0.0
      %259 = vmatpush1.msra.mxu0 0.0
      %260 = vmatprep.subr.mxu0 0.0
      %261 = vmatpush1.msra.mxu0 0.0
      %262 = vmatprep.subr.mxu0 0.0
      %263 = vmatpush1.msra.mxu0 0.0
      %264 = vmatprep.subr.mxu0 0.0
      %265 = vmatpush1.msra.mxu0 0.0
      %266 = vmatprep.subr.mxu0 0.0
      %267 = vmatpush1.msra.mxu0 0.0
      %268 = vmatprep.subr.mxu0 0.0
      %269 = vmatpush1.msra.mxu0 0.0
      %270 = vmatprep.subr.mxu0 0.0
      %271 = vmatpush1.msra.mxu0 0.0
      %272 = vmatprep.subr.mxu0 0.0
      %273 = vmatpush1.msra.mxu0 0.0
      %274 = vmatprep.subr.mxu0 0.0
      %275 = vmatpush1.msra.mxu0 0.0
      %276 = vmatprep.subr.mxu0 0.0
      %277 = vmatpush1.msra.mxu0 0.0
      %278 = vmatprep.subr.mxu0 0.0
      %279 = vmatpush1.msra.mxu0 0.0
      %280 = vmatprep.subr.mxu0 0.0
      %281 = vmatpush1.msra.mxu0 0.0
      %282 = vmatprep.subr.mxu0 0.0
      %283 = vmatpush1.msra.mxu0 0.0
      %284 = vmatprep.subr.mxu0 0.0
      %285 = vmatpush1.msra.mxu0 0.0
      %286 = vmatprep.subr.mxu0 0.0
      %287 = vmatpush1.msra.mxu0 0.0
      %288 = vmatprep.subr.mxu0 0.0
      %289 = vmatpush1.msra.mxu0 0.0
      %290 = vmatprep.subr.mxu0 0.0
      %291 = vmatpush1.msra.mxu0 0.0
      %292 = vmatprep.subr.mxu0 0.0
      %293 = vmatpush1.msra.mxu0 0.0
      %294 = vmatprep.subr.mxu0 0.0
      %295 = vmatpush1.msra.mxu0 0.0
      %296 = vmatprep.subr.mxu0 0.0
      %297 = vmatpush1.msra.mxu0 0.0
      %298 = vmatprep.subr.mxu0 0.0
      %299 = vmatpush1.msra.mxu0 0.0
      %300 = vmatprep.subr.mxu0 0.0
      %301 = vmatpush1.msra.mxu0 0.0
      %302 = vmatprep.subr.mxu0 0.0
      %303 = vmatpush1.msra.mxu0 0.0
      %304 = vmatprep.subr.mxu0 0.0
      %305 = vmatpush1.msra.mxu0 0.0
      %306 = vmatprep.subr.mxu0 0.0
      %307 = vmatpush1.msra.mxu0 0.0
      %308 = vmatprep.subr.mxu0 0.0
      %309 = vmatpush1.msra.mxu0 0.0
      %310 = vmatprep.subr.mxu0 0.0
      %311 = vmatpush1.msra.mxu0 0.0
      %312 = vmatprep.subr.mxu0 0.0
      %313 = vmatpush1.msra.mxu0 0.0
      %314 = vmatprep.subr.mxu0 0.0
      %315 = vmatpush1.msra.mxu0 0.0
      %316 = vmatprep.mubr.f32.mxu0 0.0
      %317 = vmatmul.mubr.f32.gmra.mrb[0].mxu0 %v229
      %v318 = vpop.f32.mrb[0].mxu0
      %v319 = vadd.f32 0.0, %v318
      %v320 = vpop.f32.mrb[0].mxu0
      %321 = vmatprep.mubr.f32.mxu0 0.0
      %322 = vmatmul.mubr.f32.gmra.mrb[0].mxu0 %v232
      %v323 = vpop.f32.mrb[0].mxu0
      %v324 = vadd.f32 0.0, %v323
      %v325 = vpop.f32.mrb[0].mxu0
      %326 = vmatprep.mubr.f32.mxu0 0.0
      %327 = vmatmul.mubr.f32.gmra.mrb[0].mxu0 %v235
      %v328 = vpop.f32.mrb[0].mxu0
      %v329 = vadd.f32 0.0, %v328
      %v330 = vpop.f32.mrb[0].mxu0
      %331 = vmatprep.mubr.f32.mxu0 0.0
      %332 = vmatmul.mubr.f32.gmra.mrb[0].mxu0 %v238
      %v333 = vpop.f32.mrb[0].mxu0
      %v334 = vadd.f32 0.0, %v333
      %v335 = vpop.f32.mrb[0].mxu0
      %336 = vmatprep.mubr.f32.mxu0 0.0
      %337 = vmatmul.mubr.f32.gmra.mrb[0].mxu0 %v241
      %v338 = vpop.f32.mrb[0].mxu0
      %v339 = vadd.f32 0.0, %v338
      %v340 = vpop.f32.mrb[0].mxu0
      %341 = vmatprep.mubr.f32.mxu0 0.0
      %342 = vmatmul.mubr.f32.gmra.mrb[0].mxu0 %v244
      %v343 = vpop.f32.mrb[0].mxu0
      %v344 = vadd.f32 0.0, %v343
      %v345 = vpop.f32.mrb[0].mxu0
      %346 = vmatprep.mubr.f32.mxu0 0.0
      %347 = vmatmul.mubr.f32.gmra.mrb[0].mxu0 %v247
      %v348 = vpop.f32.mrb[0].mxu0
      %v349 = vadd.f32 0.0, %v348
      %v350 = vpop.f32.mrb[0].mxu0
      %351 = vmatprep.mubr.f32.mxu0 0.0
      %352 = vmatmul.mubr.f32.gmra.mrb[0].mxu0 %v250
      %v353 = vpop.f32.mrb[0].mxu0
      %v354 = vadd.f32 0.0, %v353
      %v355 = vpop.f32.mrb[0].mxu0
      %356 = vdwg.mxu0
      %v357 = vld [vmem:[%s0] sm:$0xff]
      %v358 = vld [vmem:[%s0 + $0x8] sm:$0xff]
      %v359 = vld [vmem:[%s0 + $0x10] sm:$0xff]
      %v360 = vld [vmem:[%s0 + $0x18] sm:$0xff]
      %v361 = vld [vmem:[%s0 + $0x20] sm:$0xff]
      %v362 = vld [vmem:[%s0 + $0x28] sm:$0xff]
      %v363 = vld [vmem:[%s0 + $0x30] sm:$0xff]
      %v364 = vld [vmem:[%s0 + $0x38] sm:$0xff]
      %v365 = vld [vmem:[%s0 + $0x40] sm:$0xff]
      %v366 = vld [vmem:[%s0 + $0x48] sm:$0xff]
      %v367 = vld [vmem:[%s0 + $0x50] sm:$0xff]
      %v368 = vld [vmem:[%s0 + $0x58] sm:$0xff]
      %v369 = vld [vmem:[%s0 + $0x60] sm:$0xff]
      %v370 = vld [vmem:[%s0 + $0x68] sm:$0xff]
      %v371 = vld [vmem:[%s0 + $0x70] sm:$0xff]
      %v372 = vld [vmem:[%s0 + $0x78] sm:$0xff]
      %v373 = vld [vmem:[%s212] sm:$0xff]
      %v374 = vld [vmem:[%s212 + $0x8] sm:$0xff]
      %v375 = vld [vmem:[%s212 + $0x10] sm:$0xff]
      %v376 = vld [vmem:[%s212 + $0x18] sm:$0xff]
      %v377 = vld [vmem:[%s212 + $0x20] sm:$0xff]
      %v378 = vld [vmem:[%s212 + $0x28] sm:$0xff]
      %v379 = vld [vmem:[%s212 + $0x30] sm:$0xff]
      %v380 = vld [vmem:[%s212 + $0x38] sm:$0xff]
      %v381 = vld [vmem:[%s212 + $0x40] sm:$0xff]
      %v382 = vld [vmem:[%s212 + $0x48] sm:$0xff]
      %v383 = vld [vmem:[%s212 + $0x50] sm:$0xff]
      %v384 = vld [vmem:[%s212 + $0x58] sm:$0xff]
      %v385 = vld [vmem:[%s212 + $0x60] sm:$0xff]
      %v386 = vld [vmem:[%s212 + $0x68] sm:$0xff]
      %v387 = vld [vmem:[%s212 + $0x70] sm:$0xff]
      %v388 = vld [vmem:[%s212 + $0x78] sm:$0xff]
      %vm389 = vcmask 523264
      %v391 = vsel %vm389, %v357, 0
      %v394 = vsel %vm389, %v358, 0
      %v397 = vsel %vm389, %v359, 0
      %v400 = vsel %vm389, %v360, 0
      %v403 = vsel %vm389, %v361, 0
      %v406 = vsel %vm389, %v362, 0
      %v409 = vsel %vm389, %v363, 0
      %v412 = vsel %vm389, %v364, 0
      %v415 = vsel %vm389, %v365, 0
      %v418 = vsel %vm389, %v366, 0
      %v421 = vsel %vm389, %v367, 0
      %v424 = vsel %vm389, %v368, 0
      %v427 = vsel %vm389, %v369, 0
      %v430 = vsel %vm389, %v370, 0
      %v433 = vsel %vm389, %v371, 0
      %v436 = vsel %vm389, %v372, 0
      %438 = vmatprep.subr.mxu0 0.0
      %439 = vmatpush1.msra.mxu0 %v319
      %440 = vmatprep.subr.mxu0 0.0
      %441 = vmatpush1.msra.mxu0 %v324
      %442 = vmatprep.subr.mxu0 0.0
      %443 = vmatpush1.msra.mxu0 %v329
      %444 = vmatprep.subr.mxu0 0.0
      %445 = vmatpush1.msra.mxu0 %v334
      %446 = vmatprep.subr.mxu0 0.0
      %447 = vmatpush1.msra.mxu0 %v339
      %448 = vmatprep.subr.mxu0 0.0
      %449 = vmatpush1.msra.mxu0 %v344
      %450 = vmatprep.subr.mxu0 0.0
      %451 = vmatpush1.msra.mxu0 %v349
      %452 = vmatprep.subr.mxu0 0.0
      %453 = vmatpush1.msra.mxu0 %v354
      %454 = vmatprep.subr.mxu0 0.0
      %455 = vmatpush1.msra.mxu0 0.0
      %456 = vmatprep.subr.mxu0 0.0
      %457 = vmatpush1.msra.mxu0 0.0
      %458 = vmatprep.subr.mxu0 0.0
      %459 = vmatpush1.msra.mxu0 0.0
      %460 = vmatprep.subr.mxu0 0.0
      %461 = vmatpush1.msra.mxu0 0.0
      %462 = vmatprep.subr.mxu0 0.0
      %463 = vmatpush1.msra.mxu0 0.0
      %464 = vmatprep.subr.mxu0 0.0
      %465 = vmatpush1.msra.mxu0 0.0
      %466 = vmatprep.subr.mxu0 0.0
      %467 = vmatpush1.msra.mxu0 0.0
      %468 = vmatprep.subr.mxu0 0.0
      %469 = vmatpush1.msra.mxu0 0.0
      %470 = vmatprep.subr.mxu0 0.0
      %471 = vmatpush1.msra.mxu0 0.0
      %472 = vmatprep.subr.mxu0 0.0
      %473 = vmatpush1.msra.mxu0 0.0
      %474 = vmatprep.subr.mxu0 0.0
      %475 = vmatpush1.msra.mxu0 0.0
      %476 = vmatprep.subr.mxu0 0.0
      %477 = vmatpush1.msra.mxu0 0.0
      %478 = vmatprep.subr.mxu0 0.0
      %479 = vmatpush1.msra.mxu0 0.0
      %480 = vmatprep.subr.mxu0 0.0
      %481 = vmatpush1.msra.mxu0 0.0
      %482 = vmatprep.subr.mxu0 0.0
      %483 = vmatpush1.msra.mxu0 0.0
      %484 = vmatprep.subr.mxu0 0.0
      %485 = vmatpush1.msra.mxu0 0.0
      %486 = vmatprep.subr.mxu0 0.0
      %487 = vmatpush1.msra.mxu0 0.0
      %488 = vmatprep.subr.mxu0 0.0
      %489 = vmatpush1.msra.mxu0 0.0
      %490 = vmatprep.subr.mxu0 0.0
      %491 = vmatpush1.msra.mxu0 0.0
      %492 = vmatprep.subr.mxu0 0.0
      %493 = vmatpush1.msra.mxu0 0.0
      %494 = vmatprep.subr.mxu0 0.0
      %495 = vmatpush1.msra.mxu0 0.0
      %496 = vmatprep.subr.mxu0 0.0
      %497 = vmatpush1.msra.mxu0 0.0
      %498 = vmatprep.subr.mxu0 0.0
      %499 = vmatpush1.msra.mxu0 0.0
      %500 = vmatprep.subr.mxu0 0.0
      %501 = vmatpush1.msra.mxu0 0.0
      %502 = vmatprep.mubr.f32.mxu0 0.0
      %503 = vmatmul.mubr.f32.gmra.mrb[0].mxu0 %v391
      %v504 = vpop.f32.mrb[0].mxu0
      %v505 = vadd.f32 %v373, %v504
      %v506 = vpop.f32.mrb[0].mxu0
      %507 = vmatprep.mubr.f32.mxu0 0.0
      %508 = vmatmul.mubr.f32.gmra.mrb[0].mxu0 %v394
      %v509 = vpop.f32.mrb[0].mxu0
      %v510 = vadd.f32 %v374, %v509
      %v511 = vpop.f32.mrb[0].mxu0
      %512 = vmatprep.mubr.f32.mxu0 0.0
      %513 = vmatmul.mubr.f32.gmra.mrb[0].mxu0 %v397
      %v514 = vpop.f32.mrb[0].mxu0
      %v515 = vadd.f32 %v375, %v514
      %v516 = vpop.f32.mrb[0].mxu0
      %517 = vmatprep.mubr.f32.mxu0 0.0
      %518 = vmatmul.mubr.f32.gmra.mrb[0].mxu0 %v400
      %v519 = vpop.f32.mrb[0].mxu0
      %v520 = vadd.f32 %v376, %v519
      %v521 = vpop.f32.mrb[0].mxu0
      %522 = vmatprep.mubr.f32.mxu0 0.0
      %523 = vmatmul.mubr.f32.gmra.mrb[0].mxu0 %v403
      %v524 = vpop.f32.mrb[0].mxu0
      %v525 = vadd.f32 %v377, %v524
      %v526 = vpop.f32.mrb[0].mxu0
      %527 = vmatprep.mubr.f32.mxu0 0.0
      %528 = vmatmul.mubr.f32.gmra.mrb[0].mxu0 %v406
      %v529 = vpop.f32.mrb[0].mxu0
      %v530 = vadd.f32 %v378, %v529
      %v531 = vpop.f32.mrb[0].mxu0
      %532 = vmatprep.mubr.f32.mxu0 0.0
      %533 = vmatmul.mubr.f32.gmra.mrb[0].mxu0 %v409
      %v534 = vpop.f32.mrb[0].mxu0
      %v535 = vadd.f32 %v379, %v534
      %v536 = vpop.f32.mrb[0].mxu0
      %537 = vmatprep.mubr.f32.mxu0 0.0
      %538 = vmatmul.mubr.f32.gmra.mrb[0].mxu0 %v412
      %v539 = vpop.f32.mrb[0].mxu0
      %v540 = vadd.f32 %v380, %v539
      %v541 = vpop.f32.mrb[0].mxu0
      %542 = vmatprep.mubr.f32.mxu0 0.0
      %543 = vmatmul.mubr.f32.gmra.mrb[0].mxu0 %v415
      %v544 = vpop.f32.mrb[0].mxu0
      %v545 = vadd.f32 %v381, %v544
      %v546 = vpop.f32.mrb[0].mxu0
      %547 = vmatprep.mubr.f32.mxu0 0.0
      %548 = vmatmul.mubr.f32.gmra.mrb[0].mxu0 %v418
      %v549 = vpop.f32.mrb[0].mxu0
      %v550 = vadd.f32 %v382, %v549
      %v551 = vpop.f32.mrb[0].mxu0
      %552 = vmatprep.mubr.f32.mxu0 0.0
      %553 = vmatmul.mubr.f32.gmra.mrb[0].mxu0 %v421
      %v554 = vpop.f32.mrb[0].mxu0
      %v555 = vadd.f32 %v383, %v554
      %v556 = vpop.f32.mrb[0].mxu0
      %557 = vmatprep.mubr.f32.mxu0 0.0
      %558 = vmatmul.mubr.f32.gmra.mrb[0].mxu0 %v424
      %v559 = vpop.f32.mrb[0].mxu0
      %v560 = vadd.f32 %v384, %v559
      %v561 = vpop.f32.mrb[0].mxu0
      %562 = vmatprep.mubr.f32.mxu0 0.0
      %563 = vmatmul.mubr.f32.gmra.mrb[0].mxu0 %v427
      %v564 = vpop.f32.mrb[0].mxu0
      %v565 = vadd.f32 %v385, %v564
      %v566 = vpop.f32.mrb[0].mxu0
      %567 = vmatprep.mubr.f32.mxu0 0.0
      %568 = vmatmul.mubr.f32.gmra.mrb[0].mxu0 %v430
      %v569 = vpop.f32.mrb[0].mxu0
      %v570 = vadd.f32 %v386, %v569
      %v571 = vpop.f32.mrb[0].mxu0
      %572 = vmatprep.mubr.f32.mxu0 0.0
      %573 = vmatmul.mubr.f32.gmra.mrb[0].mxu0 %v433
      %v574 = vpop.f32.mrb[0].mxu0
      %v575 = vadd.f32 %v387, %v574
      %v576 = vpop.f32.mrb[0].mxu0
      %577 = vmatprep.mubr.f32.mxu0 0.0
      %578 = vmatmul.mubr.f32.gmra.mrb[0].mxu0 %v436
      %v579 = vpop.f32.mrb[0].mxu0
      %v580 = vadd.f32 %v388, %v579
      %v581 = vpop.f32.mrb[0].mxu0
      %582 = vdwg.mxu0
      %vm583 = vcmask 130048
      %584 = vst.msk [vmem:[%s217] sm:$0xff] %vm583, %v505
      %585 = vst.msk [vmem:[%s217 + $0x8] sm:$0xff] %vm583, %v510
      %586 = vst.msk [vmem:[%s217 + $0x10] sm:$0xff] %vm583, %v515
      %587 = vst.msk [vmem:[%s217 + $0x18] sm:$0xff] %vm583, %v520
      %588 = vst.msk [vmem:[%s217 + $0x20] sm:$0xff] %vm583, %v525
      %589 = vst.msk [vmem:[%s217 + $0x28] sm:$0xff] %vm583, %v530
      %590 = vst.msk [vmem:[%s217 + $0x30] sm:$0xff] %vm583, %v535
      %591 = vst.msk [vmem:[%s217 + $0x38] sm:$0xff] %vm583, %v540
      %592 = vst.msk [vmem:[%s217 + $0x40] sm:$0xff] %vm583, %v545
      %593 = vst.msk [vmem:[%s217 + $0x48] sm:$0xff] %vm583, %v550
      %594 = vst.msk [vmem:[%s217 + $0x50] sm:$0xff] %vm583, %v555
      %595 = vst.msk [vmem:[%s217 + $0x58] sm:$0xff] %vm583, %v560
      %596 = vst.msk [vmem:[%s217 + $0x60] sm:$0xff] %vm583, %v565
      %597 = vst.msk [vmem:[%s217 + $0x68] sm:$0xff] %vm583, %v570
      %598 = vst.msk [vmem:[%s217 + $0x70] sm:$0xff] %vm583, %v575
      %599 = vst.msk [vmem:[%s217 + $0x78] sm:$0xff] %vm583, %v580
      %p600 = scmp.lt.s32.totalorder %s15, 1
      %s601 = scalar_select %p600, %s15, 1
      %s602 = smul.addr %s601, 16
      %s603 = smul.addr %s602, 8
      %s604 = scalar_lea.vmem %s4, %s603
      // Predicated region
      $region37: #{hourglass_forward.11} parent=35 // pred_check
        %p605 = pneg %p127
      $region38: #{hourglass_forward.11} parent=35 // pred_check_branch
        %607 = sbr.rel (%p605) target = $region40
      $region39: #{hourglass_forward.11} parent=35 // pred_region
        _
      $region40: #{hourglass_forward.11} parent=35 // pred_fallthru
        _
    $region36: #{hourglass_forward.11} parent=5 // pred_fallthru
      _
    %p608 = scmp.le.s32.totalorder 2, %s10
    // Predicated region
    $region41: #{hourglass_forward.11} parent=5 // pred_check
      %p609 = pneg %p608
    $region42: #{hourglass_forward.11} parent=5 // pred_check_branch
      %611 = sbr.rel (%p609) target = $region44
    $region43: #{hourglass_forward.11} parent=5 // pred_region
      %s612 = ssub.s32 %s10, 2
      // Predicated region
      $region45: #{hourglass_forward.11} parent=43 // pred_check
        %p613 = pneg %p133
      $region46: #{hourglass_forward.11} parent=43 // pred_check_branch
        %615 = sbr.rel (%p613) target = $region48
      $region47: #{hourglass_forward.11} parent=43 // pred_region
        %p616 = scmp.lt.s32.totalorder %s16, 1
        %s617 = scalar_select %p616, %s16, 1
        %s618 = smul.addr %s617, 16
        %s619 = smul.addr %s618, 8
        %s620 = scalar_lea.vmem %s4, %s619
      $region48: #{hourglass_forward.11} parent=43 // pred_fallthru
        _
    $region44: #{hourglass_forward.11} parent=5 // pred_fallthru
      _
  $region6: #{hourglass_forward.11} parent=0 // loop_footer
    %s14 = sadd.s32 1, %s10
  $region7: #{hourglass_forward.11} parent=0 // loop_footer_branch
    %9 = sbr.rel target = $region3
  $region8: #{hourglass_forward.11} parent=0 // loop_exit
    _

// kernel: hourglass_forward.8
$region0: #{hourglass_forward.8}
  #allocation0 [shape = 'u32[]', space=smem, size = 0x4, offset = 0x4, fixed_abs, tag = 'smem constant byte address 0x4 - core index']
  #allocation1 [shape = 'u32[144,128]{1,0:T(1,128)}', space=vmem, size = 0x12000, scoped, tag = 'internal scratch']
  %s0 = inlined_call_operand.vmem [shape: bf16[80,8], index: 0, kind: input, shape index: {}]
  %s1 = inlined_call_operand.vmem [shape: bf16[304,80], index: 1, kind: input, shape index: {}]
  %s2 = inlined_call_operand.vmem [shape: bf16[32,288], index: 2, kind: input, shape index: {}]
  %s3 = inlined_call_operand.vmem [shape: f32[32,1], index: 3, kind: input, shape index: {}]
  %s4 = inlined_call_operand.vmem [shape: bf16[8,32], index: 4, kind: input, shape index: {}]
  %s5 = inlined_call_operand.vmem [shape: f32[8,1], index: 5, kind: input, shape index: {}]
  %s6 = inlined_call_operand.vmem [shape: f32[8,8], index: 6, kind: output, shape index: {}]
  %s7 = sld [smem:[#allocation0]]
  $region34: #{hourglass_forward.8} parent=0
    _
  %s9 = ssub.s32 1, %s7
  %s10 = scalar_select 0, %s9, %s7
  // Predicated region
  $region2: #{hourglass_forward.8} parent=0 // pred_check
    _
  $region3: #{hourglass_forward.8} parent=0 // pred_check_branch
    %12 = sbr.rel (0) target = $region5
  $region4: #{hourglass_forward.8} parent=0 // pred_region
    _
  $region5: #{hourglass_forward.8} parent=0 // pred_fallthru
    _
  // Predicated region
  $region6: #{hourglass_forward.8} parent=0 // pred_check
    _
  $region7: #{hourglass_forward.8} parent=0 // pred_check_branch
    %14 = sbr.rel (0) target = $region9
  $region8: #{hourglass_forward.8} parent=0 // pred_region
    _
  $region9: #{hourglass_forward.8} parent=0 // pred_fallthru
    _
  // Predicated region
  $region10: #{hourglass_forward.8} parent=0 // pred_check
    _
  $region11: #{hourglass_forward.8} parent=0 // pred_check_branch
    %16 = sbr.rel (0) target = $region13
  $region12: #{hourglass_forward.8} parent=0 // pred_region
    _
  $region13: #{hourglass_forward.8} parent=0 // pred_fallthru
    _
  // Predicated region
  $region14: #{hourglass_forward.8} parent=0 // pred_check
    _
  $region15: #{hourglass_forward.8} parent=0 // pred_check_branch
    %18 = sbr.rel (0) target = $region17
  $region16: #{hourglass_forward.8} parent=0 // pred_region
    _
  $region17: #{hourglass_forward.8} parent=0 // pred_fallthru
    _
  // Predicated region
  $region18: #{hourglass_forward.8} parent=0 // pred_check
    _
  $region19: #{hourglass_forward.8} parent=0 // pred_check_branch
    %20 = sbr.rel (0) target = $region21
  $region20: #{hourglass_forward.8} parent=0 // pred_region
    _
  $region21: #{hourglass_forward.8} parent=0 // pred_fallthru
    _
  // Predicated region
  $region22: #{hourglass_forward.8} parent=0 // pred_check
    _
  $region23: #{hourglass_forward.8} parent=0 // pred_check_branch
    %22 = sbr.rel (0) target = $region25
  $region24: #{hourglass_forward.8} parent=0 // pred_region
    _
  $region25: #{hourglass_forward.8} parent=0 // pred_fallthru
    _
  %v24 = vld [vmem:[%s0] sm:$0xf]
  %v25 = vld [vmem:[%s0 + $0x4] sm:$0xf]
  %v26 = vld [vmem:[%s0 + $0x8] sm:$0xf]
  %v27 = vld [vmem:[%s0 + $0xc] sm:$0xf]
  %v28 = vld [vmem:[%s0 + $0x10] sm:$0xf]
  %v29 = vld [vmem:[%s0 + $0x14] sm:$0xf]
  %v30 = vld [vmem:[%s0 + $0x18] sm:$0xf]
  %v31 = vld [vmem:[%s0 + $0x1c] sm:$0xf]
  %v32 = vld [vmem:[%s0 + $0x20] sm:$0xf]
  %v33 = vld [vmem:[%s0 + $0x24] sm:$0xf]
  %v34 = vld [vmem:[%s1] sm:$0xf]
  %v35 = vld [vmem:[%s1 + $0x4] sm:$0xf]
  %v36 = vld [vmem:[%s1 + $0x8] sm:$0xf]
  %v37 = vld [vmem:[%s1 + $0xc] sm:$0xf]
  %v38 = vld [vmem:[%s1 + $0x10] sm:$0xf]
  %v39 = vld [vmem:[%s1 + $0x14] sm:$0xf]
  %v40 = vld [vmem:[%s1 + $0x18] sm:$0xf]
  %v41 = vld [vmem:[%s1 + $0x1c] sm:$0xf]
  %v42 = vld [vmem:[%s1 + $0x20] sm:$0xf]
  %v43 = vld [vmem:[%s1 + $0x24] sm:$0xf]
  %v44 = vld [vmem:[%s1 + $0x28] sm:$0xf]
  %v45 = vld [vmem:[%s1 + $0x2c] sm:$0xf]
  %v46 = vld [vmem:[%s1 + $0x30] sm:$0xf]
  %v47 = vld [vmem:[%s1 + $0x34] sm:$0xf]
  %v48 = vld [vmem:[%s1 + $0x38] sm:$0xf]
  %v49 = vld [vmem:[%s1 + $0x3c] sm:$0xf]
  %v50 = vld [vmem:[%s1 + $0x40] sm:$0xf]
  %v51 = vld [vmem:[%s1 + $0x44] sm:$0xf]
  %v52 = vld [vmem:[%s1 + $0x48] sm:$0xf]
  %v53 = vld [vmem:[%s1 + $0x4c] sm:$0xf]
  %v54 = vld [vmem:[%s1 + $0x50] sm:$0xf]
  %v55 = vld [vmem:[%s1 + $0x54] sm:$0xf]
  %v56 = vld [vmem:[%s1 + $0x58] sm:$0xf]
  %v57 = vld [vmem:[%s1 + $0x5c] sm:$0xf]
  %v58 = vld [vmem:[%s1 + $0x60] sm:$0xf]
  %v59 = vld [vmem:[%s1 + $0x64] sm:$0xf]
  %v60 = vld [vmem:[%s1 + $0x68] sm:$0xf]
  %v61 = vld [vmem:[%s1 + $0x6c] sm:$0xf]
  %v62 = vld [vmem:[%s1 + $0x70] sm:$0xf]
  %v63 = vld [vmem:[%s1 + $0x74] sm:$0xf]
  %v64 = vld [vmem:[%s1 + $0x78] sm:$0xf]
  %v65 = vld [vmem:[%s1 + $0x7c] sm:$0xf]
  %v66 = vld [vmem:[%s1 + $0x80] sm:$0xf]
  %v67 = vld [vmem:[%s1 + $0x84] sm:$0xf]
  %v68 = vld [vmem:[%s1 + $0x88] sm:$0xf]
  %v69 = vld [vmem:[%s1 + $0x8c] sm:$0xf]
  %v70 = vld [vmem:[%s1 + $0x90] sm:$0xf]
  %v71 = vld [vmem:[%s1 + $0x94] sm:$0xf]
  %v110 = vunpack.c.l.b16 %v34
  %v111 = vunpack.c.l.b16 %v35
  %v112 = vunpack.c.l.b16 %v36
  %v113 = vunpack.c.l.b16 %v37
  %v114 = vunpack.c.l.b16 %v38
  %v115 = vunpack.c.l.b16 %v39
  %v116 = vunpack.c.l.b16 %v40
  %v117 = vunpack.c.l.b16 %v41
  %v118 = vunpack.c.l.b16 %v42
  %v119 = vunpack.c.l.b16 %v43
  %v120 = vunpack.c.l.b16 %v44
  %v121 = vunpack.c.l.b16 %v45
  %v122 = vunpack.c.l.b16 %v46
  %v123 = vunpack.c.l.b16 %v47
  %v124 = vunpack.c.l.b16 %v48
  %v125 = vunpack.c.l.b16 %v49
  %v126 = vunpack.c.l.b16 %v50
  %v127 = vunpack.c.l.b16 %v51
  %v128 = vunpack.c.l.b16 %v52
  %v129 = vunpack.c.l.b16 %v53
  %v130 = vunpack.c.l.b16 %v54
  %v131 = vunpack.c.l.b16 %v55
  %v132 = vunpack.c.l.b16 %v56
  %v133 = vunpack.c.l.b16 %v57
  %v134 = vunpack.c.l.b16 %v58
  %v135 = vunpack.c.l.b16 %v59
  %v136 = vunpack.c.l.b16 %v60
  %v137 = vunpack.c.l.b16 %v61
  %v138 = vunpack.c.l.b16 %v62
  %v139 = vunpack.c.l.b16 %v63
  %v140 = vunpack.c.l.b16 %v64
  %v141 = vunpack.c.l.b16 %v65
  %v142 = vunpack.c.l.b16 %v66
  %v143 = vunpack.c.l.b16 %v67
  %v144 = vunpack.c.l.b16 %v68
  %v145 = vunpack.c.l.b16 %v69
  %v146 = vunpack.c.l.b16 %v70
  %v147 = vunpack.c.l.b16 %v71
  %v148 = vpack.c.b16 %v111, %v110
  %v149 = vpack.c.b16 %v113, %v112
  %v150 = vpack.c.b16 %v115, %v114
  %v151 = vpack.c.b16 %v117, %v116
  %v152 = vpack.c.b16 %v119, %v118
  %v153 = vpack.c.b16 %v121, %v120
  %v154 = vpack.c.b16 %v123, %v122
  %v155 = vpack.c.b16 %v125, %v124
  %v156 = vpack.c.b16 %v127, %v126
  %v157 = vpack.c.b16 %v129, %v128
  %v158 = vpack.c.b16 %v131, %v130
  %v159 = vpack.c.b16 %v133, %v132
  %v160 = vpack.c.b16 %v135, %v134
  %v161 = vpack.c.b16 %v137, %v136
  %v162 = vpack.c.b16 %v139, %v138
  %v163 = vpack.c.b16 %v141, %v140
  %v164 = vpack.c.b16 %v143, %v142
  %v165 = vpack.c.b16 %v145, %v144
  %v166 = vpack.c.b16 %v147, %v146
  %v177 = vunpack.c.l.b16 %v24
  %v178 = vunpack.c.l.b16 %v25
  %v179 = vunpack.c.l.b16 %v26
  %v180 = vunpack.c.l.b16 %v27
  %v181 = vunpack.c.l.b16 %v28
  %v182 = vunpack.c.l.b16 %v29
  %v183 = vunpack.c.l.b16 %v30
  %v184 = vunpack.c.l.b16 %v31
  %v185 = vunpack.c.l.b16 %v32
  %v186 = vunpack.c.l.b16 %v33
  %v187 = vpack.c.b16 %v178, %v177
  %v188 = vpack.c.b16 %v180, %v179
  %v189 = vpack.c.b16 %v182, %v181
  %v190 = vpack.c.b16 %v184, %v183
  %v191 = vpack.c.b16 %v186, %v185
  %vm197 = vcmask 654336
  %v199 = vsel %vm197, %v148, 0
  %v202 = vsel %vm197, %v149, 0
  %v205 = vsel %vm197, %v150, 0
  %v208 = vsel %vm197, %v151, 0
  %v211 = vsel %vm197, %v152, 0
  %v214 = vsel %vm197, %v153, 0
  %v217 = vsel %vm197, %v154, 0
  %v220 = vsel %vm197, %v155, 0
  %v223 = vsel %vm197, %v156, 0
  %v226 = vsel %vm197, %v157, 0
  %v229 = vsel %vm197, %v158, 0
  %v232 = vsel %vm197, %v159, 0
  %v235 = vsel %vm197, %v160, 0
  %v238 = vsel %vm197, %v161, 0
  %v241 = vsel %vm197, %v162, 0
  %v244 = vsel %vm197, %v163, 0
  %v247 = vsel %vm197, %v164, 0
  %v250 = vsel %vm197, %v165, 0
  %v253 = vsel %vm197, %v166, 0
  %255 = vmatprep.subr.bf16.mxu0 0
  %256 = vmatpush1.bf16.msra.mxu0 %v187
  %257 = vmatprep.subr.bf16.mxu0 0
  %258 = vmatpush1.bf16.msra.mxu0 %v188
  %259 = vmatprep.subr.bf16.mxu0 0
  %260 = vmatpush1.bf16.msra.mxu0 %v189
  %261 = vmatprep.subr.bf16.mxu0 0
  %262 = vmatpush1.bf16.msra.mxu0 %v190
  %263 = vmatprep.subr.bf16.mxu0 0
  %264 = vmatpush1.bf16.msra.mxu0 %v191
  %265 = vmatprep.subr.bf16.mxu0 0
  %266 = vmatpush1.bf16.msra.mxu0 0
  %267 = vmatprep.subr.bf16.mxu0 0
  %268 = vmatpush1.bf16.msra.mxu0 0
  %269 = vmatprep.subr.bf16.mxu0 0
  %270 = vmatpush1.bf16.msra.mxu0 0
  %271 = vmatprep.subr.bf16.mxu0 0
  %272 = vmatpush1.bf16.msra.mxu0 0
  %273 = vmatprep.subr.bf16.mxu0 0
  %274 = vmatpush1.bf16.msra.mxu0 0
  %275 = vmatprep.subr.bf16.mxu0 0
  %276 = vmatpush1.bf16.msra.mxu0 0
  %277 = vmatprep.subr.bf16.mxu0 0
  %278 = vmatpush1.bf16.msra.mxu0 0
  %279 = vmatprep.subr.bf16.mxu0 0
  %280 = vmatpush1.bf16.msra.mxu0 0
  %281 = vmatprep.subr.bf16.mxu0 0
  %282 = vmatpush1.bf16.msra.mxu0 0
  %283 = vmatprep.subr.bf16.mxu0 0
  %284 = vmatpush1.bf16.msra.mxu0 0
  %285 = vmatprep.subr.bf16.mxu0 0
  %286 = vmatpush1.bf16.msra.mxu0 0
  %287 = vmatprep.mubr.bf16.mxu0 0
  %288 = vmatmul.mubr.bf16.gmra.mrb[0].mxu0 %v199
  %v289 = vpop.f32.mrb[0].mxu0
  %v290 = vadd.f32 0.0, %v289
  %v291 = vpop.f32.mrb[0].mxu0
  %v292 = vpop.f32.mrb[0].mxu0
  %v293 = vadd.f32 0.0, %v292
  %v294 = vpop.f32.mrb[0].mxu0
  %295 = vmatprep.mubr.bf16.mxu0 0
  %296 = vmatmul.mubr.bf16.gmra.mrb[0].mxu0 %v202
  %v297 = vpop.f32.mrb[0].mxu0
  %v298 = vadd.f32 0.0, %v297
  %v299 = vpop.f32.mrb[0].mxu0
  %v300 = vpop.f32.mrb[0].mxu0
  %v301 = vadd.f32 0.0, %v300
  %v302 = vpop.f32.mrb[0].mxu0
  %303 = vmatprep.mubr.bf16.mxu0 0
  %304 = vmatmul.mubr.bf16.gmra.mrb[0].mxu0 %v205
  %v305 = vpop.f32.mrb[0].mxu0
  %v306 = vadd.f32 0.0, %v305
  %v307 = vpop.f32.mrb[0].mxu0
  %v308 = vpop.f32.mrb[0].mxu0
  %v309 = vadd.f32 0.0, %v308
  %v310 = vpop.f32.mrb[0].mxu0
  %311 = vmatprep.mubr.bf16.mxu0 0
  %312 = vmatmul.mubr.bf16.gmra.mrb[0].mxu0 %v208
  %v313 = vpop.f32.mrb[0].mxu0
  %v314 = vadd.f32 0.0, %v313
  %v315 = vpop.f32.mrb[0].mxu0
  %v316 = vpop.f32.mrb[0].mxu0
  %v317 = vadd.f32 0.0, %v316
  %v318 = vpop.f32.mrb[0].mxu0
  %319 = vmatprep.mubr.bf16.mxu0 0
  %320 = vmatmul.mubr.bf16.gmra.mrb[0].mxu0 %v211
  %v321 = vpop.f32.mrb[0].mxu0
  %v322 = vadd.f32 0.0, %v321
  %v323 = vpop.f32.mrb[0].mxu0
  %v324 = vpop.f32.mrb[0].mxu0
  %v325 = vadd.f32 0.0, %v324
  %v326 = vpop.f32.mrb[0].mxu0
  %327 = vmatprep.mubr.bf16.mxu0 0
  %328 = vmatmul.mubr.bf16.gmra.mrb[0].mxu0 %v214
  %v329 = vpop.f32.mrb[0].mxu0
  %v330 = vadd.f32 0.0, %v329
  %v331 = vpop.f32.mrb[0].mxu0
  %v332 = vpop.f32.mrb[0].mxu0
  %v333 = vadd.f32 0.0, %v332
  %v334 = vpop.f32.mrb[0].mxu0
  %335 = vmatprep.mubr.bf16.mxu0 0
  %336 = vmatmul.mubr.bf16.gmra.mrb[0].mxu0 %v217
  %v337 = vpop.f32.mrb[0].mxu0
  %v338 = vadd.f32 0.0, %v337
  %v339 = vpop.f32.mrb[0].mxu0
  %v340 = vpop.f32.mrb[0].mxu0
  %v341 = vadd.f32 0.0, %v340
  %v342 = vpop.f32.mrb[0].mxu0
  %343 = vmatprep.mubr.bf16.mxu0 0
  %344 = vmatmul.mubr.bf16.gmra.mrb[0].mxu0 %v220
  %v345 = vpop.f32.mrb[0].mxu0
  %v346 = vadd.f32 0.0, %v345
  %v347 = vpop.f32.mrb[0].mxu0
  %v348 = vpop.f32.mrb[0].mxu0
  %v349 = vadd.f32 0.0, %v348
  %v350 = vpop.f32.mrb[0].mxu0
  %351 = vmatprep.mubr.bf16.mxu0 0
  %352 = vmatmul.mubr.bf16.gmra.mrb[0].mxu0 %v223
  %v353 = vpop.f32.mrb[0].mxu0
  %v354 = vadd.f32 0.0, %v353
  %v355 = vpop.f32.mrb[0].mxu0
  %v356 = vpop.f32.mrb[0].mxu0
  %v357 = vadd.f32 0.0, %v356
  %v358 = vpop.f32.mrb[0].mxu0
  %359 = vmatprep.mubr.bf16.mxu0 0
  %360 = vmatmul.mubr.bf16.gmra.mrb[0].mxu0 %v226
  %v361 = vpop.f32.mrb[0].mxu0
  %v362 = vadd.f32 0.0, %v361
  %v363 = vpop.f32.mrb[0].mxu0
  %v364 = vpop.f32.mrb[0].mxu0
  %v365 = vadd.f32 0.0, %v364
  %v366 = vpop.f32.mrb[0].mxu0
  %367 = vmatprep.mubr.bf16.mxu0 0
  %368 = vmatmul.mubr.bf16.gmra.mrb[0].mxu0 %v229
  %v369 = vpop.f32.mrb[0].mxu0
  %v370 = vadd.f32 0.0, %v369
  %v371 = vpop.f32.mrb[0].mxu0
  %v372 = vpop.f32.mrb[0].mxu0
  %v373 = vadd.f32 0.0, %v372
  %v374 = vpop.f32.mrb[0].mxu0
  %375 = vmatprep.mubr.bf16.mxu0 0
  %376 = vmatmul.mubr.bf16.gmra.mrb[0].mxu0 %v232
  %v377 = vpop.f32.mrb[0].mxu0
  %v378 = vadd.f32 0.0, %v377
  %v379 = vpop.f32.mrb[0].mxu0
  %v380 = vpop.f32.mrb[0].mxu0
  %v381 = vadd.f32 0.0, %v380
  %v382 = vpop.f32.mrb[0].mxu0
  %383 = vmatprep.mubr.bf16.mxu0 0
  %384 = vmatmul.mubr.bf16.gmra.mrb[0].mxu0 %v235
  %v385 = vpop.f32.mrb[0].mxu0
  %v386 = vadd.f32 0.0, %v385
  %v387 = vpop.f32.mrb[0].mxu0
  %v388 = vpop.f32.mrb[0].mxu0
  %v389 = vadd.f32 0.0, %v388
  %v390 = vpop.f32.mrb[0].mxu0
  %391 = vmatprep.mubr.bf16.mxu0 0
  %392 = vmatmul.mubr.bf16.gmra.mrb[0].mxu0 %v238
  %v393 = vpop.f32.mrb[0].mxu0
  %v394 = vadd.f32 0.0, %v393
  %v395 = vpop.f32.mrb[0].mxu0
  %v396 = vpop.f32.mrb[0].mxu0
  %v397 = vadd.f32 0.0, %v396
  %v398 = vpop.f32.mrb[0].mxu0
  %399 = vmatprep.mubr.bf16.mxu0 0
  %400 = vmatmul.mubr.bf16.gmra.mrb[0].mxu0 %v241
  %v401 = vpop.f32.mrb[0].mxu0
  %v402 = vadd.f32 0.0, %v401
  %v403 = vpop.f32.mrb[0].mxu0
  %v404 = vpop.f32.mrb[0].mxu0
  %v405 = vadd.f32 0.0, %v404
  %v406 = vpop.f32.mrb[0].mxu0
  %407 = vmatprep.mubr.bf16.mxu0 0
  %408 = vmatmul.mubr.bf16.gmra.mrb[0].mxu0 %v244
  %v409 = vpop.f32.mrb[0].mxu0
  %v410 = vadd.f32 0.0, %v409
  %v411 = vpop.f32.mrb[0].mxu0
  %v412 = vpop.f32.mrb[0].mxu0
  %v413 = vadd.f32 0.0, %v412
  %v414 = vpop.f32.mrb[0].mxu0
  %415 = vmatprep.mubr.bf16.mxu0 0
  %416 = vmatmul.mubr.bf16.gmra.mrb[0].mxu0 %v247
  %v417 = vpop.f32.mrb[0].mxu0
  %v418 = vadd.f32 0.0, %v417
  %v419 = vpop.f32.mrb[0].mxu0
  %v420 = vpop.f32.mrb[0].mxu0
  %v421 = vadd.f32 0.0, %v420
  %v422 = vpop.f32.mrb[0].mxu0
  %423 = vmatprep.mubr.bf16.mxu0 0
  %424 = vmatmul.mubr.bf16.gmra.mrb[0].mxu0 %v250
  %v425 = vpop.f32.mrb[0].mxu0
  %v426 = vadd.f32 0.0, %v425
  %v427 = vpop.f32.mrb[0].mxu0
  %v428 = vpop.f32.mrb[0].mxu0
  %v429 = vadd.f32 0.0, %v428
  %v430 = vpop.f32.mrb[0].mxu0
  %431 = vmatprep.mubr.bf16.mxu0 0
  %432 = vmatmul.mubr.bf16.gmra.mrb[0].mxu0 %v253
  %v433 = vpop.f32.mrb[0].mxu0
  %v434 = vadd.f32 0.0, %v433
  %v435 = vpop.f32.mrb[0].mxu0
  %v436 = vpop.f32.mrb[0].mxu0
  %v437 = vpop.f32.mrb[0].mxu0
  %438 = vdwg.mxu0
  %v439 = vmax.f32 %v290, 0.0
  %v440 = vmax.f32 %v293, 0.0
  %v441 = vmax.f32 %v298, 0.0
  %v442 = vmax.f32 %v301, 0.0
  %v443 = vmax.f32 %v306, 0.0
  %v444 = vmax.f32 %v309, 0.0
  %v445 = vmax.f32 %v314, 0.0
  %v446 = vmax.f32 %v317, 0.0
  %v447 = vmax.f32 %v322, 0.0
  %v448 = vmax.f32 %v325, 0.0
  %v449 = vmax.f32 %v330, 0.0
  %v450 = vmax.f32 %v333, 0.0
  %v451 = vmax.f32 %v338, 0.0
  %v452 = vmax.f32 %v341, 0.0
  %v453 = vmax.f32 %v346, 0.0
  %v454 = vmax.f32 %v349, 0.0
  %v455 = vmax.f32 %v354, 0.0
  %v456 = vmax.f32 %v357, 0.0
  %v457 = vmax.f32 %v362, 0.0
  %v458 = vmax.f32 %v365, 0.0
  %v459 = vmax.f32 %v370, 0.0
  %v460 = vmax.f32 %v373, 0.0
  %v461 = vmax.f32 %v378, 0.0
  %v462 = vmax.f32 %v381, 0.0
  %v463 = vmax.f32 %v386, 0.0
  %v464 = vmax.f32 %v389, 0.0
  %v465 = vmax.f32 %v394, 0.0
  %v466 = vmax.f32 %v397, 0.0
  %v467 = vmax.f32 %v402, 0.0
  %v468 = vmax.f32 %v405, 0.0
  %v469 = vmax.f32 %v410, 0.0
  %v470 = vmax.f32 %v413, 0.0
  %v471 = vmax.f32 %v418, 0.0
  %v472 = vmax.f32 %v421, 0.0
  %v473 = vmax.f32 %v426, 0.0
  %v474 = vmax.f32 %v429, 0.0
  %v475 = vld [vmem:[%s2] sm:$0xff]
  %v476 = vld [vmem:[%s2 + $0x8] sm:$0xf]
  %v477 = vld [vmem:[%s2 + $0xc] sm:$0xff]
  %v478 = vld [vmem:[%s2 + $0x14] sm:$0xf]
  %v479 = vld [vmem:[%s2 + $0x18] sm:$0xff]
  %v480 = vld [vmem:[%s2 + $0x20] sm:$0xf]
  %v481 = vld [vmem:[%s2 + $0x24] sm:$0xff]
  %v482 = vld [vmem:[%s2 + $0x2c] sm:$0xf]
  %v483 = vpack.c.bf16 %v440, %v439
  %v484 = vpack.c.bf16 %v442, %v441
  %v485 = vpack.c.bf16 %v444, %v443
  %v486 = vpack.c.bf16 %v446, %v445
  %v487 = vpack.c.bf16 %v448, %v447
  %v488 = vpack.c.bf16 %v450, %v449
  %v489 = vpack.c.bf16 %v452, %v451
  %v490 = vpack.c.bf16 %v454, %v453
  %v491 = vpack.c.bf16 %v456, %v455
  %v492 = vpack.c.bf16 %v458, %v457
  %v493 = vpack.c.bf16 %v460, %v459
  %v494 = vpack.c.bf16 %v462, %v461
  %v495 = vpack.c.bf16 %v464, %v463
  %v496 = vpack.c.bf16 %v466, %v465
  %v497 = vpack.c.bf16 %v468, %v467
  %v498 = vpack.c.bf16 %v470, %v469
  %v499 = vpack.c.bf16 %v472, %v471
  %v500 = vpack.c.bf16 %v474, %v473
  %v501 = vld [vmem:[%s3] sm:$0xff]
  %v502 = vld [vmem:[%s3 + $0x8] sm:$0xff]
  %v503 = vld [vmem:[%s3 + $0x10] sm:$0xff]
  %v504 = vld [vmem:[%s3 + $0x18] sm:$0xff]
  %506 = vset.pattern.permute.xlu0 0
  %507 = vperm.xlu0 %506, %v501
  %v508 = vpop.permute.xlu0 %507
  %511 = vset.pattern.permute.xlu0 0
  %512 = vperm.xlu0 %511, %v502
  %v513 = vpop.permute.xlu0 %512
  %516 = vset.pattern.permute.xlu0 0
  %517 = vperm.xlu0 %516, %v503
  %v518 = vpop.permute.xlu0 %517
  %521 = vset.pattern.permute.xlu0 0
  %522 = vperm.xlu0 %521, %v504
  %v523 = vpop.permute.xlu0 %522
  %v533 = vunpack.c.l.b16 %v475
  %v534 = vunpack.c.h.b16 %v475
  %v535 = vunpack.c.l.b16 %v476
  %v536 = vunpack.c.l.b16 %v477
  %v537 = vunpack.c.h.b16 %v477
  %v538 = vunpack.c.l.b16 %v478
  %v539 = vunpack.c.l.b16 %v479
  %v540 = vunpack.c.h.b16 %v479
  %v541 = vunpack.c.l.b16 %v480
  %v542 = vunpack.c.l.b16 %v481
  %v543 = vunpack.c.h.b16 %v481
  %v544 = vunpack.c.l.b16 %v482
  %v545 = vpack.c.b16 %v536, %v533
  %v546 = vpack.c.b16 %v537, %v534
  %v547 = vpack.c.b16 %v538, %v535
  %v548 = vpack.c.b16 %v542, %v539
  %v549 = vpack.c.b16 %v543, %v540
  %v550 = vpack.c.b16 %v544, %v541
  %vm555 = vcmask 261120
  %v557 = vsel %vm555, %v547, 0
  %v560 = vsel %vm555, %v550, 0
  %562 = vmatprep.subr.bf16.mxu0 0
  %563 = vmatpush1.bf16.msra.mxu0 %v483
  %564 = vmatprep.subr.bf16.mxu0 0
  %565 = vmatpush1.bf16.msra.mxu0 %v484
  %566 = vmatprep.subr.bf16.mxu0 0
  %567 = vmatpush1.bf16.msra.mxu0 %v485
  %568 = vmatprep.subr.bf16.mxu0 0
  %569 = vmatpush1.bf16.msra.mxu0 %v486
  %570 = vmatprep.subr.bf16.mxu0 0
  %571 = vmatpush1.bf16.msra.mxu0 %v487
  %572 = vmatprep.subr.bf16.mxu0 0
  %573 = vmatpush1.bf16.msra.mxu0 %v488
  %574 = vmatprep.subr.bf16.mxu0 0
  %575 = vmatpush1.bf16.msra.mxu0 %v489
  %576 = vmatprep.subr.bf16.mxu0 0
  %577 = vmatpush1.bf16.msra.mxu0 %v490
  %578 = vmatprep.subr.bf16.mxu0 0
  %579 = vmatpush1.bf16.msra.mxu0 %v491
  %580 = vmatprep.subr.bf16.mxu0 0
  %581 = vmatpush1.bf16.msra.mxu0 %v492
  %582 = vmatprep.subr.bf16.mxu0 0
  %583 = vmatpush1.bf16.msra.mxu0 %v493
  %584 = vmatprep.subr.bf16.mxu0 0
  %585 = vmatpush1.bf16.msra.mxu0 %v494
  %586 = vmatprep.subr.bf16.mxu0 0
  %587 = vmatpush1.bf16.msra.mxu0 %v495
  %588 = vmatprep.subr.bf16.mxu0 0
  %589 = vmatpush1.bf16.msra.mxu0 %v496
  %590 = vmatprep.subr.bf16.mxu0 0
  %591 = vmatpush1.bf16.msra.mxu0 %v497
  %592 = vmatprep.subr.bf16.mxu0 0
  %593 = vmatpush1.bf16.msra.mxu0 %v498
  %594 = vmatprep.mubr.bf16.mxu0 %v546
  %595 = vmatmul.mubr.bf16.gmra.mrb[0].mxu0 %v545
  %v596 = vpop.f32.mrb[0].mxu0
  %v597 = vadd.f32 %v508, %v596
  %v598 = vpop.f32.mrb[0].mxu0
  %v599 = vpop.f32.mrb[0].mxu0
  %v600 = vadd.f32 %v513, %v599
  %v601 = vpop.f32.mrb[0].mxu0
  %602 = vmatprep.mubr.bf16.mxu0 %v549
  %603 = vmatmul.mubr.bf16.gmra.mrb[0].mxu0 %v548
  %v604 = vpop.f32.mrb[0].mxu0
  %v605 = vadd.f32 %v518, %v604
  %v606 = vpop.f32.mrb[0].mxu0
  %v607 = vpop.f32.mrb[0].mxu0
  %v608 = vadd.f32 %v523, %v607
  %v609 = vpop.f32.mrb[0].mxu0
  %610 = vdwg.mxu0
  %611 = vmatprep.subr.bf16.mxu0 0
  %612 = vmatpush1.bf16.msra.mxu0 %v499
  %613 = vmatprep.subr.bf16.mxu0 0
  %614 = vmatpush1.bf16.msra.mxu0 %v500
  %615 = vmatprep.subr.bf16.mxu0 0
  %616 = vmatpush1.bf16.msra.mxu0 0
  %617 = vmatprep.subr.bf16.mxu0 0
  %618 = vmatpush1.bf16.msra.mxu0 0
  %619 = vmatprep.subr.bf16.mxu0 0
  %620 = vmatpush1.bf16.msra.mxu0 0
  %621 = vmatprep.subr.bf16.mxu0 0
  %622 = vmatpush1.bf16.msra.mxu0 0
  %623 = vmatprep.subr.bf16.mxu0 0
  %624 = vmatpush1.bf16.msra.mxu0 0
  %625 = vmatprep.subr.bf16.mxu0 0
  %626 = vmatpush1.bf16.msra.mxu0 0
  %627 = vmatprep.subr.bf16.mxu0 0
  %628 = vmatpush1.bf16.msra.mxu0 0
  %629 = vmatprep.subr.bf16.mxu0 0
  %630 = vmatpush1.bf16.msra.mxu0 0
  %631 = vmatprep.subr.bf16.mxu0 0
  %632 = vmatpush1.bf16.msra.mxu0 0
  %633 = vmatprep.subr.bf16.mxu0 0
  %634 = vmatpush1.bf16.msra.mxu0 0
  %635 = vmatprep.subr.bf16.mxu0 0
  %636 = vmatpush1.bf16.msra.mxu0 0
  %637 = vmatprep.subr.bf16.mxu0 0
  %638 = vmatpush1.bf16.msra.mxu0 0
  %639 = vmatprep.subr.bf16.mxu0 0
  %640 = vmatpush1.bf16.msra.mxu0 0
  %641 = vmatprep.subr.bf16.mxu0 0
  %642 = vmatpush1.bf16.msra.mxu0 0
  %643 = vmatprep.mubr.bf16.mxu0 0
  %644 = vmatmul.mubr.bf16.gmra.mrb[0].mxu0 %v557
  %v645 = vpop.f32.mrb[0].mxu0
  %v646 = vadd.f32 %v597, %v645
  %v647 = vpop.f32.mrb[0].mxu0
  %v648 = vpop.f32.mrb[0].mxu0
  %v649 = vadd.f32 %v600, %v648
  %v650 = vpop.f32.mrb[0].mxu0
  %651 = vmatprep.mubr.bf16.mxu0 0
  %652 = vmatmul.mubr.bf16.gmra.mrb[0].mxu0 %v560
  %v653 = vpop.f32.mrb[0].mxu0
  %v654 = vadd.f32 %v605, %v653
  %v655 = vpop.f32.mrb[0].mxu0
  %v656 = vpop.f32.mrb[0].mxu0
  %v657 = vadd.f32 %v608, %v656
  %v658 = vpop.f32.mrb[0].mxu0
  %659 = vdwg.mxu0
  %v660 = vmax.f32 %v646, 0.0
  %v661 = vmax.f32 %v649, 0.0
  %v662 = vmax.f32 %v654, 0.0
  %v663 = vmax.f32 %v657, 0.0
  %v664 = vld [vmem:[%s4] sm:$0xf]
  %v665 = vpack.c.bf16 %v661, %v660
  %v666 = vpack.c.bf16 %v663, %v662
  %v668 = vsel %vm555, %v664, 0
  %670 = vmatprep.subr.bf16.mxu0 0
  %671 = vmatpush1.bf16.msra.mxu0 %v665
  %672 = vmatprep.subr.bf16.mxu0 0
  %673 = vmatpush1.bf16.msra.mxu0 %v666
  %674 = vmatprep.subr.bf16.mxu0 0
  %675 = vmatpush1.bf16.msra.mxu0 0
  %676 = vmatprep.subr.bf16.mxu0 0
  %677 = vmatpush1.bf16.msra.mxu0 0
  %678 = vmatprep.subr.bf16.mxu0 0
  %679 = vmatpush1.bf16.msra.mxu0 0
  %680 = vmatprep.subr.bf16.mxu0 0
  %681 = vmatpush1.bf16.msra.mxu0 0
  %682 = vmatprep.subr.bf16.mxu0 0
  %683 = vmatpush1.bf16.msra.mxu0 0
  %684 = vmatprep.subr.bf16.mxu0 0
  %685 = vmatpush1.bf16.msra.mxu0 0
  %686 = vmatprep.subr.bf16.mxu0 0
  %687 = vmatpush1.bf16.msra.mxu0 0
  %688 = vmatprep.subr.bf16.mxu0 0
  %689 = vmatpush1.bf16.msra.mxu0 0
  %690 = vmatprep.subr.bf16.mxu0 0
  %691 = vmatpush1.bf16.msra.mxu0 0
  %692 = vmatprep.subr.bf16.mxu0 0
  %693 = vmatpush1.bf16.msra.mxu0 0
  %694 = vmatprep.subr.bf16.mxu0 0
  %695 = vmatpush1.bf16.msra.mxu0 0
  %696 = vmatprep.subr.bf16.mxu0 0
  %697 = vmatpush1.bf16.msra.mxu0 0
  %698 = vmatprep.subr.bf16.mxu0 0
  %699 = vmatpush1.bf16.msra.mxu0 0
  %700 = vmatprep.subr.bf16.mxu0 0
  %701 = vmatpush1.bf16.msra.mxu0 0
  %702 = vmatprep.mubr.bf16.mxu0 0
  %703 = vmatmul.mubr.bf16.gmra.mrb[0].mxu0 %v668
  %v704 = vpop.f32.mrb[0].mxu0
  %v705 = vadd.f32 %v434, %v704
  %v706 = vpop.f32.mrb[0].mxu0
  %v707 = vpop.f32.mrb[0].mxu0
  %v708 = vpop.f32.mrb[0].mxu0
  %709 = vdwg.mxu0
  %v710 = vld [vmem:[%s5] sm:$0xff]
  %712 = vset.pattern.permute.xlu0 0
  %713 = vperm.xlu0 %712, %v710
  %v714 = vpop.permute.xlu0 %713
  %v716 = vadd.f32 %v705, %v714
  %v717 = vmax.f32 %v716, 0.0
  %vm718 = vcmask 64512
  %719 = vst.msk [vmem:[%s6] sm:$0xff] %vm718, %v717
  // Predicated region
  $region26: #{hourglass_forward.8} parent=0 // pred_check
    _
  $region27: #{hourglass_forward.8} parent=0 // pred_check_branch
    %721 = sbr.rel (0) target = $region29
  $region28: #{hourglass_forward.8} parent=0 // pred_region
    _
  $region29: #{hourglass_forward.8} parent=0 // pred_fallthru
    _
  // Predicated region
  $region30: #{hourglass_forward.8} parent=0 // pred_check
    _
  $region31: #{hourglass_forward.8} parent=0 // pred_check_branch
    %723 = sbr.rel (0) target = $region33
  $region32: #{hourglass_forward.8} parent=0 // pred_region
    _
  $region33: #{hourglass_forward.8} parent=0 // pred_fallthru
    _

</llo_original>
